<compile_context>
chip_gen: v6e
topology: v6e:2x2x1
jax: 0.10.0
libtpu: 0.0.40
codegen_flags: <defaults>
</compile_context>

<pallas_src>
import math
import functools

import jax
import jax.numpy as jnp
from jax.experimental import pallas as pl
from jax.experimental.pallas import tpu as pltpu

# ---------------- scaled-down Llama config ----------------
NUM_LAYERS = 2
NUM_HEADS = 2
HEAD_DIM = 128                      # matches the (.., 32, 128) unflatten convention
HIDDEN = NUM_HEADS * HEAD_DIM       # 256
INTERMEDIATE = 512
VOCAB = 256
RMS_EPS = 1e-6
ROPE_THETA = 10000.0


# ---------------- in-kernel helpers (f32 math) ----------------
def _rmsnorm_f32(x, w):
    var = jnp.mean(x * x, axis=-1, keepdims=True)
    return x * jax.lax.rsqrt(var + RMS_EPS) * w


# ---------------- single fused whole-forward kernel ----------------
def _decoder_fused_kernel(x_ref, ln_attn_ref, ln_mlp_ref, wqkv_ref, wo_ref,
                          wgu_ref, wd_ref, final_ln_ref, wlm_ref,
                          cosq_ref, sinq_ref, cosk_ref, sink_ref,
                          logits_ref, attn_scr):
    # One batch element per grid step; residual stream stays resident (f32).
    x = x_ref[...].astype(jnp.float32)                      # (S, D)
    S = x.shape[0]

    # RoPE tables: scale (1/sqrt(Dh)) and rotate_half sign pre-folded host-side.
    cosq = cosq_ref[...]                                    # (S, Dh) = scale*cos
    sinq = sinq_ref[...]                                    # scale*sign*sin
    cosk = cosk_ref[...]                                    # cos
    sink = sink_ref[...]                                    # sign*sin

    # Causal mask built once per grid step (hoisted out of the layer loop).
    row = jax.lax.broadcasted_iota(jnp.int32, (S, S), 0)
    col = jax.lax.broadcasted_iota(jnp.int32, (S, S), 1)
    causal = col <= row
    neg = jnp.finfo(jnp.float32).min                        # tied to score dtype

    for layer in range(NUM_LAYERS):                         # static unroll (L=2)
        # ---------------- attention half ----------------
        xn = _rmsnorm_f32(x, ln_attn_ref[layer])            # (S, D), ln (1, D)
        qkv = jnp.dot(xn.astype(jnp.bfloat16), wqkv_ref[layer],
                      preferred_element_type=jnp.float32)   # (S, 3D), one MXU pass

        for h in range(NUM_HEADS):                          # lane slicing per head
            qh = qkv[:, h * HEAD_DIM:(h + 1) * HEAD_DIM]
            kh = qkv[:, HIDDEN + h * HEAD_DIM: HIDDEN + (h + 1) * HEAD_DIM]
            vh = qkv[:, 2 * HIDDEN + h * HEAD_DIM: 2 * HIDDEN + (h + 1) * HEAD_DIM]

            # RoPE via XLU roll; scale folded into the q tables.
            qh = qh * cosq + pltpu.roll(qh, HEAD_DIM // 2, axis=1) * sinq
            kh = kh * cosk + pltpu.roll(kh, HEAD_DIM // 2, axis=1) * sink

            s = jax.lax.dot_general(
                qh.astype(jnp.bfloat16), kh.astype(jnp.bfloat16),
                (((1,), (1,)), ((), ())),
                preferred_element_type=jnp.float32)          # (S, S) f32 scores
            s = jnp.where(causal, s, neg)

            m = jnp.max(s, axis=-1, keepdims=True)           # f32 softmax stats
            p = jnp.exp(s - m)
            denom = jnp.sum(p, axis=-1, keepdims=True)
            head = jnp.dot(p.astype(jnp.bfloat16), vh.astype(jnp.bfloat16),
                           preferred_element_type=jnp.float32)   # (S, Dh)
            head = head * pl.reciprocal(denom, approx=True)

            # Write into the (S, D) scratch at lane offset h*Dh (no concatenate),
            # keeping the o_proj contraction at K = D = 256.
            attn_scr[:, h * HEAD_DIM:(h + 1) * HEAD_DIM] = head.astype(jnp.bfloat16)

        x = x + jnp.dot(attn_scr[...], wo_ref[layer],
                        preferred_element_type=jnp.float32)  # o_proj + residual

        # ---------------- MLP half ----------------
        xn = _rmsnorm_f32(x, ln_mlp_ref[layer])
        gu = jnp.dot(xn.astype(jnp.bfloat16), wgu_ref[layer],
                     preferred_element_type=jnp.float32)     # (S, 2I)
        g = gu[:, :INTERMEDIATE]
        u = gu[:, INTERMEDIATE:]
        hm = (g * jax.nn.sigmoid(g)) * u                     # SiLU(gate) * up, f32
        x = x + jnp.dot(hm.astype(jnp.bfloat16), wd_ref[layer],
                        preferred_element_type=jnp.float32)  # down_proj + residual

    # ---------------- final RMSNorm + lm_head (f32 logits) ----------------
    xn = _rmsnorm_f32(x, final_ln_ref[...])
    logits_ref[...] = jnp.dot(xn.astype(jnp.bfloat16), wlm_ref[...],
                              preferred_element_type=jnp.float32)


# ---------------- RoPE tables (host-side, constant under jit) ----------------
def rope_tables(seq_len, dim):
    inv_freq = 1.0 / (ROPE_THETA ** (jnp.arange(0, dim, 2, dtype=jnp.float32) / dim))
    t = jnp.arange(seq_len, dtype=jnp.float32)
    freqs = jnp.outer(t, inv_freq)                           # (S, dim/2)
    emb = jnp.concatenate([freqs, freqs], axis=-1)           # (S, dim)
    cos = jnp.cos(emb)
    sin = jnp.sin(emb)
    # rotate_half(x) = roll(x, dim/2) * sign, sign = -1 on first half, +1 on second
    sign = jnp.where(jnp.arange(dim) < dim // 2, -1.0, 1.0).astype(jnp.float32)
    sin_signed = sin * sign
    scale = 1.0 / math.sqrt(dim)                             # 1/sqrt(head_dim) for q
    return cos, sin_signed, cos * scale, sin_signed * scale


# ---------------- model forward (one pallas_call) ----------------
def decoder_forward(input_ids, params, memory=None, labels=None):
    # TODO(synk): memory!=None (ProjectHead mem K/V) and labels!=None (compute_loss)
    # paths are not implemented; this matches the memory=None / labels=None path.
    B, S = input_ids.shape
    assert S % 8 == 0, "sequence length must be a multiple of 8 for (8,128) tiling"
    D = HIDDEN

    # Embedding gather stays in XLA; activation slab handed to the kernel as bf16.
    hidden = jnp.take(params["embed"], input_ids, axis=0)            # (B, S, D) f32
    hidden2d = hidden.reshape(B * S, D).astype(jnp.bfloat16)

    cos_k, sin_k, cos_q, sin_q = rope_tables(S, HEAD_DIM)

    logits2d = pl.pallas_call(
        _decoder_fused_kernel,
        out_shape=jax.ShapeDtypeStruct((B * S, VOCAB), jnp.float32),
        grid=(B,),
        in_specs=[
            pl.BlockSpec((S, D), lambda b: (b, 0)),                        # hidden
            pl.BlockSpec((NUM_LAYERS, 1, D), lambda b: (0, 0, 0)),         # input_ln (L,1,D)
            pl.BlockSpec((NUM_LAYERS, 1, D), lambda b: (0, 0, 0)),         # post_ln  (L,1,D)
            pl.BlockSpec((NUM_LAYERS, D, 3 * D), lambda b: (0, 0, 0)),     # wqkv
            pl.BlockSpec((NUM_LAYERS, D, D), lambda b: (0, 0, 0)),         # o_proj
            pl.BlockSpec((NUM_LAYERS, D, 2 * INTERMEDIATE), lambda b: (0, 0, 0)),  # gate/up
            pl.BlockSpec((NUM_LAYERS, INTERMEDIATE, D), lambda b: (0, 0, 0)),      # down
            pl.BlockSpec((1, D), lambda b: (0, 0)),                        # final_ln
            pl.BlockSpec((D, VOCAB), lambda b: (0, 0)),                    # lm_head
            pl.BlockSpec((S, HEAD_DIM), lambda b: (0, 0)),                 # cos_q (scaled)
            pl.BlockSpec((S, HEAD_DIM), lambda b: (0, 0)),                 # sin_q (scaled,signed)
            pl.BlockSpec((S, HEAD_DIM), lambda b: (0, 0)),                 # cos_k
            pl.BlockSpec((S, HEAD_DIM), lambda b: (0, 0)),                 # sin_k (signed)
        ],
        out_specs=pl.BlockSpec((S, VOCAB), lambda b: (b, 0)),
        scratch_shapes=[pltpu.VMEM((S, D), jnp.bfloat16)],                 # head-output slab
        compiler_params=pltpu.CompilerParams(
            dimension_semantics=("parallel",),          # B axis -> v7x megacore sharding
            vmem_limit_bytes=32 * 1024 * 1024),         # explicit (v5e default is 16 MiB)
    )(hidden2d, params["ln_attn"], params["ln_mlp"], params["wqkv"], params["wo"],
      params["wgu"], params["wd"], params["final_ln"], params["lm_head"],
      cos_q, sin_q, cos_k, sin_k)

    return logits2d.reshape(B, S, VOCAB)


# ---------------- deterministic parameter init ----------------
def init_params(key):
    def nrm(k, shape, scale=0.02, dtype=jnp.bfloat16):
        return (scale * jax.random.normal(k, shape, dtype=jnp.float32)).astype(dtype)

    keys = jax.random.split(key, 2 + NUM_LAYERS)
    wqkv_l, wo_l, wgu_l, wd_l = [], [], [], []
    for li in range(NUM_LAYERS):
        lk = jax.random.split(keys[2 + li], 7)
        wq = nrm(lk[0], (HIDDEN, HIDDEN))
        wk = nrm(lk[1], (HIDDEN, HIDDEN))
        wv = nrm(lk[2], (HIDDEN, HIDDEN))
        wqkv_l.append(jnp.concatenate([wq, wk, wv], axis=1))          # (D, 3D)
        wo_l.append(nrm(lk[3], (HIDDEN, HIDDEN)))
        wg = nrm(lk[4], (HIDDEN, INTERMEDIATE))
        wu = nrm(lk[5], (HIDDEN, INTERMEDIATE))
        wgu_l.append(jnp.concatenate([wg, wu], axis=1))               # (D, 2I)
        wd_l.append(nrm(lk[6], (INTERMEDIATE, HIDDEN)))

    return {
        "embed": nrm(keys[0], (VOCAB, HIDDEN), dtype=jnp.float32),
        "lm_head": nrm(keys[1], (HIDDEN, VOCAB)),                     # bf16 MXU weight
        "final_ln": jnp.ones((1, HIDDEN), jnp.float32),
        "ln_attn": jnp.ones((NUM_LAYERS, 1, HIDDEN), jnp.float32),    # stacked per-layer
        "ln_mlp": jnp.ones((NUM_LAYERS, 1, HIDDEN), jnp.float32),
        "wqkv": jnp.stack(wqkv_l),                                    # (L, D, 3D)
        "wo": jnp.stack(wo_l),                                        # (L, D, D)
        "wgu": jnp.stack(wgu_l),                                      # (L, D, 2I)
        "wd": jnp.stack(wd_l),                                        # (L, I, D)
    }


if __name__ == "__main__":
    key = jax.random.PRNGKey(0)
    pkey, ikey = jax.random.split(key)
    params = init_params(pkey)

    B, S = 2, 8
    input_ids = jax.random.randint(ikey, (B, S), 0, VOCAB, dtype=jnp.int32)

    fwd = jax.jit(functools.partial(decoder_forward, params=params))
    logits = fwd(input_ids)
    jax.block_until_ready(logits)

    assert logits.shape == (B, S, VOCAB)
    assert logits.dtype == jnp.float32
    assert bool(jnp.all(jnp.isfinite(logits)))
    print("KERNEL_OK")
</pallas_src>

<mosaic_0001>
module attributes {stable_mosaic.version = 11 : i64} {
  func.func @_decoder_fused_kernel(%arg0: i32, %arg1: memref<8x256xbf16, #tpu.memory_space<vmem>>, %arg2: memref<2x1x256xf32, #tpu.memory_space<vmem>>, %arg3: memref<2x1x256xf32, #tpu.memory_space<vmem>>, %arg4: memref<2x256x768xbf16, #tpu.memory_space<vmem>>, %arg5: memref<2x256x256xbf16, #tpu.memory_space<vmem>>, %arg6: memref<2x256x1024xbf16, #tpu.memory_space<vmem>>, %arg7: memref<2x512x256xbf16, #tpu.memory_space<vmem>>, %arg8: memref<1x256xf32, #tpu.memory_space<vmem>>, %arg9: memref<256x256xbf16, #tpu.memory_space<vmem>>, %arg10: memref<8x128xf32, #tpu.memory_space<vmem>>, %arg11: memref<8x128xf32, #tpu.memory_space<vmem>>, %arg12: memref<8x128xf32, #tpu.memory_space<vmem>>, %arg13: memref<8x128xf32, #tpu.memory_space<vmem>>, %arg14: memref<8x256xf32, #tpu.memory_space<vmem>>, %arg15: memref<8x256xbf16, #tpu.memory_space<vmem>>) attributes {dimension_semantics = [#tpu.dimension_semantics<parallel>], iteration_bounds = array<i64: 2>, scalar_prefetch = 0 : i64, scratch_operands = 1 : i64, tpu.core_type = #tpu.core_type<tc>, window_params = [{transform_indices = @transform_0, window_bounds = array<i64: 8, 256>}, {pipeline_mode = #tpu.pipeline_mode<synchronous>, transform_indices = @transform_1, window_bounds = array<i64: 2, 1, 256>}, {pipeline_mode = #tpu.pipeline_mode<synchronous>, transform_indices = @transform_2, window_bounds = array<i64: 2, 1, 256>}, {pipeline_mode = #tpu.pipeline_mode<synchronous>, transform_indices = @transform_3, window_bounds = array<i64: 2, 256, 768>}, {pipeline_mode = #tpu.pipeline_mode<synchronous>, transform_indices = @transform_4, window_bounds = array<i64: 2, 256, 256>}, {pipeline_mode = #tpu.pipeline_mode<synchronous>, transform_indices = @transform_5, window_bounds = array<i64: 2, 256, 1024>}, {pipeline_mode = #tpu.pipeline_mode<synchronous>, transform_indices = @transform_6, window_bounds = array<i64: 2, 512, 256>}, {pipeline_mode = #tpu.pipeline_mode<synchronous>, transform_indices = @transform_7, window_bounds = array<i64: 1, 256>}, {pipeline_mode = #tpu.pipeline_mode<synchronous>, transform_indices = @transform_8, window_bounds = array<i64: 256, 256>}, {pipeline_mode = #tpu.pipeline_mode<synchronous>, transform_indices = @transform_9, window_bounds = array<i64: 8, 128>}, {pipeline_mode = #tpu.pipeline_mode<synchronous>, transform_indices = @transform_10, window_bounds = array<i64: 8, 128>}, {pipeline_mode = #tpu.pipeline_mode<synchronous>, transform_indices = @transform_11, window_bounds = array<i64: 8, 128>}, {pipeline_mode = #tpu.pipeline_mode<synchronous>, transform_indices = @transform_12, window_bounds = array<i64: 8, 128>}, {transform_indices = @transform_13, window_bounds = array<i64: 8, 256>}]} {
    %c0 = arith.constant 0 : index
    %c0_0 = arith.constant 0 : index
    %0 = vector.load %arg1[%c0, %c0_0] : memref<8x256xbf16, #tpu.memory_space<vmem>>, vector<8x256xbf16>
    %1 = arith.extf %0 : vector<8x256xbf16> to vector<8x256xf32>
    %c0_1 = arith.constant 0 : index
    %c0_2 = arith.constant 0 : index
    %2 = vector.load %arg10[%c0_1, %c0_2] : memref<8x128xf32, #tpu.memory_space<vmem>>, vector<8x128xf32>
    %c0_3 = arith.constant 0 : index
    %c0_4 = arith.constant 0 : index
    %3 = vector.load %arg11[%c0_3, %c0_4] : memref<8x128xf32, #tpu.memory_space<vmem>>, vector<8x128xf32>
    %c0_5 = arith.constant 0 : index
    %c0_6 = arith.constant 0 : index
    %4 = vector.load %arg12[%c0_5, %c0_6] : memref<8x128xf32, #tpu.memory_space<vmem>>, vector<8x128xf32>
    %c0_7 = arith.constant 0 : index
    %c0_8 = arith.constant 0 : index
    %5 = vector.load %arg13[%c0_7, %c0_8] : memref<8x128xf32, #tpu.memory_space<vmem>>, vector<8x128xf32>
    %6 = tpu.iota {dimensions = array<i32: 0>} : vector<8x8xi32>
    %7 = tpu.iota {dimensions = array<i32: 1>} : vector<8x8xi32>
    %8 = arith.cmpi sle, %7, %6 : vector<8x8xi32>
    %c0_9 = arith.constant 0 : index
    %c0_10 = arith.constant 0 : index
    %c0_11 = arith.constant 0 : index
    %9 = vector.load %arg2[%c0_9, %c0_10, %c0_11] : memref<2x1x256xf32, #tpu.memory_space<vmem>>, vector<1x1x256xf32>
    %10 = vector.shape_cast %9 : vector<1x1x256xf32> to vector<1x256xf32>
    %11 = arith.mulf %1, %1 : vector<8x256xf32>
    %cst = arith.constant dense<0.000000e+00> : vector<8xf32>
    %12 = vector.multi_reduction <add>, %11, %cst [1] : vector<8x256xf32> to vector<8xf32>
    %13 = vector.shape_cast %12 : vector<8xf32> to vector<8x1xf32>
    %cst_12 = arith.constant 2.560000e+02 : f32
    %14 = vector.broadcast %cst_12 : f32 to vector<8x1xf32>
    %15 = arith.divf %13, %14 : vector<8x1xf32>
    %cst_13 = arith.constant 9.99999997E-7 : f32
    %16 = vector.broadcast %cst_13 : f32 to vector<8x1xf32>
    %17 = arith.addf %15, %16 : vector<8x1xf32>
    %18 = math.rsqrt %17 : vector<8x1xf32>
    %19 = vector.broadcast %18 : vector<8x1xf32> to vector<8x256xf32>
    %20 = arith.mulf %1, %19 : vector<8x256xf32>
    %21 = vector.broadcast %10 : vector<1x256xf32> to vector<8x256xf32>
    %22 = arith.mulf %20, %21 : vector<8x256xf32>
    %23 = arith.truncf %22 : vector<8x256xf32> to vector<8x256xbf16>
    %c0_14 = arith.constant 0 : index
    %c0_15 = arith.constant 0 : index
    %c0_16 = arith.constant 0 : index
    %24 = vector.load %arg4[%c0_14, %c0_15, %c0_16] : memref<2x256x768xbf16, #tpu.memory_space<vmem>>, vector<1x256x768xbf16>
    %25 = vector.shape_cast %24 : vector<1x256x768xbf16> to vector<256x768xbf16>
    %cst_17 = arith.constant dense<0.000000e+00> : vector<8x768xf32>
    %26 = tpu.matmul %23, %25, %cst_17 {dimension_numbers = #tpu.dot_dimension_numbers<[1], [0], [0], [1], [0, 0, 1, 1], [], []>} : vector<8x256xbf16>, vector<256x768xbf16>, vector<8x768xf32> -> vector<8x768xf32>
    %27 = vector.extract_strided_slice %26 {offsets = [0, 0], sizes = [8, 128], strides = [1, 1]} : vector<8x768xf32> to vector<8x128xf32>
    %28 = vector.extract_strided_slice %26 {offsets = [0, 256], sizes = [8, 128], strides = [1, 1]} : vector<8x768xf32> to vector<8x128xf32>
    %29 = vector.extract_strided_slice %26 {offsets = [0, 512], sizes = [8, 128], strides = [1, 1]} : vector<8x768xf32> to vector<8x128xf32>
    %30 = arith.mulf %27, %2 : vector<8x128xf32>
    %c64_i32 = arith.constant 64 : i32
    %31 = tpu.dynamic_rotate %27 by %c64_i32 dim 1 : vector<8x128xf32>, i32 -> vector<8x128xf32>
    %32 = arith.mulf %31, %3 : vector<8x128xf32>
    %33 = arith.addf %30, %32 : vector<8x128xf32>
    %34 = arith.mulf %28, %4 : vector<8x128xf32>
    %c64_i32_18 = arith.constant 64 : i32
    %35 = tpu.dynamic_rotate %28 by %c64_i32_18 dim 1 : vector<8x128xf32>, i32 -> vector<8x128xf32>
    %36 = arith.mulf %35, %5 : vector<8x128xf32>
    %37 = arith.addf %34, %36 : vector<8x128xf32>
    %38 = arith.truncf %33 : vector<8x128xf32> to vector<8x128xbf16>
    %39 = arith.truncf %37 : vector<8x128xf32> to vector<8x128xbf16>
    %cst_19 = arith.constant dense<0.000000e+00> : vector<8x8xf32>
    %40 = tpu.matmul %38, %39, %cst_19 {dimension_numbers = #tpu.dot_dimension_numbers<[1], [1], [0], [0], [0, 0, 1, 0], [], []>} : vector<8x128xbf16>, vector<8x128xbf16>, vector<8x8xf32> -> vector<8x8xf32>
    %cst_20 = arith.constant -3.40282347E+38 : f32
    %41 = vector.broadcast %cst_20 : f32 to vector<8x8xf32>
    %42 = arith.select %8, %40, %41 : vector<8x8xi1>, vector<8x8xf32>
    %cst_21 = arith.constant dense<0xFF800000> : vector<8xf32>
    %43 = vector.multi_reduction <maximumf>, %42, %cst_21 [1] : vector<8x8xf32> to vector<8xf32>
    %44 = vector.shape_cast %43 : vector<8xf32> to vector<8x1xf32>
    %45 = vector.broadcast %44 : vector<8x1xf32> to vector<8x8xf32>
    %46 = arith.subf %42, %45 : vector<8x8xf32>
    %47 = math.exp %46 : vector<8x8xf32>
    %cst_22 = arith.constant dense<0.000000e+00> : vector<8xf32>
    %48 = vector.multi_reduction <add>, %47, %cst_22 [1] : vector<8x8xf32> to vector<8xf32>
    %49 = vector.shape_cast %48 : vector<8xf32> to vector<8x1xf32>
    %50 = arith.truncf %47 : vector<8x8xf32> to vector<8x8xbf16>
    %51 = arith.truncf %29 : vector<8x128xf32> to vector<8x128xbf16>
    %cst_23 = arith.constant dense<0.000000e+00> : vector<8x128xf32>
    %52 = tpu.matmul %50, %51, %cst_23 {dimension_numbers = #tpu.dot_dimension_numbers<[1], [0], [0], [1], [0, 0, 1, 1], [], []>} : vector<8x8xbf16>, vector<8x128xbf16>, vector<8x128xf32> -> vector<8x128xf32>
    %53 = tpu.reciprocal %49 {approx = true} : vector<8x1xf32> -> vector<8x1xf32>
    %54 = vector.broadcast %53 : vector<8x1xf32> to vector<8x128xf32>
    %55 = arith.mulf %52, %54 : vector<8x128xf32>
    %56 = arith.truncf %55 : vector<8x128xf32> to vector<8x128xbf16>
    %c0_24 = arith.constant 0 : index
    %c0_25 = arith.constant 0 : index
    %57 = vector.load %arg15[%c0_24, %c0_25] : memref<8x256xbf16, #tpu.memory_space<vmem>>, vector<8x128xbf16>
    tpu.vector_store %arg15[%c0_24, %c0_25], %56 {strides = array<i32>} : memref<8x256xbf16, #tpu.memory_space<vmem>>, vector<8x128xbf16>,
    %58 = vector.extract_strided_slice %26 {offsets = [0, 128], sizes = [8, 128], strides = [1, 1]} : vector<8x768xf32> to vector<8x128xf32>
    %59 = vector.extract_strided_slice %26 {offsets = [0, 384], sizes = [8, 128], strides = [1, 1]} : vector<8x768xf32> to vector<8x128xf32>
    %60 = vector.extract_strided_slice %26 {offsets = [0, 640], sizes = [8, 128], strides = [1, 1]} : vector<8x768xf32> to vector<8x128xf32>
    %61 = arith.mulf %58, %2 : vector<8x128xf32>
    %c64_i32_26 = arith.constant 64 : i32
    %62 = tpu.dynamic_rotate %58 by %c64_i32_26 dim 1 : vector<8x128xf32>, i32 -> vector<8x128xf32>
    %63 = arith.mulf %62, %3 : vector<8x128xf32>
    %64 = arith.addf %61, %63 : vector<8x128xf32>
    %65 = arith.mulf %59, %4 : vector<8x128xf32>
    %c64_i32_27 = arith.constant 64 : i32
    %66 = tpu.dynamic_rotate %59 by %c64_i32_27 dim 1 : vector<8x128xf32>, i32 -> vector<8x128xf32>
    %67 = arith.mulf %66, %5 : vector<8x128xf32>
    %68 = arith.addf %65, %67 : vector<8x128xf32>
    %69 = arith.truncf %64 : vector<8x128xf32> to vector<8x128xbf16>
    %70 = arith.truncf %68 : vector<8x128xf32> to vector<8x128xbf16>
    %cst_28 = arith.constant dense<0.000000e+00> : vector<8x8xf32>
    %71 = tpu.matmul %69, %70, %cst_28 {dimension_numbers = #tpu.dot_dimension_numbers<[1], [1], [0], [0], [0, 0, 1, 0], [], []>} : vector<8x128xbf16>, vector<8x128xbf16>, vector<8x8xf32> -> vector<8x8xf32>
    %cst_29 = arith.constant -3.40282347E+38 : f32
    %72 = vector.broadcast %cst_29 : f32 to vector<8x8xf32>
    %73 = arith.select %8, %71, %72 : vector<8x8xi1>, vector<8x8xf32>
    %cst_30 = arith.constant dense<0xFF800000> : vector<8xf32>
    %74 = vector.multi_reduction <maximumf>, %73, %cst_30 [1] : vector<8x8xf32> to vector<8xf32>
    %75 = vector.shape_cast %74 : vector<8xf32> to vector<8x1xf32>
    %76 = vector.broadcast %75 : vector<8x1xf32> to vector<8x8xf32>
    %77 = arith.subf %73, %76 : vector<8x8xf32>
    %78 = math.exp %77 : vector<8x8xf32>
    %cst_31 = arith.constant dense<0.000000e+00> : vector<8xf32>
    %79 = vector.multi_reduction <add>, %78, %cst_31 [1] : vector<8x8xf32> to vector<8xf32>
    %80 = vector.shape_cast %79 : vector<8xf32> to vector<8x1xf32>
    %81 = arith.truncf %78 : vector<8x8xf32> to vector<8x8xbf16>
    %82 = arith.truncf %60 : vector<8x128xf32> to vector<8x128xbf16>
    %cst_32 = arith.constant dense<0.000000e+00> : vector<8x128xf32>
    %83 = tpu.matmul %81, %82, %cst_32 {dimension_numbers = #tpu.dot_dimension_numbers<[1], [0], [0], [1], [0, 0, 1, 1], [], []>} : vector<8x8xbf16>, vector<8x128xbf16>, vector<8x128xf32> -> vector<8x128xf32>
    %84 = tpu.reciprocal %80 {approx = true} : vector<8x1xf32> -> vector<8x1xf32>
    %85 = vector.broadcast %84 : vector<8x1xf32> to vector<8x128xf32>
    %86 = arith.mulf %83, %85 : vector<8x128xf32>
    %87 = arith.truncf %86 : vector<8x128xf32> to vector<8x128xbf16>
    %c0_33 = arith.constant 0 : index
    %c128 = arith.constant 128 : index
    %88 = vector.load %arg15[%c0_33, %c128] : memref<8x256xbf16, #tpu.memory_space<vmem>>, vector<8x128xbf16>
    tpu.vector_store %arg15[%c0_33, %c128], %87 {strides = array<i32>} : memref<8x256xbf16, #tpu.memory_space<vmem>>, vector<8x128xbf16>,
    %c0_34 = arith.constant 0 : index
    %c0_35 = arith.constant 0 : index
    %89 = vector.load %arg15[%c0_34, %c0_35] : memref<8x256xbf16, #tpu.memory_space<vmem>>, vector<8x256xbf16>
    %c0_36 = arith.constant 0 : index
    %c0_37 = arith.constant 0 : index
    %c0_38 = arith.constant 0 : index
    %90 = vector.load %arg5[%c0_36, %c0_37, %c0_38] : memref<2x256x256xbf16, #tpu.memory_space<vmem>>, vector<1x256x256xbf16>
    %91 = vector.shape_cast %90 : vector<1x256x256xbf16> to vector<256x256xbf16>
    %cst_39 = arith.constant dense<0.000000e+00> : vector<8x256xf32>
    %92 = tpu.matmul %89, %91, %cst_39 {dimension_numbers = #tpu.dot_dimension_numbers<[1], [0], [0], [1], [0, 0, 1, 1], [], []>} : vector<8x256xbf16>, vector<256x256xbf16>, vector<8x256xf32> -> vector<8x256xf32>
    %93 = arith.addf %1, %92 : vector<8x256xf32>
    %c0_40 = arith.constant 0 : index
    %c0_41 = arith.constant 0 : index
    %c0_42 = arith.constant 0 : index
    %94 = vector.load %arg3[%c0_40, %c0_41, %c0_42] : memref<2x1x256xf32, #tpu.memory_space<vmem>>, vector<1x1x256xf32>
    %95 = vector.shape_cast %94 : vector<1x1x256xf32> to vector<1x256xf32>
    %96 = arith.mulf %93, %93 : vector<8x256xf32>
    %cst_43 = arith.constant dense<0.000000e+00> : vector<8xf32>
    %97 = vector.multi_reduction <add>, %96, %cst_43 [1] : vector<8x256xf32> to vector<8xf32>
    %98 = vector.shape_cast %97 : vector<8xf32> to vector<8x1xf32>
    %cst_44 = arith.constant 2.560000e+02 : f32
    %99 = vector.broadcast %cst_44 : f32 to vector<8x1xf32>
    %100 = arith.divf %98, %99 : vector<8x1xf32>
    %cst_45 = arith.constant 9.99999997E-7 : f32
    %101 = vector.broadcast %cst_45 : f32 to vector<8x1xf32>
    %102 = arith.addf %100, %101 : vector<8x1xf32>
    %103 = math.rsqrt %102 : vector<8x1xf32>
    %104 = vector.broadcast %103 : vector<8x1xf32> to vector<8x256xf32>
    %105 = arith.mulf %93, %104 : vector<8x256xf32>
    %106 = vector.broadcast %95 : vector<1x256xf32> to vector<8x256xf32>
    %107 = arith.mulf %105, %106 : vector<8x256xf32>
    %108 = arith.truncf %107 : vector<8x256xf32> to vector<8x256xbf16>
    %c0_46 = arith.constant 0 : index
    %c0_47 = arith.constant 0 : index
    %c0_48 = arith.constant 0 : index
    %109 = vector.load %arg6[%c0_46, %c0_47, %c0_48] : memref<2x256x1024xbf16, #tpu.memory_space<vmem>>, vector<1x256x1024xbf16>
    %110 = vector.shape_cast %109 : vector<1x256x1024xbf16> to vector<256x1024xbf16>
    %cst_49 = arith.constant dense<0.000000e+00> : vector<8x1024xf32>
    %111 = tpu.matmul %108, %110, %cst_49 {dimension_numbers = #tpu.dot_dimension_numbers<[1], [0], [0], [1], [0, 0, 1, 1], [], []>} : vector<8x256xbf16>, vector<256x1024xbf16>, vector<8x1024xf32> -> vector<8x1024xf32>
    %112 = vector.extract_strided_slice %111 {offsets = [0, 0], sizes = [8, 512], strides = [1, 1]} : vector<8x1024xf32> to vector<8x512xf32>
    %113 = vector.extract_strided_slice %111 {offsets = [0, 512], sizes = [8, 512], strides = [1, 1]} : vector<8x1024xf32> to vector<8x512xf32>
    %114 = arith.negf %112 : vector<8x512xf32>
    %115 = math.exp %114 : vector<8x512xf32>
    %cst_50 = arith.constant 1.000000e+00 : f32
    %116 = vector.broadcast %cst_50 : f32 to vector<8x512xf32>
    %117 = arith.addf %116, %115 : vector<8x512xf32>
    %118 = arith.divf %116, %117 : vector<8x512xf32>
    %119 = arith.mulf %112, %118 : vector<8x512xf32>
    %120 = arith.mulf %119, %113 : vector<8x512xf32>
    %121 = arith.truncf %120 : vector<8x512xf32> to vector<8x512xbf16>
    %c0_51 = arith.constant 0 : index
    %c0_52 = arith.constant 0 : index
    %c0_53 = arith.constant 0 : index
    %122 = vector.load %arg7[%c0_51, %c0_52, %c0_53] : memref<2x512x256xbf16, #tpu.memory_space<vmem>>, vector<1x512x256xbf16>
    %123 = vector.shape_cast %122 : vector<1x512x256xbf16> to vector<512x256xbf16>
    %cst_54 = arith.constant dense<0.000000e+00> : vector<8x256xf32>
    %124 = tpu.matmul %121, %123, %cst_54 {dimension_numbers = #tpu.dot_dimension_numbers<[1], [0], [0], [1], [0, 0, 1, 1], [], []>} : vector<8x512xbf16>, vector<512x256xbf16>, vector<8x256xf32> -> vector<8x256xf32>
    %125 = arith.addf %93, %124 : vector<8x256xf32>
    %c1 = arith.constant 1 : index
    %c0_55 = arith.constant 0 : index
    %c0_56 = arith.constant 0 : index
    %126 = vector.load %arg2[%c1, %c0_55, %c0_56] : memref<2x1x256xf32, #tpu.memory_space<vmem>>, vector<1x1x256xf32>
    %127 = vector.shape_cast %126 : vector<1x1x256xf32> to vector<1x256xf32>
    %128 = arith.mulf %125, %125 : vector<8x256xf32>
    %cst_57 = arith.constant dense<0.000000e+00> : vector<8xf32>
    %129 = vector.multi_reduction <add>, %128, %cst_57 [1] : vector<8x256xf32> to vector<8xf32>
    %130 = vector.shape_cast %129 : vector<8xf32> to vector<8x1xf32>
    %cst_58 = arith.constant 2.560000e+02 : f32
    %131 = vector.broadcast %cst_58 : f32 to vector<8x1xf32>
    %132 = arith.divf %130, %131 : vector<8x1xf32>
    %cst_59 = arith.constant 9.99999997E-7 : f32
    %133 = vector.broadcast %cst_59 : f32 to vector<8x1xf32>
    %134 = arith.addf %132, %133 : vector<8x1xf32>
    %135 = math.rsqrt %134 : vector<8x1xf32>
    %136 = vector.broadcast %135 : vector<8x1xf32> to vector<8x256xf32>
    %137 = arith.mulf %125, %136 : vector<8x256xf32>
    %138 = vector.broadcast %127 : vector<1x256xf32> to vector<8x256xf32>
    %139 = arith.mulf %137, %138 : vector<8x256xf32>
    %140 = arith.truncf %139 : vector<8x256xf32> to vector<8x256xbf16>
    %c1_60 = arith.constant 1 : index
    %c0_61 = arith.constant 0 : index
    %c0_62 = arith.constant 0 : index
    %141 = vector.load %arg4[%c1_60, %c0_61, %c0_62] : memref<2x256x768xbf16, #tpu.memory_space<vmem>>, vector<1x256x768xbf16>
    %142 = vector.shape_cast %141 : vector<1x256x768xbf16> to vector<256x768xbf16>
    %cst_63 = arith.constant dense<0.000000e+00> : vector<8x768xf32>
    %143 = tpu.matmul %140, %142, %cst_63 {dimension_numbers = #tpu.dot_dimension_numbers<[1], [0], [0], [1], [0, 0, 1, 1], [], []>} : vector<8x256xbf16>, vector<256x768xbf16>, vector<8x768xf32> -> vector<8x768xf32>
    %144 = vector.extract_strided_slice %143 {offsets = [0, 0], sizes = [8, 128], strides = [1, 1]} : vector<8x768xf32> to vector<8x128xf32>
    %145 = vector.extract_strided_slice %143 {offsets = [0, 256], sizes = [8, 128], strides = [1, 1]} : vector<8x768xf32> to vector<8x128xf32>
    %146 = vector.extract_strided_slice %143 {offsets = [0, 512], sizes = [8, 128], strides = [1, 1]} : vector<8x768xf32> to vector<8x128xf32>
    %147 = arith.mulf %144, %2 : vector<8x128xf32>
    %c64_i32_64 = arith.constant 64 : i32
    %148 = tpu.dynamic_rotate %144 by %c64_i32_64 dim 1 : vector<8x128xf32>, i32 -> vector<8x128xf32>
    %149 = arith.mulf %148, %3 : vector<8x128xf32>
    %150 = arith.addf %147, %149 : vector<8x128xf32>
    %151 = arith.mulf %145, %4 : vector<8x128xf32>
    %c64_i32_65 = arith.constant 64 : i32
    %152 = tpu.dynamic_rotate %145 by %c64_i32_65 dim 1 : vector<8x128xf32>, i32 -> vector<8x128xf32>
    %153 = arith.mulf %152, %5 : vector<8x128xf32>
    %154 = arith.addf %151, %153 : vector<8x128xf32>
    %155 = arith.truncf %150 : vector<8x128xf32> to vector<8x128xbf16>
    %156 = arith.truncf %154 : vector<8x128xf32> to vector<8x128xbf16>
    %cst_66 = arith.constant dense<0.000000e+00> : vector<8x8xf32>
    %157 = tpu.matmul %155, %156, %cst_66 {dimension_numbers = #tpu.dot_dimension_numbers<[1], [1], [0], [0], [0, 0, 1, 0], [], []>} : vector<8x128xbf16>, vector<8x128xbf16>, vector<8x8xf32> -> vector<8x8xf32>
    %cst_67 = arith.constant -3.40282347E+38 : f32
    %158 = vector.broadcast %cst_67 : f32 to vector<8x8xf32>
    %159 = arith.select %8, %157, %158 : vector<8x8xi1>, vector<8x8xf32>
    %cst_68 = arith.constant dense<0xFF800000> : vector<8xf32>
    %160 = vector.multi_reduction <maximumf>, %159, %cst_68 [1] : vector<8x8xf32> to vector<8xf32>
    %161 = vector.shape_cast %160 : vector<8xf32> to vector<8x1xf32>
    %162 = vector.broadcast %161 : vector<8x1xf32> to vector<8x8xf32>
    %163 = arith.subf %159, %162 : vector<8x8xf32>
    %164 = math.exp %163 : vector<8x8xf32>
    %cst_69 = arith.constant dense<0.000000e+00> : vector<8xf32>
    %165 = vector.multi_reduction <add>, %164, %cst_69 [1] : vector<8x8xf32> to vector<8xf32>
    %166 = vector.shape_cast %165 : vector<8xf32> to vector<8x1xf32>
    %167 = arith.truncf %164 : vector<8x8xf32> to vector<8x8xbf16>
    %168 = arith.truncf %146 : vector<8x128xf32> to vector<8x128xbf16>
    %cst_70 = arith.constant dense<0.000000e+00> : vector<8x128xf32>
    %169 = tpu.matmul %167, %168, %cst_70 {dimension_numbers = #tpu.dot_dimension_numbers<[1], [0], [0], [1], [0, 0, 1, 1], [], []>} : vector<8x8xbf16>, vector<8x128xbf16>, vector<8x128xf32> -> vector<8x128xf32>
    %170 = tpu.reciprocal %166 {approx = true} : vector<8x1xf32> -> vector<8x1xf32>
    %171 = vector.broadcast %170 : vector<8x1xf32> to vector<8x128xf32>
    %172 = arith.mulf %169, %171 : vector<8x128xf32>
    %173 = arith.truncf %172 : vector<8x128xf32> to vector<8x128xbf16>
    %c0_71 = arith.constant 0 : index
    %c0_72 = arith.constant 0 : index
    %174 = vector.load %arg15[%c0_71, %c0_72] : memref<8x256xbf16, #tpu.memory_space<vmem>>, vector<8x128xbf16>
    tpu.vector_store %arg15[%c0_71, %c0_72], %173 {strides = array<i32>} : memref<8x256xbf16, #tpu.memory_space<vmem>>, vector<8x128xbf16>,
    %175 = vector.extract_strided_slice %143 {offsets = [0, 128], sizes = [8, 128], strides = [1, 1]} : vector<8x768xf32> to vector<8x128xf32>
    %176 = vector.extract_strided_slice %143 {offsets = [0, 384], sizes = [8, 128], strides = [1, 1]} : vector<8x768xf32> to vector<8x128xf32>
    %177 = vector.extract_strided_slice %143 {offsets = [0, 640], sizes = [8, 128], strides = [1, 1]} : vector<8x768xf32> to vector<8x128xf32>
    %178 = arith.mulf %175, %2 : vector<8x128xf32>
    %c64_i32_73 = arith.constant 64 : i32
    %179 = tpu.dynamic_rotate %175 by %c64_i32_73 dim 1 : vector<8x128xf32>, i32 -> vector<8x128xf32>
    %180 = arith.mulf %179, %3 : vector<8x128xf32>
    %181 = arith.addf %178, %180 : vector<8x128xf32>
    %182 = arith.mulf %176, %4 : vector<8x128xf32>
    %c64_i32_74 = arith.constant 64 : i32
    %183 = tpu.dynamic_rotate %176 by %c64_i32_74 dim 1 : vector<8x128xf32>, i32 -> vector<8x128xf32>
    %184 = arith.mulf %183, %5 : vector<8x128xf32>
    %185 = arith.addf %182, %184 : vector<8x128xf32>
    %186 = arith.truncf %181 : vector<8x128xf32> to vector<8x128xbf16>
    %187 = arith.truncf %185 : vector<8x128xf32> to vector<8x128xbf16>
    %cst_75 = arith.constant dense<0.000000e+00> : vector<8x8xf32>
    %188 = tpu.matmul %186, %187, %cst_75 {dimension_numbers = #tpu.dot_dimension_numbers<[1], [1], [0], [0], [0, 0, 1, 0], [], []>} : vector<8x128xbf16>, vector<8x128xbf16>, vector<8x8xf32> -> vector<8x8xf32>
    %cst_76 = arith.constant -3.40282347E+38 : f32
    %189 = vector.broadcast %cst_76 : f32 to vector<8x8xf32>
    %190 = arith.select %8, %188, %189 : vector<8x8xi1>, vector<8x8xf32>
    %cst_77 = arith.constant dense<0xFF800000> : vector<8xf32>
    %191 = vector.multi_reduction <maximumf>, %190, %cst_77 [1] : vector<8x8xf32> to vector<8xf32>
    %192 = vector.shape_cast %191 : vector<8xf32> to vector<8x1xf32>
    %193 = vector.broadcast %192 : vector<8x1xf32> to vector<8x8xf32>
    %194 = arith.subf %190, %193 : vector<8x8xf32>
    %195 = math.exp %194 : vector<8x8xf32>
    %cst_78 = arith.constant dense<0.000000e+00> : vector<8xf32>
    %196 = vector.multi_reduction <add>, %195, %cst_78 [1] : vector<8x8xf32> to vector<8xf32>
    %197 = vector.shape_cast %196 : vector<8xf32> to vector<8x1xf32>
    %198 = arith.truncf %195 : vector<8x8xf32> to vector<8x8xbf16>
    %199 = arith.truncf %177 : vector<8x128xf32> to vector<8x128xbf16>
    %cst_79 = arith.constant dense<0.000000e+00> : vector<8x128xf32>
    %200 = tpu.matmul %198, %199, %cst_79 {dimension_numbers = #tpu.dot_dimension_numbers<[1], [0], [0], [1], [0, 0, 1, 1], [], []>} : vector<8x8xbf16>, vector<8x128xbf16>, vector<8x128xf32> -> vector<8x128xf32>
    %201 = tpu.reciprocal %197 {approx = true} : vector<8x1xf32> -> vector<8x1xf32>
    %202 = vector.broadcast %201 : vector<8x1xf32> to vector<8x128xf32>
    %203 = arith.mulf %200, %202 : vector<8x128xf32>
    %204 = arith.truncf %203 : vector<8x128xf32> to vector<8x128xbf16>
    %c0_80 = arith.constant 0 : index
    %c128_81 = arith.constant 128 : index
    %205 = vector.load %arg15[%c0_80, %c128_81] : memref<8x256xbf16, #tpu.memory_space<vmem>>, vector<8x128xbf16>
    tpu.vector_store %arg15[%c0_80, %c128_81], %204 {strides = array<i32>} : memref<8x256xbf16, #tpu.memory_space<vmem>>, vector<8x128xbf16>,
    %c0_82 = arith.constant 0 : index
    %c0_83 = arith.constant 0 : index
    %206 = vector.load %arg15[%c0_82, %c0_83] : memref<8x256xbf16, #tpu.memory_space<vmem>>, vector<8x256xbf16>
    %c1_84 = arith.constant 1 : index
    %c0_85 = arith.constant 0 : index
    %c0_86 = arith.constant 0 : index
    %207 = vector.load %arg5[%c1_84, %c0_85, %c0_86] : memref<2x256x256xbf16, #tpu.memory_space<vmem>>, vector<1x256x256xbf16>
    %208 = vector.shape_cast %207 : vector<1x256x256xbf16> to vector<256x256xbf16>
    %cst_87 = arith.constant dense<0.000000e+00> : vector<8x256xf32>
    %209 = tpu.matmul %206, %208, %cst_87 {dimension_numbers = #tpu.dot_dimension_numbers<[1], [0], [0], [1], [0, 0, 1, 1], [], []>} : vector<8x256xbf16>, vector<256x256xbf16>, vector<8x256xf32> -> vector<8x256xf32>
    %210 = arith.addf %125, %209 : vector<8x256xf32>
    %c1_88 = arith.constant 1 : index
    %c0_89 = arith.constant 0 : index
    %c0_90 = arith.constant 0 : index
    %211 = vector.load %arg3[%c1_88, %c0_89, %c0_90] : memref<2x1x256xf32, #tpu.memory_space<vmem>>, vector<1x1x256xf32>
    %212 = vector.shape_cast %211 : vector<1x1x256xf32> to vector<1x256xf32>
    %213 = arith.mulf %210, %210 : vector<8x256xf32>
    %cst_91 = arith.constant dense<0.000000e+00> : vector<8xf32>
    %214 = vector.multi_reduction <add>, %213, %cst_91 [1] : vector<8x256xf32> to vector<8xf32>
    %215 = vector.shape_cast %214 : vector<8xf32> to vector<8x1xf32>
    %cst_92 = arith.constant 2.560000e+02 : f32
    %216 = vector.broadcast %cst_92 : f32 to vector<8x1xf32>
    %217 = arith.divf %215, %216 : vector<8x1xf32>
    %cst_93 = arith.constant 9.99999997E-7 : f32
    %218 = vector.broadcast %cst_93 : f32 to vector<8x1xf32>
    %219 = arith.addf %217, %218 : vector<8x1xf32>
    %220 = math.rsqrt %219 : vector<8x1xf32>
    %221 = vector.broadcast %220 : vector<8x1xf32> to vector<8x256xf32>
    %222 = arith.mulf %210, %221 : vector<8x256xf32>
    %223 = vector.broadcast %212 : vector<1x256xf32> to vector<8x256xf32>
    %224 = arith.mulf %222, %223 : vector<8x256xf32>
    %225 = arith.truncf %224 : vector<8x256xf32> to vector<8x256xbf16>
    %c1_94 = arith.constant 1 : index
    %c0_95 = arith.constant 0 : index
    %c0_96 = arith.constant 0 : index
    %226 = vector.load %arg6[%c1_94, %c0_95, %c0_96] : memref<2x256x1024xbf16, #tpu.memory_space<vmem>>, vector<1x256x1024xbf16>
    %227 = vector.shape_cast %226 : vector<1x256x1024xbf16> to vector<256x1024xbf16>
    %cst_97 = arith.constant dense<0.000000e+00> : vector<8x1024xf32>
    %228 = tpu.matmul %225, %227, %cst_97 {dimension_numbers = #tpu.dot_dimension_numbers<[1], [0], [0], [1], [0, 0, 1, 1], [], []>} : vector<8x256xbf16>, vector<256x1024xbf16>, vector<8x1024xf32> -> vector<8x1024xf32>
    %229 = vector.extract_strided_slice %228 {offsets = [0, 0], sizes = [8, 512], strides = [1, 1]} : vector<8x1024xf32> to vector<8x512xf32>
    %230 = vector.extract_strided_slice %228 {offsets = [0, 512], sizes = [8, 512], strides = [1, 1]} : vector<8x1024xf32> to vector<8x512xf32>
    %231 = arith.negf %229 : vector<8x512xf32>
    %232 = math.exp %231 : vector<8x512xf32>
    %cst_98 = arith.constant 1.000000e+00 : f32
    %233 = vector.broadcast %cst_98 : f32 to vector<8x512xf32>
    %234 = arith.addf %233, %232 : vector<8x512xf32>
    %235 = arith.divf %233, %234 : vector<8x512xf32>
    %236 = arith.mulf %229, %235 : vector<8x512xf32>
    %237 = arith.mulf %236, %230 : vector<8x512xf32>
    %238 = arith.truncf %237 : vector<8x512xf32> to vector<8x512xbf16>
    %c1_99 = arith.constant 1 : index
    %c0_100 = arith.constant 0 : index
    %c0_101 = arith.constant 0 : index
    %239 = vector.load %arg7[%c1_99, %c0_100, %c0_101] : memref<2x512x256xbf16, #tpu.memory_space<vmem>>, vector<1x512x256xbf16>
    %240 = vector.shape_cast %239 : vector<1x512x256xbf16> to vector<512x256xbf16>
    %cst_102 = arith.constant dense<0.000000e+00> : vector<8x256xf32>
    %241 = tpu.matmul %238, %240, %cst_102 {dimension_numbers = #tpu.dot_dimension_numbers<[1], [0], [0], [1], [0, 0, 1, 1], [], []>} : vector<8x512xbf16>, vector<512x256xbf16>, vector<8x256xf32> -> vector<8x256xf32>
    %242 = arith.addf %210, %241 : vector<8x256xf32>
    %c0_103 = arith.constant 0 : index
    %c0_104 = arith.constant 0 : index
    %243 = vector.load %arg8[%c0_103, %c0_104] : memref<1x256xf32, #tpu.memory_space<vmem>>, vector<1x256xf32>
    %244 = arith.mulf %242, %242 : vector<8x256xf32>
    %cst_105 = arith.constant dense<0.000000e+00> : vector<8xf32>
    %245 = vector.multi_reduction <add>, %244, %cst_105 [1] : vector<8x256xf32> to vector<8xf32>
    %246 = vector.shape_cast %245 : vector<8xf32> to vector<8x1xf32>
    %cst_106 = arith.constant 2.560000e+02 : f32
    %247 = vector.broadcast %cst_106 : f32 to vector<8x1xf32>
    %248 = arith.divf %246, %247 : vector<8x1xf32>
    %cst_107 = arith.constant 9.99999997E-7 : f32
    %249 = vector.broadcast %cst_107 : f32 to vector<8x1xf32>
    %250 = arith.addf %248, %249 : vector<8x1xf32>
    %251 = math.rsqrt %250 : vector<8x1xf32>
    %252 = vector.broadcast %251 : vector<8x1xf32> to vector<8x256xf32>
    %253 = arith.mulf %242, %252 : vector<8x256xf32>
    %254 = vector.broadcast %243 : vector<1x256xf32> to vector<8x256xf32>
    %255 = arith.mulf %253, %254 : vector<8x256xf32>
    %256 = arith.truncf %255 : vector<8x256xf32> to vector<8x256xbf16>
    %c0_108 = arith.constant 0 : index
    %c0_109 = arith.constant 0 : index
    %257 = vector.load %arg9[%c0_108, %c0_109] : memref<256x256xbf16, #tpu.memory_space<vmem>>, vector<256x256xbf16>
    %cst_110 = arith.constant dense<0.000000e+00> : vector<8x256xf32>
    %258 = tpu.matmul %256, %257, %cst_110 {dimension_numbers = #tpu.dot_dimension_numbers<[1], [0], [0], [1], [0, 0, 1, 1], [], []>} : vector<8x256xbf16>, vector<256x256xbf16>, vector<8x256xf32> -> vector<8x256xf32>
    %c0_111 = arith.constant 0 : index
    %c0_112 = arith.constant 0 : index
    %259 = vector.load %arg14[%c0_111, %c0_112] : memref<8x256xf32, #tpu.memory_space<vmem>>, vector<8x256xf32>
    tpu.vector_store %arg14[%c0_111, %c0_112], %258 {strides = array<i32>} : memref<8x256xf32, #tpu.memory_space<vmem>>, vector<8x256xf32>,
    return
  }
  func.func @transform_0(%arg0: i32) -> (i32, i32) {
    %c0_i32 = arith.constant 0 : i32
    %c0_i32_0 = arith.constant 0 : i32
    return %arg0, %c0_i32 : i32, i32
  }
  func.func @transform_1(%arg0: i32) -> (i32, i32, i32) {
    %c0_i32 = arith.constant 0 : i32
    %c0_i32_0 = arith.constant 0 : i32
    %c0_i32_1 = arith.constant 0 : i32
    %c0_i32_2 = arith.constant 0 : i32
    return %c0_i32, %c0_i32_0, %c0_i32_1 : i32, i32, i32
  }
  func.func @transform_2(%arg0: i32) -> (i32, i32, i32) {
    %c0_i32 = arith.constant 0 : i32
    %c0_i32_0 = arith.constant 0 : i32
    %c0_i32_1 = arith.constant 0 : i32
    %c0_i32_2 = arith.constant 0 : i32
    return %c0_i32, %c0_i32_0, %c0_i32_1 : i32, i32, i32
  }
  func.func @transform_3(%arg0: i32) -> (i32, i32, i32) {
    %c0_i32 = arith.constant 0 : i32
    %c0_i32_0 = arith.constant 0 : i32
    %c0_i32_1 = arith.constant 0 : i32
    %c0_i32_2 = arith.constant 0 : i32
    return %c0_i32, %c0_i32_0, %c0_i32_1 : i32, i32, i32
  }
  func.func @transform_4(%arg0: i32) -> (i32, i32, i32) {
    %c0_i32 = arith.constant 0 : i32
    %c0_i32_0 = arith.constant 0 : i32
    %c0_i32_1 = arith.constant 0 : i32
    %c0_i32_2 = arith.constant 0 : i32
    return %c0_i32, %c0_i32_0, %c0_i32_1 : i32, i32, i32
  }
  func.func @transform_5(%arg0: i32) -> (i32, i32, i32) {
    %c0_i32 = arith.constant 0 : i32
    %c0_i32_0 = arith.constant 0 : i32
    %c0_i32_1 = arith.constant 0 : i32
    %c0_i32_2 = arith.constant 0 : i32
    return %c0_i32, %c0_i32_0, %c0_i32_1 : i32, i32, i32
  }
  func.func @transform_6(%arg0: i32) -> (i32, i32, i32) {
    %c0_i32 = arith.constant 0 : i32
    %c0_i32_0 = arith.constant 0 : i32
    %c0_i32_1 = arith.constant 0 : i32
    %c0_i32_2 = arith.constant 0 : i32
    return %c0_i32, %c0_i32_0, %c0_i32_1 : i32, i32, i32
  }
  func.func @transform_7(%arg0: i32) -> (i32, i32) {
    %c0_i32 = arith.constant 0 : i32
    %c0_i32_0 = arith.constant 0 : i32
    %c0_i32_1 = arith.constant 0 : i32
    return %c0_i32, %c0_i32_0 : i32, i32
  }
  func.func @transform_8(%arg0: i32) -> (i32, i32) {
    %c0_i32 = arith.constant 0 : i32
    %c0_i32_0 = arith.constant 0 : i32
    %c0_i32_1 = arith.constant 0 : i32
    return %c0_i32, %c0_i32_0 : i32, i32
  }
  func.func @transform_9(%arg0: i32) -> (i32, i32) {
    %c0_i32 = arith.constant 0 : i32
    %c0_i32_0 = arith.constant 0 : i32
    %c0_i32_1 = arith.constant 0 : i32
    return %c0_i32, %c0_i32_0 : i32, i32
  }
  func.func @transform_10(%arg0: i32) -> (i32, i32) {
    %c0_i32 = arith.constant 0 : i32
    %c0_i32_0 = arith.constant 0 : i32
    %c0_i32_1 = arith.constant 0 : i32
    return %c0_i32, %c0_i32_0 : i32, i32
  }
  func.func @transform_11(%arg0: i32) -> (i32, i32) {
    %c0_i32 = arith.constant 0 : i32
    %c0_i32_0 = arith.constant 0 : i32
    %c0_i32_1 = arith.constant 0 : i32
    return %c0_i32, %c0_i32_0 : i32, i32
  }
  func.func @transform_12(%arg0: i32) -> (i32, i32) {
    %c0_i32 = arith.constant 0 : i32
    %c0_i32_0 = arith.constant 0 : i32
    %c0_i32_1 = arith.constant 0 : i32
    return %c0_i32, %c0_i32_0 : i32, i32
  }
  func.func @transform_13(%arg0: i32) -> (i32, i32) {
    %c0_i32 = arith.constant 0 : i32
    %c0_i32_0 = arith.constant 0 : i32
    return %arg0, %c0_i32 : i32, i32
  }
}

</mosaic_0001>

<llo_original>
// kernel: decoder_forward.1
$region0: #{decoder_forward.1}
  #allocation0 [shape = 'u32[]', space=smem, size = 0x4, offset = 0x4, fixed_abs, tag = 'smem constant byte address 0x4 - core index']
  #allocation1 [shape = 'u32[144,128]{1,0:T(1,128)}', space=vmem, size = 0x12000, scoped, tag = 'internal scratch']
  #allocation2 [shape = 'bf16[8,256]{1,0:T(8,128)(2,1)}', space=vmem, size = 0x1000, scoped, tag = 'scratch operand']
  %s0 = inlined_call_operand.vmem [shape: bf16[16,256], index: 0, kind: input, shape index: {}]
  %s1 = inlined_call_operand.vmem [shape: f32[2,1,256], index: 1, kind: input, shape index: {}, may-alias: {1,2}]
  %s2 = inlined_call_operand.vmem [shape: f32[2,1,256], index: 2, kind: input, shape index: {}, may-alias: {1,2}]
  %s3 = inlined_call_operand.hbm [shape: bf16[2,256,768], index: 3, kind: input, shape index: {}]
  %s4 = inlined_call_operand.hbm [shape: bf16[2,256,256], index: 4, kind: input, shape index: {}]
  %s5 = inlined_call_operand.hbm [shape: bf16[2,256,1024], index: 5, kind: input, shape index: {}]
  %s6 = inlined_call_operand.hbm [shape: bf16[2,512,256], index: 6, kind: input, shape index: {}]
  %s7 = inlined_call_operand.vmem [shape: f32[1,256], index: 7, kind: input, shape index: {}]
  %s8 = inlined_call_operand.vmem [shape: bf16[256,256], index: 8, kind: input, shape index: {}]
  %s9 = inlined_call_operand.vmem [shape: f32[8,128], index: 9, kind: input, shape index: {}]
  %s10 = inlined_call_operand.vmem [shape: f32[8,128], index: 10, kind: input, shape index: {}]
  %s11 = inlined_call_operand.vmem [shape: f32[8,128], index: 11, kind: input, shape index: {}]
  %s12 = inlined_call_operand.vmem [shape: f32[8,128], index: 12, kind: input, shape index: {}]
  %s13 = inlined_call_operand.hbm [shape: f32[16,256], index: 13, kind: output, shape index: {}]
  %s14 = sld [smem:[#allocation0]]
  $region101: #{decoder_forward.1} parent=0
    _
  %s16 = ssub.s32 1, %s14
  %s17 = scalar_select 0, %s16, %s14
  $region1: #{decoder_forward.1} parent=0
    #allocation3 [shape = 'u8[786432]{0}', space=vmem, size = 0xc0000, scoped, tag = 'input window, operand 3, single buffered']
    #allocation4 [shape = 's32[2]{0}', space=sflag, size = 0x8, scoped, tag = 'scoped memory for decoder_forward.1']
    #allocation5 [shape = 's32[2]{0}', space=sflag, size = 0x8, scoped, tag = 'scoped memory for decoder_forward.1']
    #allocation6 [shape = 'u8[262144]{0}', space=vmem, size = 0x40000, scoped, tag = 'input window, operand 4, single buffered']
    #allocation7 [shape = 's32[1]{0}', space=sflag, size = 0x4, scoped, tag = 'scoped memory for decoder_forward.1']
    #allocation8 [shape = 'u8[1048576]{0}', space=vmem, size = 0x100000, scoped, tag = 'input window, operand 5, single buffered']
    #allocation9 [shape = 'u8[524288]{0}', space=vmem, size = 0x80000, scoped, tag = 'input window, operand 6, single buffered']
    #allocation10 [shape = 's32[1]{0}', space=sflag, size = 0x4, scoped, tag = 'scoped memory for decoder_forward.1']
    #allocation11 [shape = 'u8[16384]{0}', space=vmem, size = 0x4000, scoped, tag = 'output window, operand 0']
    %18 = vsyncpa [#allocation4], 0
    %19 = vsyncpa [#allocation7], 0
    %20 = vsyncpa [#allocation10], 0
    %21 = vsyncpa [#allocation5], 0
    %s22 = scalar_lea.sflag [#allocation5], 1
    %23 = vsyncpa %s22, 0
    loop: start=0, step=1, limit=4
    $region2: #{decoder_forward.1} parent=1 // loop_pre_header
      _
    $region3: #{decoder_forward.1} parent=1 // loop_header
      %s25 = sphi 0, %s29
      %p26 = scmp.ge.s32.totalorder %s25, 4
      %s35 = sphi 0, %s37
      %s38 = sphi 0, %s35
      %s39 = sphi 0, %s38
      %s55 = sphi 0, %s39
      %s59 = sphi 0, %s59
      %s61 = sphi 0, %s59
      %s62 = sphi 0, %s61
      %s76 = sphi 0, %s62
      %s80 = sphi 0, %s80
      %s82 = sphi 0, %s80
      %s83 = sphi 0, %s82
      %s97 = sphi 0, %s83
      %s101 = sphi 0, %s101
      %s103 = sphi 0, %s101
      %s104 = sphi 0, %s103
      %s118 = sphi 0, %s104
      %s122 = sphi 0, %s122
      %s124 = sphi 0, %s122
      %s125 = sphi 0, %s124
      %s139 = sphi 0, %s125
      %s143 = sphi 0, %s143
      %s145 = sphi 0, %s143
      %s146 = sphi 0, %s145
      %s160 = sphi 0, %s146
      %s164 = sphi 0, %s164
      %s166 = sphi 0, %s164
      %s167 = sphi 0, %s166
      %s181 = sphi 0, %s167
      %s185 = sphi 0, %s185
      %s187 = sphi 0, %s185
      %s188 = sphi 0, %s187
      %s202 = sphi 0, %s188
      %s206 = sphi 0, %s206
      %s208 = sphi 0, %s206
      %s209 = sphi 0, %s208
      %s223 = sphi 0, %s209
      %s227 = sphi 0, %s227
      %s229 = sphi 0, %s227
      %s230 = sphi 0, %s229
      %s244 = sphi 0, %s230
      %s248 = sphi 0, %s248
      %s250 = sphi 0, %s248
      %s251 = sphi 0, %s250
      %s265 = sphi 0, %s251
      %s269 = sphi 0, %s269
      %s271 = sphi 0, %s269
      %s272 = sphi 0, %s271
      %s286 = sphi 0, %s272
      %s290 = sphi 0, %s290
      %s292 = sphi 0, %s290
      %s293 = sphi 0, %s292
      %s307 = sphi 0, %s293
      %s313 = sphi 0, %s315
      %s316 = sphi 0, %s313
      %s317 = sphi 0, %s316
      %s333 = sphi 0, %s317
    $region4: #{decoder_forward.1} parent=1 // loop_header_branch
      %28 = sbr.rel (%p26) target = $region8
    $region5: #{decoder_forward.1} parent=1 // loop_body
      %s30 = ssub.s32 %s25, 1
      %s31 = ssub.s32 %s25, 2
      %s32 = sadd.s32 %s25, 1
      %s33 = ssub.s32 %s25, %s32
      %p34 = scmp.eq.s32.totalorder %s33, 0
      %s36 = sadd.s32 %s35, 1
      %s37 = scalar_select %p34, %s35, %s36
      %p40 = pneg %p34
      %p41 = scmp.eq.s32.totalorder %s25, 1
      %p42 = por %p40, %p41
      %p43 = scmp.ne.s32.totalorder %s35, %s38
      %p44 = scmp.eq.s32.totalorder %s25, 0
      %p45 = por %p43, %p44
      %p46 = scmp.ne.s32.totalorder %s35, %s38
      %p47 = scmp.eq.s32.totalorder %s30, 1
      %p48 = por %p46, %p47
      %p49 = scmp.ne.s32.totalorder %s38, %s39
      %p50 = scmp.eq.s32.totalorder %s30, 0
      %p51 = por %p49, %p50
      %p52 = scmp.ne.s32.totalorder %s38, %s39
      %p53 = scmp.eq.s32.totalorder %s31, 1
      %p54 = por %p52, %p53
      %p56 = scmp.ne.s32.totalorder %s39, %s55
      %p57 = scmp.eq.s32.totalorder %s31, 0
      %p58 = por %p56, %p57
      %s60 = sadd.s32 %s59, 1
      %p63 = scmp.eq.s32.totalorder %s25, 1
      %p64 = scmp.ne.s32.totalorder %s59, %s61
      %p65 = scmp.eq.s32.totalorder %s25, 0
      %p66 = por %p64, %p65
      %p67 = scmp.ne.s32.totalorder %s59, %s61
      %p68 = scmp.eq.s32.totalorder %s30, 1
      %p69 = por %p67, %p68
      %p70 = scmp.ne.s32.totalorder %s61, %s62
      %p71 = scmp.eq.s32.totalorder %s30, 0
      %p72 = por %p70, %p71
      %p73 = scmp.ne.s32.totalorder %s61, %s62
      %p74 = scmp.eq.s32.totalorder %s31, 1
      %p75 = por %p73, %p74
      %p77 = scmp.ne.s32.totalorder %s62, %s76
      %p78 = scmp.eq.s32.totalorder %s31, 0
      %p79 = por %p77, %p78
      %s81 = sadd.s32 %s80, 1
      %p84 = scmp.eq.s32.totalorder %s25, 1
      %p85 = scmp.ne.s32.totalorder %s80, %s82
      %p86 = scmp.eq.s32.totalorder %s25, 0
      %p87 = por %p85, %p86
      %p88 = scmp.ne.s32.totalorder %s80, %s82
      %p89 = scmp.eq.s32.totalorder %s30, 1
      %p90 = por %p88, %p89
      %p91 = scmp.ne.s32.totalorder %s82, %s83
      %p92 = scmp.eq.s32.totalorder %s30, 0
      %p93 = por %p91, %p92
      %p94 = scmp.ne.s32.totalorder %s82, %s83
      %p95 = scmp.eq.s32.totalorder %s31, 1
      %p96 = por %p94, %p95
      %p98 = scmp.ne.s32.totalorder %s83, %s97
      %p99 = scmp.eq.s32.totalorder %s31, 0
      %p100 = por %p98, %p99
      %s102 = sadd.s32 %s101, 1
      %p105 = scmp.eq.s32.totalorder %s25, 1
      %p106 = scmp.ne.s32.totalorder %s101, %s103
      %p107 = scmp.eq.s32.totalorder %s25, 0
      %p108 = por %p106, %p107
      %p109 = scmp.ne.s32.totalorder %s101, %s103
      %p110 = scmp.eq.s32.totalorder %s30, 1
      %p111 = por %p109, %p110
      %p112 = scmp.ne.s32.totalorder %s103, %s104
      %p113 = scmp.eq.s32.totalorder %s30, 0
      %p114 = por %p112, %p113
      %p115 = scmp.ne.s32.totalorder %s103, %s104
      %p116 = scmp.eq.s32.totalorder %s31, 1
      %p117 = por %p115, %p116
      %p119 = scmp.ne.s32.totalorder %s104, %s118
      %p120 = scmp.eq.s32.totalorder %s31, 0
      %p121 = por %p119, %p120
      %s123 = sadd.s32 %s122, 1
      %p126 = scmp.eq.s32.totalorder %s25, 1
      %p127 = scmp.ne.s32.totalorder %s122, %s124
      %p128 = scmp.eq.s32.totalorder %s25, 0
      %p129 = por %p127, %p128
      %p130 = scmp.ne.s32.totalorder %s122, %s124
      %p131 = scmp.eq.s32.totalorder %s30, 1
      %p132 = por %p130, %p131
      %p133 = scmp.ne.s32.totalorder %s124, %s125
      %p134 = scmp.eq.s32.totalorder %s30, 0
      %p135 = por %p133, %p134
      %p136 = scmp.ne.s32.totalorder %s124, %s125
      %p137 = scmp.eq.s32.totalorder %s31, 1
      %p138 = por %p136, %p137
      %p140 = scmp.ne.s32.totalorder %s125, %s139
      %p141 = scmp.eq.s32.totalorder %s31, 0
      %p142 = por %p140, %p141
      %s144 = sadd.s32 %s143, 1
      %p147 = scmp.eq.s32.totalorder %s25, 1
      %p148 = scmp.ne.s32.totalorder %s143, %s145
      %p149 = scmp.eq.s32.totalorder %s25, 0
      %p150 = por %p148, %p149
      %p151 = scmp.ne.s32.totalorder %s143, %s145
      %p152 = scmp.eq.s32.totalorder %s30, 1
      %p153 = por %p151, %p152
      %p154 = scmp.ne.s32.totalorder %s145, %s146
      %p155 = scmp.eq.s32.totalorder %s30, 0
      %p156 = por %p154, %p155
      %p157 = scmp.ne.s32.totalorder %s145, %s146
      %p158 = scmp.eq.s32.totalorder %s31, 1
      %p159 = por %p157, %p158
      %p161 = scmp.ne.s32.totalorder %s146, %s160
      %p162 = scmp.eq.s32.totalorder %s31, 0
      %p163 = por %p161, %p162
      %s165 = sadd.s32 %s164, 1
      %p168 = scmp.eq.s32.totalorder %s25, 1
      %p169 = scmp.ne.s32.totalorder %s164, %s166
      %p170 = scmp.eq.s32.totalorder %s25, 0
      %p171 = por %p169, %p170
      %p172 = scmp.ne.s32.totalorder %s164, %s166
      %p173 = scmp.eq.s32.totalorder %s30, 1
      %p174 = por %p172, %p173
      %p175 = scmp.ne.s32.totalorder %s166, %s167
      %p176 = scmp.eq.s32.totalorder %s30, 0
      %p177 = por %p175, %p176
      %p178 = scmp.ne.s32.totalorder %s166, %s167
      %p179 = scmp.eq.s32.totalorder %s31, 1
      %p180 = por %p178, %p179
      %p182 = scmp.ne.s32.totalorder %s167, %s181
      %p183 = scmp.eq.s32.totalorder %s31, 0
      %p184 = por %p182, %p183
      %s186 = sadd.s32 %s185, 1
      %p189 = scmp.eq.s32.totalorder %s25, 1
      %p190 = scmp.ne.s32.totalorder %s185, %s187
      %p191 = scmp.eq.s32.totalorder %s25, 0
      %p192 = por %p190, %p191
      %p193 = scmp.ne.s32.totalorder %s185, %s187
      %p194 = scmp.eq.s32.totalorder %s30, 1
      %p195 = por %p193, %p194
      %p196 = scmp.ne.s32.totalorder %s187, %s188
      %p197 = scmp.eq.s32.totalorder %s30, 0
      %p198 = por %p196, %p197
      %p199 = scmp.ne.s32.totalorder %s187, %s188
      %p200 = scmp.eq.s32.totalorder %s31, 1
      %p201 = por %p199, %p200
      %p203 = scmp.ne.s32.totalorder %s188, %s202
      %p204 = scmp.eq.s32.totalorder %s31, 0
      %p205 = por %p203, %p204
      %s207 = sadd.s32 %s206, 1
      %p210 = scmp.eq.s32.totalorder %s25, 1
      %p211 = scmp.ne.s32.totalorder %s206, %s208
      %p212 = scmp.eq.s32.totalorder %s25, 0
      %p213 = por %p211, %p212
      %p214 = scmp.ne.s32.totalorder %s206, %s208
      %p215 = scmp.eq.s32.totalorder %s30, 1
      %p216 = por %p214, %p215
      %p217 = scmp.ne.s32.totalorder %s208, %s209
      %p218 = scmp.eq.s32.totalorder %s30, 0
      %p219 = por %p217, %p218
      %p220 = scmp.ne.s32.totalorder %s208, %s209
      %p221 = scmp.eq.s32.totalorder %s31, 1
      %p222 = por %p220, %p221
      %p224 = scmp.ne.s32.totalorder %s209, %s223
      %p225 = scmp.eq.s32.totalorder %s31, 0
      %p226 = por %p224, %p225
      %s228 = sadd.s32 %s227, 1
      %p231 = scmp.eq.s32.totalorder %s25, 1
      %p232 = scmp.ne.s32.totalorder %s227, %s229
      %p233 = scmp.eq.s32.totalorder %s25, 0
      %p234 = por %p232, %p233
      %p235 = scmp.ne.s32.totalorder %s227, %s229
      %p236 = scmp.eq.s32.totalorder %s30, 1
      %p237 = por %p235, %p236
      %p238 = scmp.ne.s32.totalorder %s229, %s230
      %p239 = scmp.eq.s32.totalorder %s30, 0
      %p240 = por %p238, %p239
      %p241 = scmp.ne.s32.totalorder %s229, %s230
      %p242 = scmp.eq.s32.totalorder %s31, 1
      %p243 = por %p241, %p242
      %p245 = scmp.ne.s32.totalorder %s230, %s244
      %p246 = scmp.eq.s32.totalorder %s31, 0
      %p247 = por %p245, %p246
      %s249 = sadd.s32 %s248, 1
      %p252 = scmp.eq.s32.totalorder %s25, 1
      %p253 = scmp.ne.s32.totalorder %s248, %s250
      %p254 = scmp.eq.s32.totalorder %s25, 0
      %p255 = por %p253, %p254
      %p256 = scmp.ne.s32.totalorder %s248, %s250
      %p257 = scmp.eq.s32.totalorder %s30, 1
      %p258 = por %p256, %p257
      %p259 = scmp.ne.s32.totalorder %s250, %s251
      %p260 = scmp.eq.s32.totalorder %s30, 0
      %p261 = por %p259, %p260
      %p262 = scmp.ne.s32.totalorder %s250, %s251
      %p263 = scmp.eq.s32.totalorder %s31, 1
      %p264 = por %p262, %p263
      %p266 = scmp.ne.s32.totalorder %s251, %s265
      %p267 = scmp.eq.s32.totalorder %s31, 0
      %p268 = por %p266, %p267
      %s270 = sadd.s32 %s269, 1
      %p273 = scmp.eq.s32.totalorder %s25, 1
      %p274 = scmp.ne.s32.totalorder %s269, %s271
      %p275 = scmp.eq.s32.totalorder %s25, 0
      %p276 = por %p274, %p275
      %p277 = scmp.ne.s32.totalorder %s269, %s271
      %p278 = scmp.eq.s32.totalorder %s30, 1
      %p279 = por %p277, %p278
      %p280 = scmp.ne.s32.totalorder %s271, %s272
      %p281 = scmp.eq.s32.totalorder %s30, 0
      %p282 = por %p280, %p281
      %p283 = scmp.ne.s32.totalorder %s271, %s272
      %p284 = scmp.eq.s32.totalorder %s31, 1
      %p285 = por %p283, %p284
      %p287 = scmp.ne.s32.totalorder %s272, %s286
      %p288 = scmp.eq.s32.totalorder %s31, 0
      %p289 = por %p287, %p288
      %s291 = sadd.s32 %s290, 1
      %p294 = scmp.eq.s32.totalorder %s25, 1
      %p295 = scmp.ne.s32.totalorder %s290, %s292
      %p296 = scmp.eq.s32.totalorder %s25, 0
      %p297 = por %p295, %p296
      %p298 = scmp.ne.s32.totalorder %s290, %s292
      %p299 = scmp.eq.s32.totalorder %s30, 1
      %p300 = por %p298, %p299
      %p301 = scmp.ne.s32.totalorder %s292, %s293
      %p302 = scmp.eq.s32.totalorder %s30, 0
      %p303 = por %p301, %p302
      %p304 = scmp.ne.s32.totalorder %s292, %s293
      %p305 = scmp.eq.s32.totalorder %s31, 1
      %p306 = por %p304, %p305
      %p308 = scmp.ne.s32.totalorder %s293, %s307
      %p309 = scmp.eq.s32.totalorder %s31, 0
      %p310 = por %p308, %p309
      %s311 = ssub.s32 %s25, %s32
      %p312 = scmp.eq.s32.totalorder %s311, 0
      %s314 = sadd.s32 %s313, 1
      %s315 = scalar_select %p312, %s313, %s314
      %p318 = pneg %p312
      %p319 = scmp.eq.s32.totalorder %s25, 1
      %p320 = por %p318, %p319
      %p321 = scmp.ne.s32.totalorder %s313, %s316
      %p322 = scmp.eq.s32.totalorder %s25, 0
      %p323 = por %p321, %p322
      %p324 = scmp.ne.s32.totalorder %s313, %s316
      %p325 = scmp.eq.s32.totalorder %s30, 1
      %p326 = por %p324, %p325
      %p327 = scmp.ne.s32.totalorder %s316, %s317
      %p328 = scmp.eq.s32.totalorder %s30, 0
      %p329 = por %p327, %p328
      %p330 = scmp.ne.s32.totalorder %s316, %s317
      %p331 = scmp.eq.s32.totalorder %s31, 1
      %p332 = por %p330, %p331
      %p334 = scmp.ne.s32.totalorder %s317, %s333
      %p335 = scmp.eq.s32.totalorder %s31, 0
      %p336 = por %p334, %p335
      %p337 = scmp.le.s32.totalorder 1, %s25
      %p338 = scmp.lt.s32.totalorder %s25, 3
      %p339 = pnand %p337, %p338
      %p340 = pneg %p339
      // Predicated region
      $region9: #{decoder_forward.1} parent=5 // pred_check
        _
      $region10: #{decoder_forward.1} parent=5 // pred_check_branch
        %342 = sbr.rel (%p339) target = $region12
      $region11: #{decoder_forward.1} parent=5 // pred_region
        %s343 = ssub.s32 %s25, 1
        // Predicated region
        $region13: #{decoder_forward.1} parent=11 // pred_check
          %p344 = pneg %p72
        $region14: #{decoder_forward.1} parent=11 // pred_check_branch
          %346 = sbr.rel (%p344) target = $region16
        $region15: #{decoder_forward.1} parent=11 // pred_region
          _
        $region16: #{decoder_forward.1} parent=11 // pred_fallthru
          _
        // Predicated region
        $region17: #{decoder_forward.1} parent=11 // pred_check
          %p347 = pneg %p93
        $region18: #{decoder_forward.1} parent=11 // pred_check_branch
          %349 = sbr.rel (%p347) target = $region20
        $region19: #{decoder_forward.1} parent=11 // pred_region
          _
        $region20: #{decoder_forward.1} parent=11 // pred_fallthru
          _
        // Predicated region
        $region21: #{decoder_forward.1} parent=11 // pred_check
          %p350 = pneg %p114
        $region22: #{decoder_forward.1} parent=11 // pred_check_branch
          %352 = sbr.rel (%p350) target = $region24
        $region23: #{decoder_forward.1} parent=11 // pred_region
          %s354 = ssub.s32 24576, 24576
          %355 = vsyncadd [#allocation4], %s354
          %s356 = sshll.u32 [#allocation3], 4
          %s357 = int_to_ptr.vmem [resolvable:$true] %s356
          %362 = dma.hbm_to_vmem [thread:$0]  %s3, 24576, %s357, [#allocation4], 384, 384, 24
        $region24: #{decoder_forward.1} parent=11 // pred_fallthru
          _
        // Predicated region
        $region25: #{decoder_forward.1} parent=11 // pred_check
          %p363 = pneg %p135
        $region26: #{decoder_forward.1} parent=11 // pred_check_branch
          %365 = sbr.rel (%p363) target = $region28
        $region27: #{decoder_forward.1} parent=11 // pred_region
          %s367 = ssub.s32 8192, 8192
          %368 = vsyncadd [#allocation7], %s367
          %s369 = sshll.u32 [#allocation6], 4
          %s370 = int_to_ptr.vmem [resolvable:$true] %s369
          %375 = dma.hbm_to_vmem [thread:$0]  %s4, 8192, %s370, [#allocation7], 128, 128, 8
        $region28: #{decoder_forward.1} parent=11 // pred_fallthru
          _
        // Predicated region
        $region29: #{decoder_forward.1} parent=11 // pred_check
          %p376 = pneg %p156
        $region30: #{decoder_forward.1} parent=11 // pred_check_branch
          %378 = sbr.rel (%p376) target = $region32
        $region31: #{decoder_forward.1} parent=11 // pred_region
          %s380 = ssub.s32 32768, 32768
          %381 = vsyncadd [#allocation7], %s380
          %s382 = sshll.u32 [#allocation8], 4
          %s383 = int_to_ptr.vmem [resolvable:$true] %s382
          %388 = dma.hbm_to_vmem [thread:$0]  %s5, 32768, %s383, [#allocation7], 512, 512, 32
        $region32: #{decoder_forward.1} parent=11 // pred_fallthru
          _
        // Predicated region
        $region33: #{decoder_forward.1} parent=11 // pred_check
          %p389 = pneg %p177
        $region34: #{decoder_forward.1} parent=11 // pred_check_branch
          %391 = sbr.rel (%p389) target = $region36
        $region35: #{decoder_forward.1} parent=11 // pred_region
          %s393 = ssub.s32 16384, 16384
          %394 = vsyncadd [#allocation10], %s393
          %s395 = sshll.u32 [#allocation9], 4
          %s396 = int_to_ptr.vmem [resolvable:$true] %s395
          %401 = dma.hbm_to_vmem [thread:$0]  %s6, 16384, %s396, [#allocation10], 128, 128, 8
        $region36: #{decoder_forward.1} parent=11 // pred_fallthru
          _
        // Predicated region
        $region37: #{decoder_forward.1} parent=11 // pred_check
          %p402 = pneg %p198
        $region38: #{decoder_forward.1} parent=11 // pred_check_branch
          %404 = sbr.rel (%p402) target = $region40
        $region39: #{decoder_forward.1} parent=11 // pred_region
          _
        $region40: #{decoder_forward.1} parent=11 // pred_fallthru
          _
        // Predicated region
        $region41: #{decoder_forward.1} parent=11 // pred_check
          %p405 = pneg %p219
        $region42: #{decoder_forward.1} parent=11 // pred_check_branch
          %407 = sbr.rel (%p405) target = $region44
        $region43: #{decoder_forward.1} parent=11 // pred_region
          _
        $region44: #{decoder_forward.1} parent=11 // pred_fallthru
          _
        // Predicated region
        $region45: #{decoder_forward.1} parent=11 // pred_check
          %p408 = pneg %p240
        $region46: #{decoder_forward.1} parent=11 // pred_check_branch
          %410 = sbr.rel (%p408) target = $region48
        $region47: #{decoder_forward.1} parent=11 // pred_region
          _
        $region48: #{decoder_forward.1} parent=11 // pred_fallthru
          _
        // Predicated region
        $region49: #{decoder_forward.1} parent=11 // pred_check
          %p411 = pneg %p261
        $region50: #{decoder_forward.1} parent=11 // pred_check_branch
          %413 = sbr.rel (%p411) target = $region52
        $region51: #{decoder_forward.1} parent=11 // pred_region
          _
        $region52: #{decoder_forward.1} parent=11 // pred_fallthru
          _
        // Predicated region
        $region53: #{decoder_forward.1} parent=11 // pred_check
          %p414 = pneg %p282
        $region54: #{decoder_forward.1} parent=11 // pred_check_branch
          %416 = sbr.rel (%p414) target = $region56
        $region55: #{decoder_forward.1} parent=11 // pred_region
          _
        $region56: #{decoder_forward.1} parent=11 // pred_fallthru
          _
        // Predicated region
        $region57: #{decoder_forward.1} parent=11 // pred_check
          %p417 = pneg %p303
        $region58: #{decoder_forward.1} parent=11 // pred_check_branch
          %419 = sbr.rel (%p417) target = $region60
        $region59: #{decoder_forward.1} parent=11 // pred_region
          _
        $region60: #{decoder_forward.1} parent=11 // pred_fallthru
          _
      $region12: #{decoder_forward.1} parent=5 // pred_fallthru
        _
      %p420 = scmp.lt.s32.totalorder %s25, 2
      // Predicated region
      $region61: #{decoder_forward.1} parent=5 // pred_check
        %p421 = pneg %p420
      $region62: #{decoder_forward.1} parent=5 // pred_check_branch
        %423 = sbr.rel (%p421) target = $region64
      $region63: #{decoder_forward.1} parent=5 // pred_region
        // Predicated region
        $region65: #{decoder_forward.1} parent=63 // pred_check
          %p424 = pneg %p45
        $region66: #{decoder_forward.1} parent=63 // pred_check_branch
          %426 = sbr.rel (%p424) target = $region68
        $region67: #{decoder_forward.1} parent=63 // pred_region
          %p427 = scmp.lt.s32.totalorder %s25, 1
          %s428 = scalar_select %p427, %s25, 1
          %s429 = smul.addr %s428, 2
          %s430 = smul.addr %s429, 4
          %s431 = scalar_lea.vmem %s0, %s430
        $region68: #{decoder_forward.1} parent=63 // pred_fallthru
          _
      $region64: #{decoder_forward.1} parent=5 // pred_fallthru
        _
      %p432 = scmp.le.s32.totalorder 1, %s25
      %p433 = scmp.lt.s32.totalorder %s25, 3
      %p434 = pnand %p432, %p433
      %p435 = pneg %p434
      // Predicated region
      $region69: #{decoder_forward.1} parent=5 // pred_check
        _
      $region70: #{decoder_forward.1} parent=5 // pred_check_branch
        %437 = sbr.rel (%p434) target = $region72
      $region71: #{decoder_forward.1} parent=5 // pred_region
        %s438 = ssub.s32 %s25, 1
        // Predicated region
        $region73: #{decoder_forward.1} parent=71 // pred_check
          %p439 = pneg %p114
        $region74: #{decoder_forward.1} parent=71 // pred_check_branch
          %441 = sbr.rel (%p439) target = $region76
        $region75: #{decoder_forward.1} parent=71 // pred_region
          %442 = dma.done [#allocation4], 24576
        $region76: #{decoder_forward.1} parent=71 // pred_fallthru
          _
        // Predicated region
        $region77: #{decoder_forward.1} parent=71 // pred_check
          %p443 = pneg %p135
        $region78: #{decoder_forward.1} parent=71 // pred_check_branch
          %445 = sbr.rel (%p443) target = $region80
        $region79: #{decoder_forward.1} parent=71 // pred_region
          %446 = dma.done [#allocation7], 8192
        $region80: #{decoder_forward.1} parent=71 // pred_fallthru
          _
        // Predicated region
        $region81: #{decoder_forward.1} parent=71 // pred_check
          %p447 = pneg %p156
        $region82: #{decoder_forward.1} parent=71 // pred_check_branch
          %449 = sbr.rel (%p447) target = $region84
        $region83: #{decoder_forward.1} parent=71 // pred_region
          %450 = dma.done [#allocation7], 32768
        $region84: #{decoder_forward.1} parent=71 // pred_fallthru
          _
        // Predicated region
        $region85: #{decoder_forward.1} parent=71 // pred_check
          %p451 = pneg %p177
        $region86: #{decoder_forward.1} parent=71 // pred_check_branch
          %453 = sbr.rel (%p451) target = $region88
        $region87: #{decoder_forward.1} parent=71 // pred_region
          %454 = dma.done [#allocation10], 16384
        $region88: #{decoder_forward.1} parent=71 // pred_fallthru
          _
        %p455 = scmp.lt.s32.totalorder %s30, 1
        %s456 = scalar_select %p455, %s30, 1
        %s457 = smul.addr %s456, 2
        %s458 = smul.addr %s457, 4
        %s459 = scalar_lea.vmem %s0, %s458
        %p460 = pneg %p51
        %p461 = pneg %p48
        %p462 = pneg %p72
        %p463 = pneg %p69
        %p464 = pneg %p93
        %p465 = pneg %p90
        %p466 = pneg %p114
        %p467 = pneg %p111
        %p468 = pneg %p135
        %p469 = pneg %p132
        %p470 = pneg %p156
        %p471 = pneg %p153
        %p472 = pneg %p177
        %p473 = pneg %p174
        %p474 = pneg %p198
        %p475 = pneg %p195
        %p476 = pneg %p219
        %p477 = pneg %p216
        %p478 = pneg %p240
        %p479 = pneg %p237
        %p480 = pneg %p261
        %p481 = pneg %p258
        %p482 = pneg %p282
        %p483 = pneg %p279
        %p484 = pneg %p303
        %p485 = pneg %p300
        %p486 = pneg %p329
        %p487 = pneg %p326
        %s488 = sand.u32 %s316, 1
        %s489 = scalar_lea.sflag [#allocation5], %s488
        %s490 = sand.u32 %s316, 1
        %s491 = smul.addr %s490, 16
        %s492 = scalar_lea.vmem [#allocation11], %s491
        %p493 = scmp.lt.s32.totalorder %s30, 1
        %s494 = scalar_select %p493, %s30, 1
        %s495 = smul.addr %s494, 2
        %s496 = smul.addr %s495, 4
        %s497 = scalar_lea.vmem %s0, %s496
        %v499 = vld [vmem:[%s497] sm:$0xff]
        %v500 = vunpack.c.l.bf16 %v499
        %v501 = vunpack.c.h.bf16 %v499
        %v502 = vld [vmem:[%s9] sm:$0xff]
        %v503 = vld [vmem:[%s10] sm:$0xff]
        %v504 = vld [vmem:[%s11] sm:$0xff]
        %v505 = vld [vmem:[%s12] sm:$0xff]
        %v506 = vlaneseq
        %v507 = vshrl.u32 %v506, 7
        %v508 = vlaneseq
        %v509 = vand.u32 %v508, 127
        %vm510 = vcmp.le.s32.totalorder %v509, %v507
        %v511 = vld [vmem:[%s1] sm:$0x3]
        %v512 = vmul.f32 %v500, %v500
        %v513 = vmul.f32 %v501, %v501
        %v514 = vadd.f32 %v512, %v513
        %515 = vadd.xlane.f32.xlu0 %v514
        %v516 = vpop.xlane.xlu0 %515
        %v517 = vrcp.pop 256.0
        %v518 = vmul.f32 %v516, %v517
        %v519 = vadd.f32 %v518, 1e-06
        %v520 = vrsqrt.pop %v519
        %v521 = vmul.f32 %v500, %v520
        %v522 = vmul.f32 %v501, %v520
        %v524 = vlaneseq
        %v525 = vshrl.u32 %v524, 7
        %v526 = vsub.s32 0, %v525
        %v527 = vrot.slane %v511, %v526
        %v528 = vlaneseq
        %v529 = vshrl.u32 %v528, 7
        %v530 = vsub.s32 1, %v529
        %v531 = vrot.slane %v511, %v530
        %v534 = vmul.f32 %v521, %v527
        %v535 = vmul.f32 %v522, %v531
        %v536 = vpack.c.bf16 %v534, %v534
        %v537 = vpack.c.bf16 %v535, %v535
        %v538 = vld [vmem:[#allocation3] sm:$0xff]
        %v539 = vld [vmem:[#allocation3 + $0x8] sm:$0xff]
        %v540 = vld [vmem:[#allocation3 + $0x10] sm:$0xff]
        %v541 = vld [vmem:[#allocation3 + $0x18] sm:$0xff]
        %v542 = vld [vmem:[#allocation3 + $0x20] sm:$0xff]
        %v543 = vld [vmem:[#allocation3 + $0x28] sm:$0xff]
        %v544 = vld [vmem:[#allocation3 + $0x30] sm:$0xff]
        %v545 = vld [vmem:[#allocation3 + $0x38] sm:$0xff]
        %v546 = vld [vmem:[#allocation3 + $0x40] sm:$0xff]
        %v547 = vld [vmem:[#allocation3 + $0x48] sm:$0xff]
        %v548 = vld [vmem:[#allocation3 + $0x50] sm:$0xff]
        %v549 = vld [vmem:[#allocation3 + $0x58] sm:$0xff]
        %v550 = vld [vmem:[#allocation3 + $0x60] sm:$0xff]
        %v551 = vld [vmem:[#allocation3 + $0x68] sm:$0xff]
        %v552 = vld [vmem:[#allocation3 + $0x70] sm:$0xff]
        %v553 = vld [vmem:[#allocation3 + $0x78] sm:$0xff]
        %v554 = vld [vmem:[#allocation3 + $0x80] sm:$0xff]
        %v555 = vld [vmem:[#allocation3 + $0x88] sm:$0xff]
        %v556 = vld [vmem:[#allocation3 + $0x90] sm:$0xff]
        %v557 = vld [vmem:[#allocation3 + $0x98] sm:$0xff]
        %v558 = vld [vmem:[#allocation3 + $0xa0] sm:$0xff]
        %v559 = vld [vmem:[#allocation3 + $0xa8] sm:$0xff]
        %v560 = vld [vmem:[#allocation3 + $0xb0] sm:$0xff]
        %v561 = vld [vmem:[#allocation3 + $0xb8] sm:$0xff]
        %v562 = vld [vmem:[#allocation3 + $0xc0] sm:$0xff]
        %v563 = vld [vmem:[#allocation3 + $0xc8] sm:$0xff]
        %v564 = vld [vmem:[#allocation3 + $0xd0] sm:$0xff]
        %v565 = vld [vmem:[#allocation3 + $0xd8] sm:$0xff]
        %v566 = vld [vmem:[#allocation3 + $0xe0] sm:$0xff]
        %v567 = vld [vmem:[#allocation3 + $0xe8] sm:$0xff]
        %v568 = vld [vmem:[#allocation3 + $0xf0] sm:$0xff]
        %v569 = vld [vmem:[#allocation3 + $0xf8] sm:$0xff]
        %v570 = vld [vmem:[#allocation3 + $0x100] sm:$0xff]
        %v571 = vld [vmem:[#allocation3 + $0x108] sm:$0xff]
        %v572 = vld [vmem:[#allocation3 + $0x110] sm:$0xff]
        %v573 = vld [vmem:[#allocation3 + $0x118] sm:$0xff]
        %v574 = vld [vmem:[#allocation3 + $0x120] sm:$0xff]
        %v575 = vld [vmem:[#allocation3 + $0x128] sm:$0xff]
        %v576 = vld [vmem:[#allocation3 + $0x130] sm:$0xff]
        %v577 = vld [vmem:[#allocation3 + $0x138] sm:$0xff]
        %v578 = vld [vmem:[#allocation3 + $0x140] sm:$0xff]
        %v579 = vld [vmem:[#allocation3 + $0x148] sm:$0xff]
        %v580 = vld [vmem:[#allocation3 + $0x150] sm:$0xff]
        %v581 = vld [vmem:[#allocation3 + $0x158] sm:$0xff]
        %v582 = vld [vmem:[#allocation3 + $0x160] sm:$0xff]
        %v583 = vld [vmem:[#allocation3 + $0x168] sm:$0xff]
        %v584 = vld [vmem:[#allocation3 + $0x170] sm:$0xff]
        %v585 = vld [vmem:[#allocation3 + $0x178] sm:$0xff]
        %v586 = vld [vmem:[#allocation3 + $0x180] sm:$0xff]
        %v587 = vld [vmem:[#allocation3 + $0x188] sm:$0xff]
        %v588 = vld [vmem:[#allocation3 + $0x190] sm:$0xff]
        %v589 = vld [vmem:[#allocation3 + $0x198] sm:$0xff]
        %v590 = vld [vmem:[#allocation3 + $0x1a0] sm:$0xff]
        %v591 = vld [vmem:[#allocation3 + $0x1a8] sm:$0xff]
        %v592 = vld [vmem:[#allocation3 + $0x1b0] sm:$0xff]
        %v593 = vld [vmem:[#allocation3 + $0x1b8] sm:$0xff]
        %v594 = vld [vmem:[#allocation3 + $0x1c0] sm:$0xff]
        %v595 = vld [vmem:[#allocation3 + $0x1c8] sm:$0xff]
        %v596 = vld [vmem:[#allocation3 + $0x1d0] sm:$0xff]
        %v597 = vld [vmem:[#allocation3 + $0x1d8] sm:$0xff]
        %v598 = vld [vmem:[#allocation3 + $0x1e0] sm:$0xff]
        %v599 = vld [vmem:[#allocation3 + $0x1e8] sm:$0xff]
        %v600 = vld [vmem:[#allocation3 + $0x1f0] sm:$0xff]
        %v601 = vld [vmem:[#allocation3 + $0x1f8] sm:$0xff]
        %v602 = vld [vmem:[#allocation3 + $0x200] sm:$0xff]
        %v603 = vld [vmem:[#allocation3 + $0x208] sm:$0xff]
        %v604 = vld [vmem:[#allocation3 + $0x210] sm:$0xff]
        %v605 = vld [vmem:[#allocation3 + $0x218] sm:$0xff]
        %v606 = vld [vmem:[#allocation3 + $0x220] sm:$0xff]
        %v607 = vld [vmem:[#allocation3 + $0x228] sm:$0xff]
        %v608 = vld [vmem:[#allocation3 + $0x230] sm:$0xff]
        %v609 = vld [vmem:[#allocation3 + $0x238] sm:$0xff]
        %v610 = vld [vmem:[#allocation3 + $0x240] sm:$0xff]
        %v611 = vld [vmem:[#allocation3 + $0x248] sm:$0xff]
        %v612 = vld [vmem:[#allocation3 + $0x250] sm:$0xff]
        %v613 = vld [vmem:[#allocation3 + $0x258] sm:$0xff]
        %v614 = vld [vmem:[#allocation3 + $0x260] sm:$0xff]
        %v615 = vld [vmem:[#allocation3 + $0x268] sm:$0xff]
        %v616 = vld [vmem:[#allocation3 + $0x270] sm:$0xff]
        %v617 = vld [vmem:[#allocation3 + $0x278] sm:$0xff]
        %v618 = vld [vmem:[#allocation3 + $0x280] sm:$0xff]
        %v619 = vld [vmem:[#allocation3 + $0x288] sm:$0xff]
        %v620 = vld [vmem:[#allocation3 + $0x290] sm:$0xff]
        %v621 = vld [vmem:[#allocation3 + $0x298] sm:$0xff]
        %v622 = vld [vmem:[#allocation3 + $0x2a0] sm:$0xff]
        %v623 = vld [vmem:[#allocation3 + $0x2a8] sm:$0xff]
        %v624 = vld [vmem:[#allocation3 + $0x2b0] sm:$0xff]
        %v625 = vld [vmem:[#allocation3 + $0x2b8] sm:$0xff]
        %v626 = vld [vmem:[#allocation3 + $0x2c0] sm:$0xff]
        %v627 = vld [vmem:[#allocation3 + $0x2c8] sm:$0xff]
        %v628 = vld [vmem:[#allocation3 + $0x2d0] sm:$0xff]
        %v629 = vld [vmem:[#allocation3 + $0x2d8] sm:$0xff]
        %v630 = vld [vmem:[#allocation3 + $0x2e0] sm:$0xff]
        %v631 = vld [vmem:[#allocation3 + $0x2e8] sm:$0xff]
        %v632 = vld [vmem:[#allocation3 + $0x2f0] sm:$0xff]
        %v633 = vld [vmem:[#allocation3 + $0x2f8] sm:$0xff]
        %v730 = vunpack.c.l.b16 %v538
        %v731 = vunpack.c.h.b16 %v538
        %v732 = vunpack.c.l.b16 %v539
        %v733 = vunpack.c.h.b16 %v539
        %v734 = vunpack.c.l.b16 %v540
        %v735 = vunpack.c.h.b16 %v540
        %v736 = vunpack.c.l.b16 %v541
        %v737 = vunpack.c.h.b16 %v541
        %v738 = vunpack.c.l.b16 %v542
        %v739 = vunpack.c.h.b16 %v542
        %v740 = vunpack.c.l.b16 %v543
        %v741 = vunpack.c.h.b16 %v543
        %v742 = vunpack.c.l.b16 %v544
        %v743 = vunpack.c.h.b16 %v544
        %v744 = vunpack.c.l.b16 %v545
        %v745 = vunpack.c.h.b16 %v545
        %v746 = vunpack.c.l.b16 %v546
        %v747 = vunpack.c.h.b16 %v546
        %v748 = vunpack.c.l.b16 %v547
        %v749 = vunpack.c.h.b16 %v547
        %v750 = vunpack.c.l.b16 %v548
        %v751 = vunpack.c.h.b16 %v548
        %v752 = vunpack.c.l.b16 %v549
        %v753 = vunpack.c.h.b16 %v549
        %v754 = vunpack.c.l.b16 %v550
        %v755 = vunpack.c.h.b16 %v550
        %v756 = vunpack.c.l.b16 %v551
        %v757 = vunpack.c.h.b16 %v551
        %v758 = vunpack.c.l.b16 %v552
        %v759 = vunpack.c.h.b16 %v552
        %v760 = vunpack.c.l.b16 %v553
        %v761 = vunpack.c.h.b16 %v553
        %v762 = vunpack.c.l.b16 %v554
        %v763 = vunpack.c.h.b16 %v554
        %v764 = vunpack.c.l.b16 %v555
        %v765 = vunpack.c.h.b16 %v555
        %v766 = vunpack.c.l.b16 %v556
        %v767 = vunpack.c.h.b16 %v556
        %v768 = vunpack.c.l.b16 %v557
        %v769 = vunpack.c.h.b16 %v557
        %v770 = vunpack.c.l.b16 %v558
        %v771 = vunpack.c.h.b16 %v558
        %v772 = vunpack.c.l.b16 %v559
        %v773 = vunpack.c.h.b16 %v559
        %v774 = vunpack.c.l.b16 %v560
        %v775 = vunpack.c.h.b16 %v560
        %v776 = vunpack.c.l.b16 %v561
        %v777 = vunpack.c.h.b16 %v561
        %v778 = vunpack.c.l.b16 %v562
        %v779 = vunpack.c.h.b16 %v562
        %v780 = vunpack.c.l.b16 %v563
        %v781 = vunpack.c.h.b16 %v563
        %v782 = vunpack.c.l.b16 %v564
        %v783 = vunpack.c.h.b16 %v564
        %v784 = vunpack.c.l.b16 %v565
        %v785 = vunpack.c.h.b16 %v565
        %v786 = vunpack.c.l.b16 %v566
        %v787 = vunpack.c.h.b16 %v566
        %v788 = vunpack.c.l.b16 %v567
        %v789 = vunpack.c.h.b16 %v567
        %v790 = vunpack.c.l.b16 %v568
        %v791 = vunpack.c.h.b16 %v568
        %v792 = vunpack.c.l.b16 %v569
        %v793 = vunpack.c.h.b16 %v569
        %v794 = vunpack.c.l.b16 %v570
        %v795 = vunpack.c.h.b16 %v570
        %v796 = vunpack.c.l.b16 %v571
        %v797 = vunpack.c.h.b16 %v571
        %v798 = vunpack.c.l.b16 %v572
        %v799 = vunpack.c.h.b16 %v572
        %v800 = vunpack.c.l.b16 %v573
        %v801 = vunpack.c.h.b16 %v573
        %v802 = vunpack.c.l.b16 %v574
        %v803 = vunpack.c.h.b16 %v574
        %v804 = vunpack.c.l.b16 %v575
        %v805 = vunpack.c.h.b16 %v575
        %v806 = vunpack.c.l.b16 %v576
        %v807 = vunpack.c.h.b16 %v576
        %v808 = vunpack.c.l.b16 %v577
        %v809 = vunpack.c.h.b16 %v577
        %v810 = vunpack.c.l.b16 %v578
        %v811 = vunpack.c.h.b16 %v578
        %v812 = vunpack.c.l.b16 %v579
        %v813 = vunpack.c.h.b16 %v579
        %v814 = vunpack.c.l.b16 %v580
        %v815 = vunpack.c.h.b16 %v580
        %v816 = vunpack.c.l.b16 %v581
        %v817 = vunpack.c.h.b16 %v581
        %v818 = vunpack.c.l.b16 %v582
        %v819 = vunpack.c.h.b16 %v582
        %v820 = vunpack.c.l.b16 %v583
        %v821 = vunpack.c.h.b16 %v583
        %v822 = vunpack.c.l.b16 %v584
        %v823 = vunpack.c.h.b16 %v584
        %v824 = vunpack.c.l.b16 %v585
        %v825 = vunpack.c.h.b16 %v585
        %v826 = vunpack.c.l.b16 %v586
        %v827 = vunpack.c.h.b16 %v586
        %v828 = vunpack.c.l.b16 %v587
        %v829 = vunpack.c.h.b16 %v587
        %v830 = vunpack.c.l.b16 %v588
        %v831 = vunpack.c.h.b16 %v588
        %v832 = vunpack.c.l.b16 %v589
        %v833 = vunpack.c.h.b16 %v589
        %v834 = vunpack.c.l.b16 %v590
        %v835 = vunpack.c.h.b16 %v590
        %v836 = vunpack.c.l.b16 %v591
        %v837 = vunpack.c.h.b16 %v591
        %v838 = vunpack.c.l.b16 %v592
        %v839 = vunpack.c.h.b16 %v592
        %v840 = vunpack.c.l.b16 %v593
        %v841 = vunpack.c.h.b16 %v593
        %v842 = vunpack.c.l.b16 %v594
        %v843 = vunpack.c.h.b16 %v594
        %v844 = vunpack.c.l.b16 %v595
        %v845 = vunpack.c.h.b16 %v595
        %v846 = vunpack.c.l.b16 %v596
        %v847 = vunpack.c.h.b16 %v596
        %v848 = vunpack.c.l.b16 %v597
        %v849 = vunpack.c.h.b16 %v597
        %v850 = vunpack.c.l.b16 %v598
        %v851 = vunpack.c.h.b16 %v598
        %v852 = vunpack.c.l.b16 %v599
        %v853 = vunpack.c.h.b16 %v599
        %v854 = vunpack.c.l.b16 %v600
        %v855 = vunpack.c.h.b16 %v600
        %v856 = vunpack.c.l.b16 %v601
        %v857 = vunpack.c.h.b16 %v601
        %v858 = vunpack.c.l.b16 %v602
        %v859 = vunpack.c.h.b16 %v602
        %v860 = vunpack.c.l.b16 %v603
        %v861 = vunpack.c.h.b16 %v603
        %v862 = vunpack.c.l.b16 %v604
        %v863 = vunpack.c.h.b16 %v604
        %v864 = vunpack.c.l.b16 %v605
        %v865 = vunpack.c.h.b16 %v605
        %v866 = vunpack.c.l.b16 %v606
        %v867 = vunpack.c.h.b16 %v606
        %v868 = vunpack.c.l.b16 %v607
        %v869 = vunpack.c.h.b16 %v607
        %v870 = vunpack.c.l.b16 %v608
        %v871 = vunpack.c.h.b16 %v608
        %v872 = vunpack.c.l.b16 %v609
        %v873 = vunpack.c.h.b16 %v609
        %v874 = vunpack.c.l.b16 %v610
        %v875 = vunpack.c.h.b16 %v610
        %v876 = vunpack.c.l.b16 %v611
        %v877 = vunpack.c.h.b16 %v611
        %v878 = vunpack.c.l.b16 %v612
        %v879 = vunpack.c.h.b16 %v612
        %v880 = vunpack.c.l.b16 %v613
        %v881 = vunpack.c.h.b16 %v613
        %v882 = vunpack.c.l.b16 %v614
        %v883 = vunpack.c.h.b16 %v614
        %v884 = vunpack.c.l.b16 %v615
        %v885 = vunpack.c.h.b16 %v615
        %v886 = vunpack.c.l.b16 %v616
        %v887 = vunpack.c.h.b16 %v616
        %v888 = vunpack.c.l.b16 %v617
        %v889 = vunpack.c.h.b16 %v617
        %v890 = vunpack.c.l.b16 %v618
        %v891 = vunpack.c.h.b16 %v618
        %v892 = vunpack.c.l.b16 %v619
        %v893 = vunpack.c.h.b16 %v619
        %v894 = vunpack.c.l.b16 %v620
        %v895 = vunpack.c.h.b16 %v620
        %v896 = vunpack.c.l.b16 %v621
        %v897 = vunpack.c.h.b16 %v621
        %v898 = vunpack.c.l.b16 %v622
        %v899 = vunpack.c.h.b16 %v622
        %v900 = vunpack.c.l.b16 %v623
        %v901 = vunpack.c.h.b16 %v623
        %v902 = vunpack.c.l.b16 %v624
        %v903 = vunpack.c.h.b16 %v624
        %v904 = vunpack.c.l.b16 %v625
        %v905 = vunpack.c.h.b16 %v625
        %v906 = vunpack.c.l.b16 %v626
        %v907 = vunpack.c.h.b16 %v626
        %v908 = vunpack.c.l.b16 %v627
        %v909 = vunpack.c.h.b16 %v627
        %v910 = vunpack.c.l.b16 %v628
        %v911 = vunpack.c.h.b16 %v628
        %v912 = vunpack.c.l.b16 %v629
        %v913 = vunpack.c.h.b16 %v629
        %v914 = vunpack.c.l.b16 %v630
        %v915 = vunpack.c.h.b16 %v630
        %v916 = vunpack.c.l.b16 %v631
        %v917 = vunpack.c.h.b16 %v631
        %v918 = vunpack.c.l.b16 %v632
        %v919 = vunpack.c.h.b16 %v632
        %v920 = vunpack.c.l.b16 %v633
        %v921 = vunpack.c.h.b16 %v633
        %v922 = vpack.c.b16 %v736, %v730
        %v923 = vpack.c.b16 %v737, %v731
        %v924 = vpack.c.b16 %v738, %v732
        %v925 = vpack.c.b16 %v739, %v733
        %v926 = vpack.c.b16 %v740, %v734
        %v927 = vpack.c.b16 %v741, %v735
        %v928 = vpack.c.b16 %v748, %v742
        %v929 = vpack.c.b16 %v749, %v743
        %v930 = vpack.c.b16 %v750, %v744
        %v931 = vpack.c.b16 %v751, %v745
        %v932 = vpack.c.b16 %v752, %v746
        %v933 = vpack.c.b16 %v753, %v747
        %v934 = vpack.c.b16 %v760, %v754
        %v935 = vpack.c.b16 %v761, %v755
        %v936 = vpack.c.b16 %v762, %v756
        %v937 = vpack.c.b16 %v763, %v757
        %v938 = vpack.c.b16 %v764, %v758
        %v939 = vpack.c.b16 %v765, %v759
        %v940 = vpack.c.b16 %v772, %v766
        %v941 = vpack.c.b16 %v773, %v767
        %v942 = vpack.c.b16 %v774, %v768
        %v943 = vpack.c.b16 %v775, %v769
        %v944 = vpack.c.b16 %v776, %v770
        %v945 = vpack.c.b16 %v777, %v771
        %v946 = vpack.c.b16 %v784, %v778
        %v947 = vpack.c.b16 %v785, %v779
        %v948 = vpack.c.b16 %v786, %v780
        %v949 = vpack.c.b16 %v787, %v781
        %v950 = vpack.c.b16 %v788, %v782
        %v951 = vpack.c.b16 %v789, %v783
        %v952 = vpack.c.b16 %v796, %v790
        %v953 = vpack.c.b16 %v797, %v791
        %v954 = vpack.c.b16 %v798, %v792
        %v955 = vpack.c.b16 %v799, %v793
        %v956 = vpack.c.b16 %v800, %v794
        %v957 = vpack.c.b16 %v801, %v795
        %v958 = vpack.c.b16 %v808, %v802
        %v959 = vpack.c.b16 %v809, %v803
        %v960 = vpack.c.b16 %v810, %v804
        %v961 = vpack.c.b16 %v811, %v805
        %v962 = vpack.c.b16 %v812, %v806
        %v963 = vpack.c.b16 %v813, %v807
        %v964 = vpack.c.b16 %v820, %v814
        %v965 = vpack.c.b16 %v821, %v815
        %v966 = vpack.c.b16 %v822, %v816
        %v967 = vpack.c.b16 %v823, %v817
        %v968 = vpack.c.b16 %v824, %v818
        %v969 = vpack.c.b16 %v825, %v819
        %v970 = vpack.c.b16 %v832, %v826
        %v971 = vpack.c.b16 %v833, %v827
        %v972 = vpack.c.b16 %v834, %v828
        %v973 = vpack.c.b16 %v835, %v829
        %v974 = vpack.c.b16 %v836, %v830
        %v975 = vpack.c.b16 %v837, %v831
        %v976 = vpack.c.b16 %v844, %v838
        %v977 = vpack.c.b16 %v845, %v839
        %v978 = vpack.c.b16 %v846, %v840
        %v979 = vpack.c.b16 %v847, %v841
        %v980 = vpack.c.b16 %v848, %v842
        %v981 = vpack.c.b16 %v849, %v843
        %v982 = vpack.c.b16 %v856, %v850
        %v983 = vpack.c.b16 %v857, %v851
        %v984 = vpack.c.b16 %v858, %v852
        %v985 = vpack.c.b16 %v859, %v853
        %v986 = vpack.c.b16 %v860, %v854
        %v987 = vpack.c.b16 %v861, %v855
        %v988 = vpack.c.b16 %v868, %v862
        %v989 = vpack.c.b16 %v869, %v863
        %v990 = vpack.c.b16 %v870, %v864
        %v991 = vpack.c.b16 %v871, %v865
        %v992 = vpack.c.b16 %v872, %v866
        %v993 = vpack.c.b16 %v873, %v867
        %v994 = vpack.c.b16 %v880, %v874
        %v995 = vpack.c.b16 %v881, %v875
        %v996 = vpack.c.b16 %v882, %v876
        %v997 = vpack.c.b16 %v883, %v877
        %v998 = vpack.c.b16 %v884, %v878
        %v999 = vpack.c.b16 %v885, %v879
        %v1000 = vpack.c.b16 %v892, %v886
        %v1001 = vpack.c.b16 %v893, %v887
        %v1002 = vpack.c.b16 %v894, %v888
        %v1003 = vpack.c.b16 %v895, %v889
        %v1004 = vpack.c.b16 %v896, %v890
        %v1005 = vpack.c.b16 %v897, %v891
        %v1006 = vpack.c.b16 %v904, %v898
        %v1007 = vpack.c.b16 %v905, %v899
        %v1008 = vpack.c.b16 %v906, %v900
        %v1009 = vpack.c.b16 %v907, %v901
        %v1010 = vpack.c.b16 %v908, %v902
        %v1011 = vpack.c.b16 %v909, %v903
        %v1012 = vpack.c.b16 %v916, %v910
        %v1013 = vpack.c.b16 %v917, %v911
        %v1014 = vpack.c.b16 %v918, %v912
        %v1015 = vpack.c.b16 %v919, %v913
        %v1016 = vpack.c.b16 %v920, %v914
        %v1017 = vpack.c.b16 %v921, %v915
        %1114 = vmatprep.subr.bf16.mxu0 %v965
        %1115 = vmatpush1.bf16.msra.mxu0 %v964
        %1116 = vmatprep.subr.bf16.mxu0 %v959
        %1117 = vmatpush1.bf16.msra.mxu0 %v958
        %1118 = vmatprep.subr.bf16.mxu0 %v953
        %1119 = vmatpush1.bf16.msra.mxu0 %v952
        %1120 = vmatprep.subr.bf16.mxu0 %v947
        %1121 = vmatpush1.bf16.msra.mxu0 %v946
        %1122 = vmatprep.subr.bf16.mxu0 %v941
        %1123 = vmatpush1.bf16.msra.mxu0 %v940
        %1124 = vmatprep.subr.bf16.mxu0 %v935
        %1125 = vmatpush1.bf16.msra.mxu0 %v934
        %1126 = vmatprep.subr.bf16.mxu0 %v929
        %1127 = vmatpush1.bf16.msra.mxu0 %v928
        %1128 = vmatprep.subr.bf16.mxu0 %v923
        %1129 = vmatpush1.bf16.msra.mxu0 %v922
        %1130 = vmatprep.subr.bf16.mxu0 %v1013
        %1131 = vmatpush2.bf16.msra.mxu0 %v1012
        %1132 = vmatprep.subr.bf16.mxu0 %v1007
        %1133 = vmatpush2.bf16.msra.mxu0 %v1006
        %1134 = vmatprep.subr.bf16.mxu0 %v1001
        %1135 = vmatpush2.bf16.msra.mxu0 %v1000
        %1136 = vmatprep.subr.bf16.mxu0 %v995
        %1137 = vmatpush2.bf16.msra.mxu0 %v994
        %1138 = vmatprep.subr.bf16.mxu0 %v989
        %1139 = vmatpush2.bf16.msra.mxu0 %v988
        %1140 = vmatprep.subr.bf16.mxu0 %v983
        %1141 = vmatpush2.bf16.msra.mxu0 %v982
        %1142 = vmatprep.subr.bf16.mxu0 %v977
        %1143 = vmatpush2.bf16.msra.mxu0 %v976
        %1144 = vmatprep.subr.bf16.mxu0 %v971
        %1145 = vmatpush2.bf16.msra.mxu0 %v970
        %1146 = vmatprep.mubr.bf16.mxu0 %v537
        %1147 = vmatmul.mubr.bf16.gmra.mxu0 %v536
        %v1148 = vpop.f32.mrf.mxu0
        %v1149 = vadd.f32 0.0, %v1148
        %v1150 = vpop.f32.mrf.mxu0
        %v1151 = vadd.f32 0.0, %v1150
        %v1152 = vpop.f32.mrf.mxu0
        %v1153 = vpop.f32.mrf.mxu0
        %1154 = vdwg.mxu0
        %1155 = vmatprep.subr.bf16.mxu0 %v967
        %1156 = vmatpush1.bf16.msra.mxu0 %v966
        %1157 = vmatprep.subr.bf16.mxu0 %v961
        %1158 = vmatpush1.bf16.msra.mxu0 %v960
        %1159 = vmatprep.subr.bf16.mxu0 %v955
        %1160 = vmatpush1.bf16.msra.mxu0 %v954
        %1161 = vmatprep.subr.bf16.mxu0 %v949
        %1162 = vmatpush1.bf16.msra.mxu0 %v948
        %1163 = vmatprep.subr.bf16.mxu0 %v943
        %1164 = vmatpush1.bf16.msra.mxu0 %v942
        %1165 = vmatprep.subr.bf16.mxu0 %v937
        %1166 = vmatpush1.bf16.msra.mxu0 %v936
        %1167 = vmatprep.subr.bf16.mxu0 %v931
        %1168 = vmatpush1.bf16.msra.mxu0 %v930
        %1169 = vmatprep.subr.bf16.mxu0 %v925
        %1170 = vmatpush1.bf16.msra.mxu0 %v924
        %1171 = vmatprep.subr.bf16.mxu0 %v1015
        %1172 = vmatpush2.bf16.msra.mxu0 %v1014
        %1173 = vmatprep.subr.bf16.mxu0 %v1009
        %1174 = vmatpush2.bf16.msra.mxu0 %v1008
        %1175 = vmatprep.subr.bf16.mxu0 %v1003
        %1176 = vmatpush2.bf16.msra.mxu0 %v1002
        %1177 = vmatprep.subr.bf16.mxu0 %v997
        %1178 = vmatpush2.bf16.msra.mxu0 %v996
        %1179 = vmatprep.subr.bf16.mxu0 %v991
        %1180 = vmatpush2.bf16.msra.mxu0 %v990
        %1181 = vmatprep.subr.bf16.mxu0 %v985
        %1182 = vmatpush2.bf16.msra.mxu0 %v984
        %1183 = vmatprep.subr.bf16.mxu0 %v979
        %1184 = vmatpush2.bf16.msra.mxu0 %v978
        %1185 = vmatprep.subr.bf16.mxu0 %v973
        %1186 = vmatpush2.bf16.msra.mxu0 %v972
        %1187 = vmatprep.mubr.bf16.mxu0 %v537
        %1188 = vmatmul.mubr.bf16.gmra.mxu0 %v536
        %v1189 = vpop.f32.mrf.mxu0
        %v1190 = vadd.f32 0.0, %v1189
        %v1191 = vpop.f32.mrf.mxu0
        %v1192 = vadd.f32 0.0, %v1191
        %v1193 = vpop.f32.mrf.mxu0
        %v1194 = vpop.f32.mrf.mxu0
        %1195 = vdwg.mxu0
        %1196 = vmatprep.subr.bf16.mxu0 %v969
        %1197 = vmatpush1.bf16.msra.mxu0 %v968
        %1198 = vmatprep.subr.bf16.mxu0 %v963
        %1199 = vmatpush1.bf16.msra.mxu0 %v962
        %1200 = vmatprep.subr.bf16.mxu0 %v957
        %1201 = vmatpush1.bf16.msra.mxu0 %v956
        %1202 = vmatprep.subr.bf16.mxu0 %v951
        %1203 = vmatpush1.bf16.msra.mxu0 %v950
        %1204 = vmatprep.subr.bf16.mxu0 %v945
        %1205 = vmatpush1.bf16.msra.mxu0 %v944
        %1206 = vmatprep.subr.bf16.mxu0 %v939
        %1207 = vmatpush1.bf16.msra.mxu0 %v938
        %1208 = vmatprep.subr.bf16.mxu0 %v933
        %1209 = vmatpush1.bf16.msra.mxu0 %v932
        %1210 = vmatprep.subr.bf16.mxu0 %v927
        %1211 = vmatpush1.bf16.msra.mxu0 %v926
        %1212 = vmatprep.subr.bf16.mxu0 %v1017
        %1213 = vmatpush2.bf16.msra.mxu0 %v1016
        %1214 = vmatprep.subr.bf16.mxu0 %v1011
        %1215 = vmatpush2.bf16.msra.mxu0 %v1010
        %1216 = vmatprep.subr.bf16.mxu0 %v1005
        %1217 = vmatpush2.bf16.msra.mxu0 %v1004
        %1218 = vmatprep.subr.bf16.mxu0 %v999
        %1219 = vmatpush2.bf16.msra.mxu0 %v998
        %1220 = vmatprep.subr.bf16.mxu0 %v993
        %1221 = vmatpush2.bf16.msra.mxu0 %v992
        %1222 = vmatprep.subr.bf16.mxu0 %v987
        %1223 = vmatpush2.bf16.msra.mxu0 %v986
        %1224 = vmatprep.subr.bf16.mxu0 %v981
        %1225 = vmatpush2.bf16.msra.mxu0 %v980
        %1226 = vmatprep.subr.bf16.mxu0 %v975
        %1227 = vmatpush2.bf16.msra.mxu0 %v974
        %1228 = vmatprep.mubr.bf16.mxu0 %v537
        %1229 = vmatmul.mubr.bf16.gmra.mxu0 %v536
        %v1230 = vpop.f32.mrf.mxu0
        %v1231 = vadd.f32 0.0, %v1230
        %v1232 = vpop.f32.mrf.mxu0
        %v1233 = vadd.f32 0.0, %v1232
        %v1234 = vpop.f32.mrf.mxu0
        %v1235 = vpop.f32.mrf.mxu0
        %1236 = vdwg.mxu0
        %v1237 = vmul.f32 %v1149, %v502
        %1238 = vrot.lane.b32.xlu0 %v1149, 64
        %v1239 = vpop.permute.xlu0 %1238
        %v1240 = vmul.f32 %v1239, %v503
        %v1241 = vadd.f32 %v1237, %v1240
        %v1242 = vmul.f32 %v1190, %v504
        %1243 = vrot.lane.b32.xlu0 %v1190, 64
        %v1244 = vpop.permute.xlu0 %1243
        %v1245 = vmul.f32 %v1244, %v505
        %v1246 = vadd.f32 %v1242, %v1245
        %v1247 = vpack.c.bf16 %v1241, %v1241
        %v1248 = vpack.c.bf16 %v1246, %v1246
        %1249 = vmatprep.subr.bf16.mxu0 0
        %1250 = vmatpush1.bf16.xpose.msra.mxu0 0
        %1251 = vmatprep.subr.bf16.mxu0 0
        %1252 = vmatpush1.bf16.xpose.msra.mxu0 0
        %1253 = vmatprep.subr.bf16.mxu0 0
        %1254 = vmatpush1.bf16.xpose.msra.mxu0 0
        %1255 = vmatprep.subr.bf16.mxu0 0
        %1256 = vmatpush1.bf16.xpose.msra.mxu0 0
        %1257 = vmatprep.subr.bf16.mxu0 0
        %1258 = vmatpush1.bf16.xpose.msra.mxu0 0
        %1259 = vmatprep.subr.bf16.mxu0 0
        %1260 = vmatpush1.bf16.xpose.msra.mxu0 0
        %1261 = vmatprep.subr.bf16.mxu0 0
        %1262 = vmatpush1.bf16.xpose.msra.mxu0 0
        %1263 = vmatprep.subr.bf16.mxu0 0
        %1264 = vmatpush1.bf16.xpose.msra.mxu0 %v1248
        %1265 = vmatprep.subr.bf16.mxu0 0
        %1266 = vmatpush2.bf16.xpose.msra.mxu0 0
        %1267 = vmatprep.subr.bf16.mxu0 0
        %1268 = vmatpush2.bf16.xpose.msra.mxu0 0
        %1269 = vmatprep.subr.bf16.mxu0 0
        %1270 = vmatpush2.bf16.xpose.msra.mxu0 0
        %1271 = vmatprep.subr.bf16.mxu0 0
        %1272 = vmatpush2.bf16.xpose.msra.mxu0 0
        %1273 = vmatprep.subr.bf16.mxu0 0
        %1274 = vmatpush2.bf16.xpose.msra.mxu0 0
        %1275 = vmatprep.subr.bf16.mxu0 0
        %1276 = vmatpush2.bf16.xpose.msra.mxu0 0
        %1277 = vmatprep.subr.bf16.mxu0 0
        %1278 = vmatpush2.bf16.xpose.msra.mxu0 0
        %1279 = vmatprep.subr.bf16.mxu0 0
        %1280 = vmatpush2.bf16.xpose.msra.mxu0 0
        %1281 = vmatprep.mubr.bf16.mxu0 0
        %1282 = vmatmul.mubr.bf16.gmra.mxu0 %v1247
        %v1283 = vpop.f32.mrf.mxu0
        %v1284 = vadd.f32 0.0, %v1283
        %v1285 = vpop.f32.mrf.mxu0
        %v1286 = vpop.f32.mrf.mxu0
        %v1287 = vpop.f32.mrf.mxu0
        %1288 = vdwg.mxu0
        %v1289 = vsel %vm510, %v1284, -3.4028235e+38
        %vm1290 = vcmask 64512
        %v1291 = vsel %vm1290, %v1289, -inf
        %1292 = vmax.xlane.f32.xlu0 %v1291
        %v1293 = vpop.xlane.xlu0 %1292
        %v1294 = vsub.f32 %v1289, %v1293
        %v1295 = vmul.f32 %v1294, 1.442695
        %v1296 = vpow.pop %v1295
        %v1297 = vsel %vm1290, %v1296, 0.0
        %1298 = vadd.xlane.f32.xlu0 %v1297
        %v1299 = vpop.xlane.xlu0 %1298
        %v1300 = vpack.c.bf16 %v1296, %v1296
        %v1301 = vpack.c.bf16 %v1231, %v1231
        %v1303 = vsel %vm1290, %v1300, 0
        %vm1305 = vcmask 1043456
        %v1307 = vsel %vm1305, %v1301, 0
        %1309 = vmatprep.subr.bf16.mxu0 0
        %1310 = vmatpush1.bf16.msra.mxu0 0
        %1311 = vmatprep.subr.bf16.mxu0 0
        %1312 = vmatpush1.bf16.msra.mxu0 0
        %1313 = vmatprep.subr.bf16.mxu0 0
        %1314 = vmatpush1.bf16.msra.mxu0 0
        %1315 = vmatprep.subr.bf16.mxu0 0
        %1316 = vmatpush1.bf16.msra.mxu0 0
        %1317 = vmatprep.subr.bf16.mxu0 0
        %1318 = vmatpush1.bf16.msra.mxu0 0
        %1319 = vmatprep.subr.bf16.mxu0 0
        %1320 = vmatpush1.bf16.msra.mxu0 0
        %1321 = vmatprep.subr.bf16.mxu0 0
        %1322 = vmatpush1.bf16.msra.mxu0 0
        %1323 = vmatprep.subr.bf16.mxu0 0
        %1324 = vmatpush1.bf16.msra.mxu0 %v1307
        %1325 = vmatprep.subr.bf16.mxu0 0
        %1326 = vmatpush2.bf16.msra.mxu0 0
        %1327 = vmatprep.subr.bf16.mxu0 0
        %1328 = vmatpush2.bf16.msra.mxu0 0
        %1329 = vmatprep.subr.bf16.mxu0 0
        %1330 = vmatpush2.bf16.msra.mxu0 0
        %1331 = vmatprep.subr.bf16.mxu0 0
        %1332 = vmatpush2.bf16.msra.mxu0 0
        %1333 = vmatprep.subr.bf16.mxu0 0
        %1334 = vmatpush2.bf16.msra.mxu0 0
        %1335 = vmatprep.subr.bf16.mxu0 0
        %1336 = vmatpush2.bf16.msra.mxu0 0
        %1337 = vmatprep.subr.bf16.mxu0 0
        %1338 = vmatpush2.bf16.msra.mxu0 0
        %1339 = vmatprep.subr.bf16.mxu0 0
        %1340 = vmatpush2.bf16.msra.mxu0 0
        %1341 = vmatprep.mubr.bf16.mxu0 0
        %1342 = vmatmul.mubr.bf16.gmra.mxu0 %v1303
        %v1343 = vpop.f32.mrf.mxu0
        %v1344 = vadd.f32 0.0, %v1343
        %v1345 = vpop.f32.mrf.mxu0
        %v1346 = vpop.f32.mrf.mxu0
        %v1347 = vpop.f32.mrf.mxu0
        %1348 = vdwg.mxu0
        %v1349 = vrcp.pop %v1299
        %v1350 = vmul.f32 %v1344, %v1349
        %v1351 = vpack.c.bf16 %v1350, %v1350
        %1352 = vst [vmem:[#allocation2] sm:$0xf] %v1351
        %v1353 = vmul.f32 %v1151, %v502
        %1354 = vrot.lane.b32.xlu0 %v1151, 64
        %v1355 = vpop.permute.xlu0 %1354
        %v1356 = vmul.f32 %v1355, %v503
        %v1357 = vadd.f32 %v1353, %v1356
        %v1358 = vmul.f32 %v1192, %v504
        %1359 = vrot.lane.b32.xlu0 %v1192, 64
        %v1360 = vpop.permute.xlu0 %1359
        %v1361 = vmul.f32 %v1360, %v505
        %v1362 = vadd.f32 %v1358, %v1361
        %v1363 = vpack.c.bf16 %v1357, %v1357
        %v1364 = vpack.c.bf16 %v1362, %v1362
        %1365 = vmatprep.subr.bf16.mxu0 0
        %1366 = vmatpush1.bf16.xpose.msra.mxu0 0
        %1367 = vmatprep.subr.bf16.mxu0 0
        %1368 = vmatpush1.bf16.xpose.msra.mxu0 0
        %1369 = vmatprep.subr.bf16.mxu0 0
        %1370 = vmatpush1.bf16.xpose.msra.mxu0 0
        %1371 = vmatprep.subr.bf16.mxu0 0
        %1372 = vmatpush1.bf16.xpose.msra.mxu0 0
        %1373 = vmatprep.subr.bf16.mxu0 0
        %1374 = vmatpush1.bf16.xpose.msra.mxu0 0
        %1375 = vmatprep.subr.bf16.mxu0 0
        %1376 = vmatpush1.bf16.xpose.msra.mxu0 0
        %1377 = vmatprep.subr.bf16.mxu0 0
        %1378 = vmatpush1.bf16.xpose.msra.mxu0 0
        %1379 = vmatprep.subr.bf16.mxu0 0
        %1380 = vmatpush1.bf16.xpose.msra.mxu0 %v1364
        %1381 = vmatprep.subr.bf16.mxu0 0
        %1382 = vmatpush2.bf16.xpose.msra.mxu0 0
        %1383 = vmatprep.subr.bf16.mxu0 0
        %1384 = vmatpush2.bf16.xpose.msra.mxu0 0
        %1385 = vmatprep.subr.bf16.mxu0 0
        %1386 = vmatpush2.bf16.xpose.msra.mxu0 0
        %1387 = vmatprep.subr.bf16.mxu0 0
        %1388 = vmatpush2.bf16.xpose.msra.mxu0 0
        %1389 = vmatprep.subr.bf16.mxu0 0
        %1390 = vmatpush2.bf16.xpose.msra.mxu0 0
        %1391 = vmatprep.subr.bf16.mxu0 0
        %1392 = vmatpush2.bf16.xpose.msra.mxu0 0
        %1393 = vmatprep.subr.bf16.mxu0 0
        %1394 = vmatpush2.bf16.xpose.msra.mxu0 0
        %1395 = vmatprep.subr.bf16.mxu0 0
        %1396 = vmatpush2.bf16.xpose.msra.mxu0 0
        %1397 = vmatprep.mubr.bf16.mxu0 0
        %1398 = vmatmul.mubr.bf16.gmra.mxu0 %v1363
        %v1399 = vpop.f32.mrf.mxu0
        %v1400 = vadd.f32 0.0, %v1399
        %v1401 = vpop.f32.mrf.mxu0
        %v1402 = vpop.f32.mrf.mxu0
        %v1403 = vpop.f32.mrf.mxu0
        %1404 = vdwg.mxu0
        %v1405 = vsel %vm510, %v1400, -3.4028235e+38
        %v1406 = vsel %vm1290, %v1405, -inf
        %1407 = vmax.xlane.f32.xlu0 %v1406
        %v1408 = vpop.xlane.xlu0 %1407
        %v1409 = vsub.f32 %v1405, %v1408
        %v1410 = vmul.f32 %v1409, 1.442695
        %v1411 = vpow.pop %v1410
        %v1412 = vsel %vm1290, %v1411, 0.0
        %1413 = vadd.xlane.f32.xlu0 %v1412
        %v1414 = vpop.xlane.xlu0 %1413
        %v1415 = vpack.c.bf16 %v1411, %v1411
        %v1416 = vpack.c.bf16 %v1233, %v1233
        %v1418 = vsel %vm1290, %v1415, 0
        %v1421 = vsel %vm1305, %v1416, 0
        %1423 = vmatprep.subr.bf16.mxu0 0
        %1424 = vmatpush1.bf16.msra.mxu0 0
        %1425 = vmatprep.subr.bf16.mxu0 0
        %1426 = vmatpush1.bf16.msra.mxu0 0
        %1427 = vmatprep.subr.bf16.mxu0 0
        %1428 = vmatpush1.bf16.msra.mxu0 0
        %1429 = vmatprep.subr.bf16.mxu0 0
        %1430 = vmatpush1.bf16.msra.mxu0 0
        %1431 = vmatprep.subr.bf16.mxu0 0
        %1432 = vmatpush1.bf16.msra.mxu0 0
        %1433 = vmatprep.subr.bf16.mxu0 0
        %1434 = vmatpush1.bf16.msra.mxu0 0
        %1435 = vmatprep.subr.bf16.mxu0 0
        %1436 = vmatpush1.bf16.msra.mxu0 0
        %1437 = vmatprep.subr.bf16.mxu0 0
        %1438 = vmatpush1.bf16.msra.mxu0 %v1421
        %1439 = vmatprep.subr.bf16.mxu0 0
        %1440 = vmatpush2.bf16.msra.mxu0 0
        %1441 = vmatprep.subr.bf16.mxu0 0
        %1442 = vmatpush2.bf16.msra.mxu0 0
        %1443 = vmatprep.subr.bf16.mxu0 0
        %1444 = vmatpush2.bf16.msra.mxu0 0
        %1445 = vmatprep.subr.bf16.mxu0 0
        %1446 = vmatpush2.bf16.msra.mxu0 0
        %1447 = vmatprep.subr.bf16.mxu0 0
        %1448 = vmatpush2.bf16.msra.mxu0 0
        %1449 = vmatprep.subr.bf16.mxu0 0
        %1450 = vmatpush2.bf16.msra.mxu0 0
        %1451 = vmatprep.subr.bf16.mxu0 0
        %1452 = vmatpush2.bf16.msra.mxu0 0
        %1453 = vmatprep.subr.bf16.mxu0 0
        %1454 = vmatpush2.bf16.msra.mxu0 0
        %1455 = vmatprep.mubr.bf16.mxu0 0
        %1456 = vmatmul.mubr.bf16.gmra.mxu0 %v1418
        %v1457 = vpop.f32.mrf.mxu0
        %v1458 = vadd.f32 0.0, %v1457
        %v1459 = vpop.f32.mrf.mxu0
        %v1460 = vpop.f32.mrf.mxu0
        %v1461 = vpop.f32.mrf.mxu0
        %1462 = vdwg.mxu0
        %v1463 = vrcp.pop %v1414
        %v1464 = vmul.f32 %v1458, %v1463
        %v1465 = vpack.c.bf16 %v1464, %v1464
        %1466 = vst [vmem:[#allocation2 + $0x4] sm:$0xf] %v1465
        %v1467 = vld [vmem:[#allocation2] sm:$0xff]
        %v1468 = vld [vmem:[#allocation6] sm:$0xff]
        %v1469 = vld [vmem:[#allocation6 + $0x8] sm:$0xff]
        %v1470 = vld [vmem:[#allocation6 + $0x10] sm:$0xff]
        %v1471 = vld [vmem:[#allocation6 + $0x18] sm:$0xff]
        %v1472 = vld [vmem:[#allocation6 + $0x20] sm:$0xff]
        %v1473 = vld [vmem:[#allocation6 + $0x28] sm:$0xff]
        %v1474 = vld [vmem:[#allocation6 + $0x30] sm:$0xff]
        %v1475 = vld [vmem:[#allocation6 + $0x38] sm:$0xff]
        %v1476 = vld [vmem:[#allocation6 + $0x40] sm:$0xff]
        %v1477 = vld [vmem:[#allocation6 + $0x48] sm:$0xff]
        %v1478 = vld [vmem:[#allocation6 + $0x50] sm:$0xff]
        %v1479 = vld [vmem:[#allocation6 + $0x58] sm:$0xff]
        %v1480 = vld [vmem:[#allocation6 + $0x60] sm:$0xff]
        %v1481 = vld [vmem:[#allocation6 + $0x68] sm:$0xff]
        %v1482 = vld [vmem:[#allocation6 + $0x70] sm:$0xff]
        %v1483 = vld [vmem:[#allocation6 + $0x78] sm:$0xff]
        %v1484 = vld [vmem:[#allocation6 + $0x80] sm:$0xff]
        %v1485 = vld [vmem:[#allocation6 + $0x88] sm:$0xff]
        %v1486 = vld [vmem:[#allocation6 + $0x90] sm:$0xff]
        %v1487 = vld [vmem:[#allocation6 + $0x98] sm:$0xff]
        %v1488 = vld [vmem:[#allocation6 + $0xa0] sm:$0xff]
        %v1489 = vld [vmem:[#allocation6 + $0xa8] sm:$0xff]
        %v1490 = vld [vmem:[#allocation6 + $0xb0] sm:$0xff]
        %v1491 = vld [vmem:[#allocation6 + $0xb8] sm:$0xff]
        %v1492 = vld [vmem:[#allocation6 + $0xc0] sm:$0xff]
        %v1493 = vld [vmem:[#allocation6 + $0xc8] sm:$0xff]
        %v1494 = vld [vmem:[#allocation6 + $0xd0] sm:$0xff]
        %v1495 = vld [vmem:[#allocation6 + $0xd8] sm:$0xff]
        %v1496 = vld [vmem:[#allocation6 + $0xe0] sm:$0xff]
        %v1497 = vld [vmem:[#allocation6 + $0xe8] sm:$0xff]
        %v1498 = vld [vmem:[#allocation6 + $0xf0] sm:$0xff]
        %v1499 = vld [vmem:[#allocation6 + $0xf8] sm:$0xff]
        %v1501 = vunpack.c.l.b16 %v1467
        %v1502 = vunpack.c.h.b16 %v1467
        %v1503 = vpack.c.b16 %v1501, %v1501
        %v1504 = vpack.c.b16 %v1502, %v1502
        %v1539 = vunpack.c.l.b16 %v1468
        %v1540 = vunpack.c.h.b16 %v1468
        %v1541 = vunpack.c.l.b16 %v1469
        %v1542 = vunpack.c.h.b16 %v1469
        %v1543 = vunpack.c.l.b16 %v1470
        %v1544 = vunpack.c.h.b16 %v1470
        %v1545 = vunpack.c.l.b16 %v1471
        %v1546 = vunpack.c.h.b16 %v1471
        %v1547 = vunpack.c.l.b16 %v1472
        %v1548 = vunpack.c.h.b16 %v1472
        %v1549 = vunpack.c.l.b16 %v1473
        %v1550 = vunpack.c.h.b16 %v1473
        %v1551 = vunpack.c.l.b16 %v1474
        %v1552 = vunpack.c.h.b16 %v1474
        %v1553 = vunpack.c.l.b16 %v1475
        %v1554 = vunpack.c.h.b16 %v1475
        %v1555 = vunpack.c.l.b16 %v1476
        %v1556 = vunpack.c.h.b16 %v1476
        %v1557 = vunpack.c.l.b16 %v1477
        %v1558 = vunpack.c.h.b16 %v1477
        %v1559 = vunpack.c.l.b16 %v1478
        %v1560 = vunpack.c.h.b16 %v1478
        %v1561 = vunpack.c.l.b16 %v1479
        %v1562 = vunpack.c.h.b16 %v1479
        %v1563 = vunpack.c.l.b16 %v1480
        %v1564 = vunpack.c.h.b16 %v1480
        %v1565 = vunpack.c.l.b16 %v1481
        %v1566 = vunpack.c.h.b16 %v1481
        %v1567 = vunpack.c.l.b16 %v1482
        %v1568 = vunpack.c.h.b16 %v1482
        %v1569 = vunpack.c.l.b16 %v1483
        %v1570 = vunpack.c.h.b16 %v1483
        %v1571 = vunpack.c.l.b16 %v1484
        %v1572 = vunpack.c.h.b16 %v1484
        %v1573 = vunpack.c.l.b16 %v1485
        %v1574 = vunpack.c.h.b16 %v1485
        %v1575 = vunpack.c.l.b16 %v1486
        %v1576 = vunpack.c.h.b16 %v1486
        %v1577 = vunpack.c.l.b16 %v1487
        %v1578 = vunpack.c.h.b16 %v1487
        %v1579 = vunpack.c.l.b16 %v1488
        %v1580 = vunpack.c.h.b16 %v1488
        %v1581 = vunpack.c.l.b16 %v1489
        %v1582 = vunpack.c.h.b16 %v1489
        %v1583 = vunpack.c.l.b16 %v1490
        %v1584 = vunpack.c.h.b16 %v1490
        %v1585 = vunpack.c.l.b16 %v1491
        %v1586 = vunpack.c.h.b16 %v1491
        %v1587 = vunpack.c.l.b16 %v1492
        %v1588 = vunpack.c.h.b16 %v1492
        %v1589 = vunpack.c.l.b16 %v1493
        %v1590 = vunpack.c.h.b16 %v1493
        %v1591 = vunpack.c.l.b16 %v1494
        %v1592 = vunpack.c.h.b16 %v1494
        %v1593 = vunpack.c.l.b16 %v1495
        %v1594 = vunpack.c.h.b16 %v1495
        %v1595 = vunpack.c.l.b16 %v1496
        %v1596 = vunpack.c.h.b16 %v1496
        %v1597 = vunpack.c.l.b16 %v1497
        %v1598 = vunpack.c.h.b16 %v1497
        %v1599 = vunpack.c.l.b16 %v1498
        %v1600 = vunpack.c.h.b16 %v1498
        %v1601 = vunpack.c.l.b16 %v1499
        %v1602 = vunpack.c.h.b16 %v1499
        %v1603 = vpack.c.b16 %v1541, %v1539
        %v1604 = vpack.c.b16 %v1542, %v1540
        %v1605 = vpack.c.b16 %v1545, %v1543
        %v1606 = vpack.c.b16 %v1546, %v1544
        %v1607 = vpack.c.b16 %v1549, %v1547
        %v1608 = vpack.c.b16 %v1550, %v1548
        %v1609 = vpack.c.b16 %v1553, %v1551
        %v1610 = vpack.c.b16 %v1554, %v1552
        %v1611 = vpack.c.b16 %v1557, %v1555
        %v1612 = vpack.c.b16 %v1558, %v1556
        %v1613 = vpack.c.b16 %v1561, %v1559
        %v1614 = vpack.c.b16 %v1562, %v1560
        %v1615 = vpack.c.b16 %v1565, %v1563
        %v1616 = vpack.c.b16 %v1566, %v1564
        %v1617 = vpack.c.b16 %v1569, %v1567
        %v1618 = vpack.c.b16 %v1570, %v1568
        %v1619 = vpack.c.b16 %v1573, %v1571
        %v1620 = vpack.c.b16 %v1574, %v1572
        %v1621 = vpack.c.b16 %v1577, %v1575
        %v1622 = vpack.c.b16 %v1578, %v1576
        %v1623 = vpack.c.b16 %v1581, %v1579
        %v1624 = vpack.c.b16 %v1582, %v1580
        %v1625 = vpack.c.b16 %v1585, %v1583
        %v1626 = vpack.c.b16 %v1586, %v1584
        %v1627 = vpack.c.b16 %v1589, %v1587
        %v1628 = vpack.c.b16 %v1590, %v1588
        %v1629 = vpack.c.b16 %v1593, %v1591
        %v1630 = vpack.c.b16 %v1594, %v1592
        %v1631 = vpack.c.b16 %v1597, %v1595
        %v1632 = vpack.c.b16 %v1598, %v1596
        %v1633 = vpack.c.b16 %v1601, %v1599
        %v1634 = vpack.c.b16 %v1602, %v1600
        %1667 = vmatprep.subr.bf16.mxu0 %v1618
        %1668 = vmatpush1.bf16.msra.mxu0 %v1617
        %1669 = vmatprep.subr.bf16.mxu0 %v1616
        %1670 = vmatpush1.bf16.msra.mxu0 %v1615
        %1671 = vmatprep.subr.bf16.mxu0 %v1614
        %1672 = vmatpush1.bf16.msra.mxu0 %v1613
        %1673 = vmatprep.subr.bf16.mxu0 %v1612
        %1674 = vmatpush1.bf16.msra.mxu0 %v1611
        %1675 = vmatprep.subr.bf16.mxu0 %v1610
        %1676 = vmatpush1.bf16.msra.mxu0 %v1609
        %1677 = vmatprep.subr.bf16.mxu0 %v1608
        %1678 = vmatpush1.bf16.msra.mxu0 %v1607
        %1679 = vmatprep.subr.bf16.mxu0 %v1606
        %1680 = vmatpush1.bf16.msra.mxu0 %v1605
        %1681 = vmatprep.subr.bf16.mxu0 %v1604
        %1682 = vmatpush1.bf16.msra.mxu0 %v1603
        %1683 = vmatprep.subr.bf16.mxu0 %v1634
        %1684 = vmatpush2.bf16.msra.mxu0 %v1633
        %1685 = vmatprep.subr.bf16.mxu0 %v1632
        %1686 = vmatpush2.bf16.msra.mxu0 %v1631
        %1687 = vmatprep.subr.bf16.mxu0 %v1630
        %1688 = vmatpush2.bf16.msra.mxu0 %v1629
        %1689 = vmatprep.subr.bf16.mxu0 %v1628
        %1690 = vmatpush2.bf16.msra.mxu0 %v1627
        %1691 = vmatprep.subr.bf16.mxu0 %v1626
        %1692 = vmatpush2.bf16.msra.mxu0 %v1625
        %1693 = vmatprep.subr.bf16.mxu0 %v1624
        %1694 = vmatpush2.bf16.msra.mxu0 %v1623
        %1695 = vmatprep.subr.bf16.mxu0 %v1622
        %1696 = vmatpush2.bf16.msra.mxu0 %v1621
        %1697 = vmatprep.subr.bf16.mxu0 %v1620
        %1698 = vmatpush2.bf16.msra.mxu0 %v1619
        %1699 = vmatprep.mubr.bf16.mxu0 %v1504
        %1700 = vmatmul.mubr.bf16.gmra.mxu0 %v1503
        %v1701 = vpop.f32.mrf.mxu0
        %v1702 = vadd.f32 0.0, %v1701
        %v1703 = vpop.f32.mrf.mxu0
        %v1704 = vadd.f32 0.0, %v1703
        %v1705 = vpop.f32.mrf.mxu0
        %v1706 = vpop.f32.mrf.mxu0
        %1707 = vdwg.mxu0
        %v1708 = vadd.f32 %v500, %v1702
        %v1709 = vadd.f32 %v501, %v1704
        %v1710 = vld [vmem:[%s2] sm:$0x3]
        %v1711 = vmul.f32 %v1708, %v1708
        %v1712 = vmul.f32 %v1709, %v1709
        %v1713 = vadd.f32 %v1711, %v1712
        %1714 = vadd.xlane.f32.xlu0 %v1713
        %v1715 = vpop.xlane.xlu0 %1714
        %v1716 = vmul.f32 %v1715, %v517
        %v1717 = vadd.f32 %v1716, 1e-06
        %v1718 = vrsqrt.pop %v1717
        %v1719 = vmul.f32 %v1708, %v1718
        %v1720 = vmul.f32 %v1709, %v1718
        %v1722 = vlaneseq
        %v1723 = vshrl.u32 %v1722, 7
        %v1724 = vsub.s32 0, %v1723
        %v1725 = vrot.slane %v1710, %v1724
        %v1726 = vlaneseq
        %v1727 = vshrl.u32 %v1726, 7
        %v1728 = vsub.s32 1, %v1727
        %v1729 = vrot.slane %v1710, %v1728
        %v1732 = vmul.f32 %v1719, %v1725
        %v1733 = vmul.f32 %v1720, %v1729
        %v1734 = vpack.c.bf16 %v1732, %v1732
        %v1735 = vpack.c.bf16 %v1733, %v1733
        %v1736 = vld [vmem:[#allocation8] sm:$0xff]
        %v1737 = vld [vmem:[#allocation8 + $0x8] sm:$0xff]
        %v1738 = vld [vmem:[#allocation8 + $0x10] sm:$0xff]
        %v1739 = vld [vmem:[#allocation8 + $0x18] sm:$0xff]
        %v1740 = vld [vmem:[#allocation8 + $0x20] sm:$0xff]
        %v1741 = vld [vmem:[#allocation8 + $0x28] sm:$0xff]
        %v1742 = vld [vmem:[#allocation8 + $0x30] sm:$0xff]
        %v1743 = vld [vmem:[#allocation8 + $0x38] sm:$0xff]
        %v1744 = vld [vmem:[#allocation8 + $0x40] sm:$0xff]
        %v1745 = vld [vmem:[#allocation8 + $0x48] sm:$0xff]
        %v1746 = vld [vmem:[#allocation8 + $0x50] sm:$0xff]
        %v1747 = vld [vmem:[#allocation8 + $0x58] sm:$0xff]
        %v1748 = vld [vmem:[#allocation8 + $0x60] sm:$0xff]
        %v1749 = vld [vmem:[#allocation8 + $0x68] sm:$0xff]
        %v1750 = vld [vmem:[#allocation8 + $0x70] sm:$0xff]
        %v1751 = vld [vmem:[#allocation8 + $0x78] sm:$0xff]
        %v1752 = vld [vmem:[#allocation8 + $0x80] sm:$0xff]
        %v1753 = vld [vmem:[#allocation8 + $0x88] sm:$0xff]
        %v1754 = vld [vmem:[#allocation8 + $0x90] sm:$0xff]
        %v1755 = vld [vmem:[#allocation8 + $0x98] sm:$0xff]
        %v1756 = vld [vmem:[#allocation8 + $0xa0] sm:$0xff]
        %v1757 = vld [vmem:[#allocation8 + $0xa8] sm:$0xff]
        %v1758 = vld [vmem:[#allocation8 + $0xb0] sm:$0xff]
        %v1759 = vld [vmem:[#allocation8 + $0xb8] sm:$0xff]
        %v1760 = vld [vmem:[#allocation8 + $0xc0] sm:$0xff]
        %v1761 = vld [vmem:[#allocation8 + $0xc8] sm:$0xff]
        %v1762 = vld [vmem:[#allocation8 + $0xd0] sm:$0xff]
        %v1763 = vld [vmem:[#allocation8 + $0xd8] sm:$0xff]
        %v1764 = vld [vmem:[#allocation8 + $0xe0] sm:$0xff]
        %v1765 = vld [vmem:[#allocation8 + $0xe8] sm:$0xff]
        %v1766 = vld [vmem:[#allocation8 + $0xf0] sm:$0xff]
        %v1767 = vld [vmem:[#allocation8 + $0xf8] sm:$0xff]
        %v1768 = vld [vmem:[#allocation8 + $0x100] sm:$0xff]
        %v1769 = vld [vmem:[#allocation8 + $0x108] sm:$0xff]
        %v1770 = vld [vmem:[#allocation8 + $0x110] sm:$0xff]
        %v1771 = vld [vmem:[#allocation8 + $0x118] sm:$0xff]
        %v1772 = vld [vmem:[#allocation8 + $0x120] sm:$0xff]
        %v1773 = vld [vmem:[#allocation8 + $0x128] sm:$0xff]
        %v1774 = vld [vmem:[#allocation8 + $0x130] sm:$0xff]
        %v1775 = vld [vmem:[#allocation8 + $0x138] sm:$0xff]
        %v1776 = vld [vmem:[#allocation8 + $0x140] sm:$0xff]
        %v1777 = vld [vmem:[#allocation8 + $0x148] sm:$0xff]
        %v1778 = vld [vmem:[#allocation8 + $0x150] sm:$0xff]
        %v1779 = vld [vmem:[#allocation8 + $0x158] sm:$0xff]
        %v1780 = vld [vmem:[#allocation8 + $0x160] sm:$0xff]
        %v1781 = vld [vmem:[#allocation8 + $0x168] sm:$0xff]
        %v1782 = vld [vmem:[#allocation8 + $0x170] sm:$0xff]
        %v1783 = vld [vmem:[#allocation8 + $0x178] sm:$0xff]
        %v1784 = vld [vmem:[#allocation8 + $0x180] sm:$0xff]
        %v1785 = vld [vmem:[#allocation8 + $0x188] sm:$0xff]
        %v1786 = vld [vmem:[#allocation8 + $0x190] sm:$0xff]
        %v1787 = vld [vmem:[#allocation8 + $0x198] sm:$0xff]
        %v1788 = vld [vmem:[#allocation8 + $0x1a0] sm:$0xff]
        %v1789 = vld [vmem:[#allocation8 + $0x1a8] sm:$0xff]
        %v1790 = vld [vmem:[#allocation8 + $0x1b0] sm:$0xff]
        %v1791 = vld [vmem:[#allocation8 + $0x1b8] sm:$0xff]
        %v1792 = vld [vmem:[#allocation8 + $0x1c0] sm:$0xff]
        %v1793 = vld [vmem:[#allocation8 + $0x1c8] sm:$0xff]
        %v1794 = vld [vmem:[#allocation8 + $0x1d0] sm:$0xff]
        %v1795 = vld [vmem:[#allocation8 + $0x1d8] sm:$0xff]
        %v1796 = vld [vmem:[#allocation8 + $0x1e0] sm:$0xff]
        %v1797 = vld [vmem:[#allocation8 + $0x1e8] sm:$0xff]
        %v1798 = vld [vmem:[#allocation8 + $0x1f0] sm:$0xff]
        %v1799 = vld [vmem:[#allocation8 + $0x1f8] sm:$0xff]
        %v1800 = vld [vmem:[#allocation8 + $0x200] sm:$0xff]
        %v1801 = vld [vmem:[#allocation8 + $0x208] sm:$0xff]
        %v1802 = vld [vmem:[#allocation8 + $0x210] sm:$0xff]
        %v1803 = vld [vmem:[#allocation8 + $0x218] sm:$0xff]
        %v1804 = vld [vmem:[#allocation8 + $0x220] sm:$0xff]
        %v1805 = vld [vmem:[#allocation8 + $0x228] sm:$0xff]
        %v1806 = vld [vmem:[#allocation8 + $0x230] sm:$0xff]
        %v1807 = vld [vmem:[#allocation8 + $0x238] sm:$0xff]
        %v1808 = vld [vmem:[#allocation8 + $0x240] sm:$0xff]
        %v1809 = vld [vmem:[#allocation8 + $0x248] sm:$0xff]
        %v1810 = vld [vmem:[#allocation8 + $0x250] sm:$0xff]
        %v1811 = vld [vmem:[#allocation8 + $0x258] sm:$0xff]
        %v1812 = vld [vmem:[#allocation8 + $0x260] sm:$0xff]
        %v1813 = vld [vmem:[#allocation8 + $0x268] sm:$0xff]
        %v1814 = vld [vmem:[#allocation8 + $0x270] sm:$0xff]
        %v1815 = vld [vmem:[#allocation8 + $0x278] sm:$0xff]
        %v1816 = vld [vmem:[#allocation8 + $0x280] sm:$0xff]
        %v1817 = vld [vmem:[#allocation8 + $0x288] sm:$0xff]
        %v1818 = vld [vmem:[#allocation8 + $0x290] sm:$0xff]
        %v1819 = vld [vmem:[#allocation8 + $0x298] sm:$0xff]
        %v1820 = vld [vmem:[#allocation8 + $0x2a0] sm:$0xff]
        %v1821 = vld [vmem:[#allocation8 + $0x2a8] sm:$0xff]
        %v1822 = vld [vmem:[#allocation8 + $0x2b0] sm:$0xff]
        %v1823 = vld [vmem:[#allocation8 + $0x2b8] sm:$0xff]
        %v1824 = vld [vmem:[#allocation8 + $0x2c0] sm:$0xff]
        %v1825 = vld [vmem:[#allocation8 + $0x2c8] sm:$0xff]
        %v1826 = vld [vmem:[#allocation8 + $0x2d0] sm:$0xff]
        %v1827 = vld [vmem:[#allocation8 + $0x2d8] sm:$0xff]
        %v1828 = vld [vmem:[#allocation8 + $0x2e0] sm:$0xff]
        %v1829 = vld [vmem:[#allocation8 + $0x2e8] sm:$0xff]
        %v1830 = vld [vmem:[#allocation8 + $0x2f0] sm:$0xff]
        %v1831 = vld [vmem:[#allocation8 + $0x2f8] sm:$0xff]
        %v1832 = vld [vmem:[#allocation8 + $0x300] sm:$0xff]
        %v1833 = vld [vmem:[#allocation8 + $0x308] sm:$0xff]
        %v1834 = vld [vmem:[#allocation8 + $0x310] sm:$0xff]
        %v1835 = vld [vmem:[#allocation8 + $0x318] sm:$0xff]
        %v1836 = vld [vmem:[#allocation8 + $0x320] sm:$0xff]
        %v1837 = vld [vmem:[#allocation8 + $0x328] sm:$0xff]
        %v1838 = vld [vmem:[#allocation8 + $0x330] sm:$0xff]
        %v1839 = vld [vmem:[#allocation8 + $0x338] sm:$0xff]
        %v1840 = vld [vmem:[#allocation8 + $0x340] sm:$0xff]
        %v1841 = vld [vmem:[#allocation8 + $0x348] sm:$0xff]
        %v1842 = vld [vmem:[#allocation8 + $0x350] sm:$0xff]
        %v1843 = vld [vmem:[#allocation8 + $0x358] sm:$0xff]
        %v1844 = vld [vmem:[#allocation8 + $0x360] sm:$0xff]
        %v1845 = vld [vmem:[#allocation8 + $0x368] sm:$0xff]
        %v1846 = vld [vmem:[#allocation8 + $0x370] sm:$0xff]
        %v1847 = vld [vmem:[#allocation8 + $0x378] sm:$0xff]
        %v1848 = vld [vmem:[#allocation8 + $0x380] sm:$0xff]
        %v1849 = vld [vmem:[#allocation8 + $0x388] sm:$0xff]
        %v1850 = vld [vmem:[#allocation8 + $0x390] sm:$0xff]
        %v1851 = vld [vmem:[#allocation8 + $0x398] sm:$0xff]
        %v1852 = vld [vmem:[#allocation8 + $0x3a0] sm:$0xff]
        %v1853 = vld [vmem:[#allocation8 + $0x3a8] sm:$0xff]
        %v1854 = vld [vmem:[#allocation8 + $0x3b0] sm:$0xff]
        %v1855 = vld [vmem:[#allocation8 + $0x3b8] sm:$0xff]
        %v1856 = vld [vmem:[#allocation8 + $0x3c0] sm:$0xff]
        %v1857 = vld [vmem:[#allocation8 + $0x3c8] sm:$0xff]
        %v1858 = vld [vmem:[#allocation8 + $0x3d0] sm:$0xff]
        %v1859 = vld [vmem:[#allocation8 + $0x3d8] sm:$0xff]
        %v1860 = vld [vmem:[#allocation8 + $0x3e0] sm:$0xff]
        %v1861 = vld [vmem:[#allocation8 + $0x3e8] sm:$0xff]
        %v1862 = vld [vmem:[#allocation8 + $0x3f0] sm:$0xff]
        %v1863 = vld [vmem:[#allocation8 + $0x3f8] sm:$0xff]
        %v1992 = vunpack.c.l.b16 %v1736
        %v1993 = vunpack.c.h.b16 %v1736
        %v1994 = vunpack.c.l.b16 %v1737
        %v1995 = vunpack.c.h.b16 %v1737
        %v1996 = vunpack.c.l.b16 %v1738
        %v1997 = vunpack.c.h.b16 %v1738
        %v1998 = vunpack.c.l.b16 %v1739
        %v1999 = vunpack.c.h.b16 %v1739
        %v2000 = vunpack.c.l.b16 %v1740
        %v2001 = vunpack.c.h.b16 %v1740
        %v2002 = vunpack.c.l.b16 %v1741
        %v2003 = vunpack.c.h.b16 %v1741
        %v2004 = vunpack.c.l.b16 %v1742
        %v2005 = vunpack.c.h.b16 %v1742
        %v2006 = vunpack.c.l.b16 %v1743
        %v2007 = vunpack.c.h.b16 %v1743
        %v2008 = vunpack.c.l.b16 %v1744
        %v2009 = vunpack.c.h.b16 %v1744
        %v2010 = vunpack.c.l.b16 %v1745
        %v2011 = vunpack.c.h.b16 %v1745
        %v2012 = vunpack.c.l.b16 %v1746
        %v2013 = vunpack.c.h.b16 %v1746
        %v2014 = vunpack.c.l.b16 %v1747
        %v2015 = vunpack.c.h.b16 %v1747
        %v2016 = vunpack.c.l.b16 %v1748
        %v2017 = vunpack.c.h.b16 %v1748
        %v2018 = vunpack.c.l.b16 %v1749
        %v2019 = vunpack.c.h.b16 %v1749
        %v2020 = vunpack.c.l.b16 %v1750
        %v2021 = vunpack.c.h.b16 %v1750
        %v2022 = vunpack.c.l.b16 %v1751
        %v2023 = vunpack.c.h.b16 %v1751
        %v2024 = vunpack.c.l.b16 %v1752
        %v2025 = vunpack.c.h.b16 %v1752
        %v2026 = vunpack.c.l.b16 %v1753
        %v2027 = vunpack.c.h.b16 %v1753
        %v2028 = vunpack.c.l.b16 %v1754
        %v2029 = vunpack.c.h.b16 %v1754
        %v2030 = vunpack.c.l.b16 %v1755
        %v2031 = vunpack.c.h.b16 %v1755
        %v2032 = vunpack.c.l.b16 %v1756
        %v2033 = vunpack.c.h.b16 %v1756
        %v2034 = vunpack.c.l.b16 %v1757
        %v2035 = vunpack.c.h.b16 %v1757
        %v2036 = vunpack.c.l.b16 %v1758
        %v2037 = vunpack.c.h.b16 %v1758
        %v2038 = vunpack.c.l.b16 %v1759
        %v2039 = vunpack.c.h.b16 %v1759
        %v2040 = vunpack.c.l.b16 %v1760
        %v2041 = vunpack.c.h.b16 %v1760
        %v2042 = vunpack.c.l.b16 %v1761
        %v2043 = vunpack.c.h.b16 %v1761
        %v2044 = vunpack.c.l.b16 %v1762
        %v2045 = vunpack.c.h.b16 %v1762
        %v2046 = vunpack.c.l.b16 %v1763
        %v2047 = vunpack.c.h.b16 %v1763
        %v2048 = vunpack.c.l.b16 %v1764
        %v2049 = vunpack.c.h.b16 %v1764
        %v2050 = vunpack.c.l.b16 %v1765
        %v2051 = vunpack.c.h.b16 %v1765
        %v2052 = vunpack.c.l.b16 %v1766
        %v2053 = vunpack.c.h.b16 %v1766
        %v2054 = vunpack.c.l.b16 %v1767
        %v2055 = vunpack.c.h.b16 %v1767
        %v2056 = vunpack.c.l.b16 %v1768
        %v2057 = vunpack.c.h.b16 %v1768
        %v2058 = vunpack.c.l.b16 %v1769
        %v2059 = vunpack.c.h.b16 %v1769
        %v2060 = vunpack.c.l.b16 %v1770
        %v2061 = vunpack.c.h.b16 %v1770
        %v2062 = vunpack.c.l.b16 %v1771
        %v2063 = vunpack.c.h.b16 %v1771
        %v2064 = vunpack.c.l.b16 %v1772
        %v2065 = vunpack.c.h.b16 %v1772
        %v2066 = vunpack.c.l.b16 %v1773
        %v2067 = vunpack.c.h.b16 %v1773
        %v2068 = vunpack.c.l.b16 %v1774
        %v2069 = vunpack.c.h.b16 %v1774
        %v2070 = vunpack.c.l.b16 %v1775
        %v2071 = vunpack.c.h.b16 %v1775
        %v2072 = vunpack.c.l.b16 %v1776
        %v2073 = vunpack.c.h.b16 %v1776
        %v2074 = vunpack.c.l.b16 %v1777
        %v2075 = vunpack.c.h.b16 %v1777
        %v2076 = vunpack.c.l.b16 %v1778
        %v2077 = vunpack.c.h.b16 %v1778
        %v2078 = vunpack.c.l.b16 %v1779
        %v2079 = vunpack.c.h.b16 %v1779
        %v2080 = vunpack.c.l.b16 %v1780
        %v2081 = vunpack.c.h.b16 %v1780
        %v2082 = vunpack.c.l.b16 %v1781
        %v2083 = vunpack.c.h.b16 %v1781
        %v2084 = vunpack.c.l.b16 %v1782
        %v2085 = vunpack.c.h.b16 %v1782
        %v2086 = vunpack.c.l.b16 %v1783
        %v2087 = vunpack.c.h.b16 %v1783
        %v2088 = vunpack.c.l.b16 %v1784
        %v2089 = vunpack.c.h.b16 %v1784
        %v2090 = vunpack.c.l.b16 %v1785
        %v2091 = vunpack.c.h.b16 %v1785
        %v2092 = vunpack.c.l.b16 %v1786
        %v2093 = vunpack.c.h.b16 %v1786
        %v2094 = vunpack.c.l.b16 %v1787
        %v2095 = vunpack.c.h.b16 %v1787
        %v2096 = vunpack.c.l.b16 %v1788
        %v2097 = vunpack.c.h.b16 %v1788
        %v2098 = vunpack.c.l.b16 %v1789
        %v2099 = vunpack.c.h.b16 %v1789
        %v2100 = vunpack.c.l.b16 %v1790
        %v2101 = vunpack.c.h.b16 %v1790
        %v2102 = vunpack.c.l.b16 %v1791
        %v2103 = vunpack.c.h.b16 %v1791
        %v2104 = vunpack.c.l.b16 %v1792
        %v2105 = vunpack.c.h.b16 %v1792
        %v2106 = vunpack.c.l.b16 %v1793
        %v2107 = vunpack.c.h.b16 %v1793
        %v2108 = vunpack.c.l.b16 %v1794
        %v2109 = vunpack.c.h.b16 %v1794
        %v2110 = vunpack.c.l.b16 %v1795
        %v2111 = vunpack.c.h.b16 %v1795
        %v2112 = vunpack.c.l.b16 %v1796
        %v2113 = vunpack.c.h.b16 %v1796
        %v2114 = vunpack.c.l.b16 %v1797
        %v2115 = vunpack.c.h.b16 %v1797
        %v2116 = vunpack.c.l.b16 %v1798
        %v2117 = vunpack.c.h.b16 %v1798
        %v2118 = vunpack.c.l.b16 %v1799
        %v2119 = vunpack.c.h.b16 %v1799
        %v2120 = vunpack.c.l.b16 %v1800
        %v2121 = vunpack.c.h.b16 %v1800
        %v2122 = vunpack.c.l.b16 %v1801
        %v2123 = vunpack.c.h.b16 %v1801
        %v2124 = vunpack.c.l.b16 %v1802
        %v2125 = vunpack.c.h.b16 %v1802
        %v2126 = vunpack.c.l.b16 %v1803
        %v2127 = vunpack.c.h.b16 %v1803
        %v2128 = vunpack.c.l.b16 %v1804
        %v2129 = vunpack.c.h.b16 %v1804
        %v2130 = vunpack.c.l.b16 %v1805
        %v2131 = vunpack.c.h.b16 %v1805
        %v2132 = vunpack.c.l.b16 %v1806
        %v2133 = vunpack.c.h.b16 %v1806
        %v2134 = vunpack.c.l.b16 %v1807
        %v2135 = vunpack.c.h.b16 %v1807
        %v2136 = vunpack.c.l.b16 %v1808
        %v2137 = vunpack.c.h.b16 %v1808
        %v2138 = vunpack.c.l.b16 %v1809
        %v2139 = vunpack.c.h.b16 %v1809
        %v2140 = vunpack.c.l.b16 %v1810
        %v2141 = vunpack.c.h.b16 %v1810
        %v2142 = vunpack.c.l.b16 %v1811
        %v2143 = vunpack.c.h.b16 %v1811
        %v2144 = vunpack.c.l.b16 %v1812
        %v2145 = vunpack.c.h.b16 %v1812
        %v2146 = vunpack.c.l.b16 %v1813
        %v2147 = vunpack.c.h.b16 %v1813
        %v2148 = vunpack.c.l.b16 %v1814
        %v2149 = vunpack.c.h.b16 %v1814
        %v2150 = vunpack.c.l.b16 %v1815
        %v2151 = vunpack.c.h.b16 %v1815
        %v2152 = vunpack.c.l.b16 %v1816
        %v2153 = vunpack.c.h.b16 %v1816
        %v2154 = vunpack.c.l.b16 %v1817
        %v2155 = vunpack.c.h.b16 %v1817
        %v2156 = vunpack.c.l.b16 %v1818
        %v2157 = vunpack.c.h.b16 %v1818
        %v2158 = vunpack.c.l.b16 %v1819
        %v2159 = vunpack.c.h.b16 %v1819
        %v2160 = vunpack.c.l.b16 %v1820
        %v2161 = vunpack.c.h.b16 %v1820
        %v2162 = vunpack.c.l.b16 %v1821
        %v2163 = vunpack.c.h.b16 %v1821
        %v2164 = vunpack.c.l.b16 %v1822
        %v2165 = vunpack.c.h.b16 %v1822
        %v2166 = vunpack.c.l.b16 %v1823
        %v2167 = vunpack.c.h.b16 %v1823
        %v2168 = vunpack.c.l.b16 %v1824
        %v2169 = vunpack.c.h.b16 %v1824
        %v2170 = vunpack.c.l.b16 %v1825
        %v2171 = vunpack.c.h.b16 %v1825
        %v2172 = vunpack.c.l.b16 %v1826
        %v2173 = vunpack.c.h.b16 %v1826
        %v2174 = vunpack.c.l.b16 %v1827
        %v2175 = vunpack.c.h.b16 %v1827
        %v2176 = vunpack.c.l.b16 %v1828
        %v2177 = vunpack.c.h.b16 %v1828
        %v2178 = vunpack.c.l.b16 %v1829
        %v2179 = vunpack.c.h.b16 %v1829
        %v2180 = vunpack.c.l.b16 %v1830
        %v2181 = vunpack.c.h.b16 %v1830
        %v2182 = vunpack.c.l.b16 %v1831
        %v2183 = vunpack.c.h.b16 %v1831
        %v2184 = vunpack.c.l.b16 %v1832
        %v2185 = vunpack.c.h.b16 %v1832
        %v2186 = vunpack.c.l.b16 %v1833
        %v2187 = vunpack.c.h.b16 %v1833
        %v2188 = vunpack.c.l.b16 %v1834
        %v2189 = vunpack.c.h.b16 %v1834
        %v2190 = vunpack.c.l.b16 %v1835
        %v2191 = vunpack.c.h.b16 %v1835
        %v2192 = vunpack.c.l.b16 %v1836
        %v2193 = vunpack.c.h.b16 %v1836
        %v2194 = vunpack.c.l.b16 %v1837
        %v2195 = vunpack.c.h.b16 %v1837
        %v2196 = vunpack.c.l.b16 %v1838
        %v2197 = vunpack.c.h.b16 %v1838
        %v2198 = vunpack.c.l.b16 %v1839
        %v2199 = vunpack.c.h.b16 %v1839
        %v2200 = vunpack.c.l.b16 %v1840
        %v2201 = vunpack.c.h.b16 %v1840
        %v2202 = vunpack.c.l.b16 %v1841
        %v2203 = vunpack.c.h.b16 %v1841
        %v2204 = vunpack.c.l.b16 %v1842
        %v2205 = vunpack.c.h.b16 %v1842
        %v2206 = vunpack.c.l.b16 %v1843
        %v2207 = vunpack.c.h.b16 %v1843
        %v2208 = vunpack.c.l.b16 %v1844
        %v2209 = vunpack.c.h.b16 %v1844
        %v2210 = vunpack.c.l.b16 %v1845
        %v2211 = vunpack.c.h.b16 %v1845
        %v2212 = vunpack.c.l.b16 %v1846
        %v2213 = vunpack.c.h.b16 %v1846
        %v2214 = vunpack.c.l.b16 %v1847
        %v2215 = vunpack.c.h.b16 %v1847
        %v2216 = vunpack.c.l.b16 %v1848
        %v2217 = vunpack.c.h.b16 %v1848
        %v2218 = vunpack.c.l.b16 %v1849
        %v2219 = vunpack.c.h.b16 %v1849
        %v2220 = vunpack.c.l.b16 %v1850
        %v2221 = vunpack.c.h.b16 %v1850
        %v2222 = vunpack.c.l.b16 %v1851
        %v2223 = vunpack.c.h.b16 %v1851
        %v2224 = vunpack.c.l.b16 %v1852
        %v2225 = vunpack.c.h.b16 %v1852
        %v2226 = vunpack.c.l.b16 %v1853
        %v2227 = vunpack.c.h.b16 %v1853
        %v2228 = vunpack.c.l.b16 %v1854
        %v2229 = vunpack.c.h.b16 %v1854
        %v2230 = vunpack.c.l.b16 %v1855
        %v2231 = vunpack.c.h.b16 %v1855
        %v2232 = vunpack.c.l.b16 %v1856
        %v2233 = vunpack.c.h.b16 %v1856
        %v2234 = vunpack.c.l.b16 %v1857
        %v2235 = vunpack.c.h.b16 %v1857
        %v2236 = vunpack.c.l.b16 %v1858
        %v2237 = vunpack.c.h.b16 %v1858
        %v2238 = vunpack.c.l.b16 %v1859
        %v2239 = vunpack.c.h.b16 %v1859
        %v2240 = vunpack.c.l.b16 %v1860
        %v2241 = vunpack.c.h.b16 %v1860
        %v2242 = vunpack.c.l.b16 %v1861
        %v2243 = vunpack.c.h.b16 %v1861
        %v2244 = vunpack.c.l.b16 %v1862
        %v2245 = vunpack.c.h.b16 %v1862
        %v2246 = vunpack.c.l.b16 %v1863
        %v2247 = vunpack.c.h.b16 %v1863
        %v2248 = vpack.c.b16 %v2000, %v1992
        %v2249 = vpack.c.b16 %v2001, %v1993
        %v2250 = vpack.c.b16 %v2002, %v1994
        %v2251 = vpack.c.b16 %v2003, %v1995
        %v2252 = vpack.c.b16 %v2004, %v1996
        %v2253 = vpack.c.b16 %v2005, %v1997
        %v2254 = vpack.c.b16 %v2006, %v1998
        %v2255 = vpack.c.b16 %v2007, %v1999
        %v2256 = vpack.c.b16 %v2016, %v2008
        %v2257 = vpack.c.b16 %v2017, %v2009
        %v2258 = vpack.c.b16 %v2018, %v2010
        %v2259 = vpack.c.b16 %v2019, %v2011
        %v2260 = vpack.c.b16 %v2020, %v2012
        %v2261 = vpack.c.b16 %v2021, %v2013
        %v2262 = vpack.c.b16 %v2022, %v2014
        %v2263 = vpack.c.b16 %v2023, %v2015
        %v2264 = vpack.c.b16 %v2032, %v2024
        %v2265 = vpack.c.b16 %v2033, %v2025
        %v2266 = vpack.c.b16 %v2034, %v2026
        %v2267 = vpack.c.b16 %v2035, %v2027
        %v2268 = vpack.c.b16 %v2036, %v2028
        %v2269 = vpack.c.b16 %v2037, %v2029
        %v2270 = vpack.c.b16 %v2038, %v2030
        %v2271 = vpack.c.b16 %v2039, %v2031
        %v2272 = vpack.c.b16 %v2048, %v2040
        %v2273 = vpack.c.b16 %v2049, %v2041
        %v2274 = vpack.c.b16 %v2050, %v2042
        %v2275 = vpack.c.b16 %v2051, %v2043
        %v2276 = vpack.c.b16 %v2052, %v2044
        %v2277 = vpack.c.b16 %v2053, %v2045
        %v2278 = vpack.c.b16 %v2054, %v2046
        %v2279 = vpack.c.b16 %v2055, %v2047
        %v2280 = vpack.c.b16 %v2064, %v2056
        %v2281 = vpack.c.b16 %v2065, %v2057
        %v2282 = vpack.c.b16 %v2066, %v2058
        %v2283 = vpack.c.b16 %v2067, %v2059
        %v2284 = vpack.c.b16 %v2068, %v2060
        %v2285 = vpack.c.b16 %v2069, %v2061
        %v2286 = vpack.c.b16 %v2070, %v2062
        %v2287 = vpack.c.b16 %v2071, %v2063
        %v2288 = vpack.c.b16 %v2080, %v2072
        %v2289 = vpack.c.b16 %v2081, %v2073
        %v2290 = vpack.c.b16 %v2082, %v2074
        %v2291 = vpack.c.b16 %v2083, %v2075
        %v2292 = vpack.c.b16 %v2084, %v2076
        %v2293 = vpack.c.b16 %v2085, %v2077
        %v2294 = vpack.c.b16 %v2086, %v2078
        %v2295 = vpack.c.b16 %v2087, %v2079
        %v2296 = vpack.c.b16 %v2096, %v2088
        %v2297 = vpack.c.b16 %v2097, %v2089
        %v2298 = vpack.c.b16 %v2098, %v2090
        %v2299 = vpack.c.b16 %v2099, %v2091
        %v2300 = vpack.c.b16 %v2100, %v2092
        %v2301 = vpack.c.b16 %v2101, %v2093
        %v2302 = vpack.c.b16 %v2102, %v2094
        %v2303 = vpack.c.b16 %v2103, %v2095
        %v2304 = vpack.c.b16 %v2112, %v2104
        %v2305 = vpack.c.b16 %v2113, %v2105
        %v2306 = vpack.c.b16 %v2114, %v2106
        %v2307 = vpack.c.b16 %v2115, %v2107
        %v2308 = vpack.c.b16 %v2116, %v2108
        %v2309 = vpack.c.b16 %v2117, %v2109
        %v2310 = vpack.c.b16 %v2118, %v2110
        %v2311 = vpack.c.b16 %v2119, %v2111
        %v2312 = vpack.c.b16 %v2128, %v2120
        %v2313 = vpack.c.b16 %v2129, %v2121
        %v2314 = vpack.c.b16 %v2130, %v2122
        %v2315 = vpack.c.b16 %v2131, %v2123
        %v2316 = vpack.c.b16 %v2132, %v2124
        %v2317 = vpack.c.b16 %v2133, %v2125
        %v2318 = vpack.c.b16 %v2134, %v2126
        %v2319 = vpack.c.b16 %v2135, %v2127
        %v2320 = vpack.c.b16 %v2144, %v2136
        %v2321 = vpack.c.b16 %v2145, %v2137
        %v2322 = vpack.c.b16 %v2146, %v2138
        %v2323 = vpack.c.b16 %v2147, %v2139
        %v2324 = vpack.c.b16 %v2148, %v2140
        %v2325 = vpack.c.b16 %v2149, %v2141
        %v2326 = vpack.c.b16 %v2150, %v2142
        %v2327 = vpack.c.b16 %v2151, %v2143
        %v2328 = vpack.c.b16 %v2160, %v2152
        %v2329 = vpack.c.b16 %v2161, %v2153
        %v2330 = vpack.c.b16 %v2162, %v2154
        %v2331 = vpack.c.b16 %v2163, %v2155
        %v2332 = vpack.c.b16 %v2164, %v2156
        %v2333 = vpack.c.b16 %v2165, %v2157
        %v2334 = vpack.c.b16 %v2166, %v2158
        %v2335 = vpack.c.b16 %v2167, %v2159
        %v2336 = vpack.c.b16 %v2176, %v2168
        %v2337 = vpack.c.b16 %v2177, %v2169
        %v2338 = vpack.c.b16 %v2178, %v2170
        %v2339 = vpack.c.b16 %v2179, %v2171
        %v2340 = vpack.c.b16 %v2180, %v2172
        %v2341 = vpack.c.b16 %v2181, %v2173
        %v2342 = vpack.c.b16 %v2182, %v2174
        %v2343 = vpack.c.b16 %v2183, %v2175
        %v2344 = vpack.c.b16 %v2192, %v2184
        %v2345 = vpack.c.b16 %v2193, %v2185
        %v2346 = vpack.c.b16 %v2194, %v2186
        %v2347 = vpack.c.b16 %v2195, %v2187
        %v2348 = vpack.c.b16 %v2196, %v2188
        %v2349 = vpack.c.b16 %v2197, %v2189
        %v2350 = vpack.c.b16 %v2198, %v2190
        %v2351 = vpack.c.b16 %v2199, %v2191
        %v2352 = vpack.c.b16 %v2208, %v2200
        %v2353 = vpack.c.b16 %v2209, %v2201
        %v2354 = vpack.c.b16 %v2210, %v2202
        %v2355 = vpack.c.b16 %v2211, %v2203
        %v2356 = vpack.c.b16 %v2212, %v2204
        %v2357 = vpack.c.b16 %v2213, %v2205
        %v2358 = vpack.c.b16 %v2214, %v2206
        %v2359 = vpack.c.b16 %v2215, %v2207
        %v2360 = vpack.c.b16 %v2224, %v2216
        %v2361 = vpack.c.b16 %v2225, %v2217
        %v2362 = vpack.c.b16 %v2226, %v2218
        %v2363 = vpack.c.b16 %v2227, %v2219
        %v2364 = vpack.c.b16 %v2228, %v2220
        %v2365 = vpack.c.b16 %v2229, %v2221
        %v2366 = vpack.c.b16 %v2230, %v2222
        %v2367 = vpack.c.b16 %v2231, %v2223
        %v2368 = vpack.c.b16 %v2240, %v2232
        %v2369 = vpack.c.b16 %v2241, %v2233
        %v2370 = vpack.c.b16 %v2242, %v2234
        %v2371 = vpack.c.b16 %v2243, %v2235
        %v2372 = vpack.c.b16 %v2244, %v2236
        %v2373 = vpack.c.b16 %v2245, %v2237
        %v2374 = vpack.c.b16 %v2246, %v2238
        %v2375 = vpack.c.b16 %v2247, %v2239
        %2504 = vmatprep.subr.bf16.mxu0 %v2305
        %2505 = vmatpush1.bf16.msra.mxu0 %v2304
        %2506 = vmatprep.subr.bf16.mxu0 %v2297
        %2507 = vmatpush1.bf16.msra.mxu0 %v2296
        %2508 = vmatprep.subr.bf16.mxu0 %v2289
        %2509 = vmatpush1.bf16.msra.mxu0 %v2288
        %2510 = vmatprep.subr.bf16.mxu0 %v2281
        %2511 = vmatpush1.bf16.msra.mxu0 %v2280
        %2512 = vmatprep.subr.bf16.mxu0 %v2273
        %2513 = vmatpush1.bf16.msra.mxu0 %v2272
        %2514 = vmatprep.subr.bf16.mxu0 %v2265
        %2515 = vmatpush1.bf16.msra.mxu0 %v2264
        %2516 = vmatprep.subr.bf16.mxu0 %v2257
        %2517 = vmatpush1.bf16.msra.mxu0 %v2256
        %2518 = vmatprep.subr.bf16.mxu0 %v2249
        %2519 = vmatpush1.bf16.msra.mxu0 %v2248
        %2520 = vmatprep.subr.bf16.mxu0 %v2369
        %2521 = vmatpush2.bf16.msra.mxu0 %v2368
        %2522 = vmatprep.subr.bf16.mxu0 %v2361
        %2523 = vmatpush2.bf16.msra.mxu0 %v2360
        %2524 = vmatprep.subr.bf16.mxu0 %v2353
        %2525 = vmatpush2.bf16.msra.mxu0 %v2352
        %2526 = vmatprep.subr.bf16.mxu0 %v2345
        %2527 = vmatpush2.bf16.msra.mxu0 %v2344
        %2528 = vmatprep.subr.bf16.mxu0 %v2337
        %2529 = vmatpush2.bf16.msra.mxu0 %v2336
        %2530 = vmatprep.subr.bf16.mxu0 %v2329
        %2531 = vmatpush2.bf16.msra.mxu0 %v2328
        %2532 = vmatprep.subr.bf16.mxu0 %v2321
        %2533 = vmatpush2.bf16.msra.mxu0 %v2320
        %2534 = vmatprep.subr.bf16.mxu0 %v2313
        %2535 = vmatpush2.bf16.msra.mxu0 %v2312
        %2536 = vmatprep.mubr.bf16.mxu0 %v1735
        %2537 = vmatmul.mubr.bf16.gmra.mxu0 %v1734
        %v2538 = vpop.f32.mrf.mxu0
        %v2539 = vadd.f32 0.0, %v2538
        %v2540 = vpop.f32.mrf.mxu0
        %v2541 = vadd.f32 0.0, %v2540
        %v2542 = vpop.f32.mrf.mxu0
        %v2543 = vpop.f32.mrf.mxu0
        %2544 = vdwg.mxu0
        %2545 = vmatprep.subr.bf16.mxu0 %v2307
        %2546 = vmatpush1.bf16.msra.mxu0 %v2306
        %2547 = vmatprep.subr.bf16.mxu0 %v2299
        %2548 = vmatpush1.bf16.msra.mxu0 %v2298
        %2549 = vmatprep.subr.bf16.mxu0 %v2291
        %2550 = vmatpush1.bf16.msra.mxu0 %v2290
        %2551 = vmatprep.subr.bf16.mxu0 %v2283
        %2552 = vmatpush1.bf16.msra.mxu0 %v2282
        %2553 = vmatprep.subr.bf16.mxu0 %v2275
        %2554 = vmatpush1.bf16.msra.mxu0 %v2274
        %2555 = vmatprep.subr.bf16.mxu0 %v2267
        %2556 = vmatpush1.bf16.msra.mxu0 %v2266
        %2557 = vmatprep.subr.bf16.mxu0 %v2259
        %2558 = vmatpush1.bf16.msra.mxu0 %v2258
        %2559 = vmatprep.subr.bf16.mxu0 %v2251
        %2560 = vmatpush1.bf16.msra.mxu0 %v2250
        %2561 = vmatprep.subr.bf16.mxu0 %v2371
        %2562 = vmatpush2.bf16.msra.mxu0 %v2370
        %2563 = vmatprep.subr.bf16.mxu0 %v2363
        %2564 = vmatpush2.bf16.msra.mxu0 %v2362
        %2565 = vmatprep.subr.bf16.mxu0 %v2355
        %2566 = vmatpush2.bf16.msra.mxu0 %v2354
        %2567 = vmatprep.subr.bf16.mxu0 %v2347
        %2568 = vmatpush2.bf16.msra.mxu0 %v2346
        %2569 = vmatprep.subr.bf16.mxu0 %v2339
        %2570 = vmatpush2.bf16.msra.mxu0 %v2338
        %2571 = vmatprep.subr.bf16.mxu0 %v2331
        %2572 = vmatpush2.bf16.msra.mxu0 %v2330
        %2573 = vmatprep.subr.bf16.mxu0 %v2323
        %2574 = vmatpush2.bf16.msra.mxu0 %v2322
        %2575 = vmatprep.subr.bf16.mxu0 %v2315
        %2576 = vmatpush2.bf16.msra.mxu0 %v2314
        %2577 = vmatprep.mubr.bf16.mxu0 %v1735
        %2578 = vmatmul.mubr.bf16.gmra.mxu0 %v1734
        %v2579 = vpop.f32.mrf.mxu0
        %v2580 = vadd.f32 0.0, %v2579
        %v2581 = vpop.f32.mrf.mxu0
        %v2582 = vadd.f32 0.0, %v2581
        %v2583 = vpop.f32.mrf.mxu0
        %v2584 = vpop.f32.mrf.mxu0
        %2585 = vdwg.mxu0
        %2586 = vmatprep.subr.bf16.mxu0 %v2309
        %2587 = vmatpush1.bf16.msra.mxu0 %v2308
        %2588 = vmatprep.subr.bf16.mxu0 %v2301
        %2589 = vmatpush1.bf16.msra.mxu0 %v2300
        %2590 = vmatprep.subr.bf16.mxu0 %v2293
        %2591 = vmatpush1.bf16.msra.mxu0 %v2292
        %2592 = vmatprep.subr.bf16.mxu0 %v2285
        %2593 = vmatpush1.bf16.msra.mxu0 %v2284
        %2594 = vmatprep.subr.bf16.mxu0 %v2277
        %2595 = vmatpush1.bf16.msra.mxu0 %v2276
        %2596 = vmatprep.subr.bf16.mxu0 %v2269
        %2597 = vmatpush1.bf16.msra.mxu0 %v2268
        %2598 = vmatprep.subr.bf16.mxu0 %v2261
        %2599 = vmatpush1.bf16.msra.mxu0 %v2260
        %2600 = vmatprep.subr.bf16.mxu0 %v2253
        %2601 = vmatpush1.bf16.msra.mxu0 %v2252
        %2602 = vmatprep.subr.bf16.mxu0 %v2373
        %2603 = vmatpush2.bf16.msra.mxu0 %v2372
        %2604 = vmatprep.subr.bf16.mxu0 %v2365
        %2605 = vmatpush2.bf16.msra.mxu0 %v2364
        %2606 = vmatprep.subr.bf16.mxu0 %v2357
        %2607 = vmatpush2.bf16.msra.mxu0 %v2356
        %2608 = vmatprep.subr.bf16.mxu0 %v2349
        %2609 = vmatpush2.bf16.msra.mxu0 %v2348
        %2610 = vmatprep.subr.bf16.mxu0 %v2341
        %2611 = vmatpush2.bf16.msra.mxu0 %v2340
        %2612 = vmatprep.subr.bf16.mxu0 %v2333
        %2613 = vmatpush2.bf16.msra.mxu0 %v2332
        %2614 = vmatprep.subr.bf16.mxu0 %v2325
        %2615 = vmatpush2.bf16.msra.mxu0 %v2324
        %2616 = vmatprep.subr.bf16.mxu0 %v2317
        %2617 = vmatpush2.bf16.msra.mxu0 %v2316
        %2618 = vmatprep.mubr.bf16.mxu0 %v1735
        %2619 = vmatmul.mubr.bf16.gmra.mxu0 %v1734
        %v2620 = vpop.f32.mrf.mxu0
        %v2621 = vadd.f32 0.0, %v2620
        %v2622 = vpop.f32.mrf.mxu0
        %v2623 = vadd.f32 0.0, %v2622
        %v2624 = vpop.f32.mrf.mxu0
        %v2625 = vpop.f32.mrf.mxu0
        %2626 = vdwg.mxu0
        %2627 = vmatprep.subr.bf16.mxu0 %v2311
        %2628 = vmatpush1.bf16.msra.mxu0 %v2310
        %2629 = vmatprep.subr.bf16.mxu0 %v2303
        %2630 = vmatpush1.bf16.msra.mxu0 %v2302
        %2631 = vmatprep.subr.bf16.mxu0 %v2295
        %2632 = vmatpush1.bf16.msra.mxu0 %v2294
        %2633 = vmatprep.subr.bf16.mxu0 %v2287
        %2634 = vmatpush1.bf16.msra.mxu0 %v2286
        %2635 = vmatprep.subr.bf16.mxu0 %v2279
        %2636 = vmatpush1.bf16.msra.mxu0 %v2278
        %2637 = vmatprep.subr.bf16.mxu0 %v2271
        %2638 = vmatpush1.bf16.msra.mxu0 %v2270
        %2639 = vmatprep.subr.bf16.mxu0 %v2263
        %2640 = vmatpush1.bf16.msra.mxu0 %v2262
        %2641 = vmatprep.subr.bf16.mxu0 %v2255
        %2642 = vmatpush1.bf16.msra.mxu0 %v2254
        %2643 = vmatprep.subr.bf16.mxu0 %v2375
        %2644 = vmatpush2.bf16.msra.mxu0 %v2374
        %2645 = vmatprep.subr.bf16.mxu0 %v2367
        %2646 = vmatpush2.bf16.msra.mxu0 %v2366
        %2647 = vmatprep.subr.bf16.mxu0 %v2359
        %2648 = vmatpush2.bf16.msra.mxu0 %v2358
        %2649 = vmatprep.subr.bf16.mxu0 %v2351
        %2650 = vmatpush2.bf16.msra.mxu0 %v2350
        %2651 = vmatprep.subr.bf16.mxu0 %v2343
        %2652 = vmatpush2.bf16.msra.mxu0 %v2342
        %2653 = vmatprep.subr.bf16.mxu0 %v2335
        %2654 = vmatpush2.bf16.msra.mxu0 %v2334
        %2655 = vmatprep.subr.bf16.mxu0 %v2327
        %2656 = vmatpush2.bf16.msra.mxu0 %v2326
        %2657 = vmatprep.subr.bf16.mxu0 %v2319
        %2658 = vmatpush2.bf16.msra.mxu0 %v2318
        %2659 = vmatprep.mubr.bf16.mxu0 %v1735
        %2660 = vmatmul.mubr.bf16.gmra.mxu0 %v1734
        %v2661 = vpop.f32.mrf.mxu0
        %v2662 = vadd.f32 0.0, %v2661
        %v2663 = vpop.f32.mrf.mxu0
        %v2664 = vadd.f32 0.0, %v2663
        %v2665 = vpop.f32.mrf.mxu0
        %v2666 = vpop.f32.mrf.mxu0
        %2667 = vdwg.mxu0
        %v2668 = vxor.u32 %v2539, 2147483648
        %v2669 = vxor.u32 %v2541, 2147483648
        %v2670 = vxor.u32 %v2580, 2147483648
        %v2671 = vxor.u32 %v2582, 2147483648
        %v2672 = vmul.f32 %v2668, 1.442695
        %v2673 = vpow.pop %v2672
        %v2674 = vmul.f32 %v2669, 1.442695
        %v2675 = vpow.pop %v2674
        %v2676 = vmul.f32 %v2670, 1.442695
        %v2677 = vpow.pop %v2676
        %v2678 = vmul.f32 %v2671, 1.442695
        %v2679 = vpow.pop %v2678
        %v2680 = vadd.f32 %v2673, 1.0
        %v2681 = vadd.f32 %v2675, 1.0
        %v2682 = vadd.f32 %v2677, 1.0
        %v2683 = vadd.f32 %v2679, 1.0
        %v2684 = vrcp.pop %v2680
        %v2685 = vmul.f32 1.0, %v2684
        %v2686 = vrcp.pop %v2681
        %v2687 = vmul.f32 1.0, %v2686
        %v2688 = vrcp.pop %v2682
        %v2689 = vmul.f32 1.0, %v2688
        %v2690 = vrcp.pop %v2683
        %v2691 = vmul.f32 1.0, %v2690
        %v2692 = vmul.f32 %v2539, %v2685
        %v2693 = vmul.f32 %v2541, %v2687
        %v2694 = vmul.f32 %v2580, %v2689
        %v2695 = vmul.f32 %v2582, %v2691
        %v2696 = vmul.f32 %v2692, %v2621
        %v2697 = vmul.f32 %v2693, %v2623
        %v2698 = vmul.f32 %v2694, %v2662
        %v2699 = vmul.f32 %v2695, %v2664
        %v2700 = vpack.c.bf16 %v2696, %v2696
        %v2701 = vpack.c.bf16 %v2697, %v2697
        %v2702 = vpack.c.bf16 %v2698, %v2698
        %v2703 = vpack.c.bf16 %v2699, %v2699
        %v2704 = vld [vmem:[#allocation9] sm:$0xff]
        %v2705 = vld [vmem:[#allocation9 + $0x8] sm:$0xff]
        %v2706 = vld [vmem:[#allocation9 + $0x10] sm:$0xff]
        %v2707 = vld [vmem:[#allocation9 + $0x18] sm:$0xff]
        %v2708 = vld [vmem:[#allocation9 + $0x20] sm:$0xff]
        %v2709 = vld [vmem:[#allocation9 + $0x28] sm:$0xff]
        %v2710 = vld [vmem:[#allocation9 + $0x30] sm:$0xff]
        %v2711 = vld [vmem:[#allocation9 + $0x38] sm:$0xff]
        %v2712 = vld [vmem:[#allocation9 + $0x40] sm:$0xff]
        %v2713 = vld [vmem:[#allocation9 + $0x48] sm:$0xff]
        %v2714 = vld [vmem:[#allocation9 + $0x50] sm:$0xff]
        %v2715 = vld [vmem:[#allocation9 + $0x58] sm:$0xff]
        %v2716 = vld [vmem:[#allocation9 + $0x60] sm:$0xff]
        %v2717 = vld [vmem:[#allocation9 + $0x68] sm:$0xff]
        %v2718 = vld [vmem:[#allocation9 + $0x70] sm:$0xff]
        %v2719 = vld [vmem:[#allocation9 + $0x78] sm:$0xff]
        %v2720 = vld [vmem:[#allocation9 + $0x80] sm:$0xff]
        %v2721 = vld [vmem:[#allocation9 + $0x88] sm:$0xff]
        %v2722 = vld [vmem:[#allocation9 + $0x90] sm:$0xff]
        %v2723 = vld [vmem:[#allocation9 + $0x98] sm:$0xff]
        %v2724 = vld [vmem:[#allocation9 + $0xa0] sm:$0xff]
        %v2725 = vld [vmem:[#allocation9 + $0xa8] sm:$0xff]
        %v2726 = vld [vmem:[#allocation9 + $0xb0] sm:$0xff]
        %v2727 = vld [vmem:[#allocation9 + $0xb8] sm:$0xff]
        %v2728 = vld [vmem:[#allocation9 + $0xc0] sm:$0xff]
        %v2729 = vld [vmem:[#allocation9 + $0xc8] sm:$0xff]
        %v2730 = vld [vmem:[#allocation9 + $0xd0] sm:$0xff]
        %v2731 = vld [vmem:[#allocation9 + $0xd8] sm:$0xff]
        %v2732 = vld [vmem:[#allocation9 + $0xe0] sm:$0xff]
        %v2733 = vld [vmem:[#allocation9 + $0xe8] sm:$0xff]
        %v2734 = vld [vmem:[#allocation9 + $0xf0] sm:$0xff]
        %v2735 = vld [vmem:[#allocation9 + $0xf8] sm:$0xff]
        %v2736 = vld [vmem:[#allocation9 + $0x100] sm:$0xff]
        %v2737 = vld [vmem:[#allocation9 + $0x108] sm:$0xff]
        %v2738 = vld [vmem:[#allocation9 + $0x110] sm:$0xff]
        %v2739 = vld [vmem:[#allocation9 + $0x118] sm:$0xff]
        %v2740 = vld [vmem:[#allocation9 + $0x120] sm:$0xff]
        %v2741 = vld [vmem:[#allocation9 + $0x128] sm:$0xff]
        %v2742 = vld [vmem:[#allocation9 + $0x130] sm:$0xff]
        %v2743 = vld [vmem:[#allocation9 + $0x138] sm:$0xff]
        %v2744 = vld [vmem:[#allocation9 + $0x140] sm:$0xff]
        %v2745 = vld [vmem:[#allocation9 + $0x148] sm:$0xff]
        %v2746 = vld [vmem:[#allocation9 + $0x150] sm:$0xff]
        %v2747 = vld [vmem:[#allocation9 + $0x158] sm:$0xff]
        %v2748 = vld [vmem:[#allocation9 + $0x160] sm:$0xff]
        %v2749 = vld [vmem:[#allocation9 + $0x168] sm:$0xff]
        %v2750 = vld [vmem:[#allocation9 + $0x170] sm:$0xff]
        %v2751 = vld [vmem:[#allocation9 + $0x178] sm:$0xff]
        %v2752 = vld [vmem:[#allocation9 + $0x180] sm:$0xff]
        %v2753 = vld [vmem:[#allocation9 + $0x188] sm:$0xff]
        %v2754 = vld [vmem:[#allocation9 + $0x190] sm:$0xff]
        %v2755 = vld [vmem:[#allocation9 + $0x198] sm:$0xff]
        %v2756 = vld [vmem:[#allocation9 + $0x1a0] sm:$0xff]
        %v2757 = vld [vmem:[#allocation9 + $0x1a8] sm:$0xff]
        %v2758 = vld [vmem:[#allocation9 + $0x1b0] sm:$0xff]
        %v2759 = vld [vmem:[#allocation9 + $0x1b8] sm:$0xff]
        %v2760 = vld [vmem:[#allocation9 + $0x1c0] sm:$0xff]
        %v2761 = vld [vmem:[#allocation9 + $0x1c8] sm:$0xff]
        %v2762 = vld [vmem:[#allocation9 + $0x1d0] sm:$0xff]
        %v2763 = vld [vmem:[#allocation9 + $0x1d8] sm:$0xff]
        %v2764 = vld [vmem:[#allocation9 + $0x1e0] sm:$0xff]
        %v2765 = vld [vmem:[#allocation9 + $0x1e8] sm:$0xff]
        %v2766 = vld [vmem:[#allocation9 + $0x1f0] sm:$0xff]
        %v2767 = vld [vmem:[#allocation9 + $0x1f8] sm:$0xff]
        %v2832 = vunpack.c.l.b16 %v2704
        %v2833 = vunpack.c.h.b16 %v2704
        %v2834 = vunpack.c.l.b16 %v2705
        %v2835 = vunpack.c.h.b16 %v2705
        %v2836 = vunpack.c.l.b16 %v2706
        %v2837 = vunpack.c.h.b16 %v2706
        %v2838 = vunpack.c.l.b16 %v2707
        %v2839 = vunpack.c.h.b16 %v2707
        %v2840 = vunpack.c.l.b16 %v2708
        %v2841 = vunpack.c.h.b16 %v2708
        %v2842 = vunpack.c.l.b16 %v2709
        %v2843 = vunpack.c.h.b16 %v2709
        %v2844 = vunpack.c.l.b16 %v2710
        %v2845 = vunpack.c.h.b16 %v2710
        %v2846 = vunpack.c.l.b16 %v2711
        %v2847 = vunpack.c.h.b16 %v2711
        %v2848 = vunpack.c.l.b16 %v2712
        %v2849 = vunpack.c.h.b16 %v2712
        %v2850 = vunpack.c.l.b16 %v2713
        %v2851 = vunpack.c.h.b16 %v2713
        %v2852 = vunpack.c.l.b16 %v2714
        %v2853 = vunpack.c.h.b16 %v2714
        %v2854 = vunpack.c.l.b16 %v2715
        %v2855 = vunpack.c.h.b16 %v2715
        %v2856 = vunpack.c.l.b16 %v2716
        %v2857 = vunpack.c.h.b16 %v2716
        %v2858 = vunpack.c.l.b16 %v2717
        %v2859 = vunpack.c.h.b16 %v2717
        %v2860 = vunpack.c.l.b16 %v2718
        %v2861 = vunpack.c.h.b16 %v2718
        %v2862 = vunpack.c.l.b16 %v2719
        %v2863 = vunpack.c.h.b16 %v2719
        %v2864 = vunpack.c.l.b16 %v2720
        %v2865 = vunpack.c.h.b16 %v2720
        %v2866 = vunpack.c.l.b16 %v2721
        %v2867 = vunpack.c.h.b16 %v2721
        %v2868 = vunpack.c.l.b16 %v2722
        %v2869 = vunpack.c.h.b16 %v2722
        %v2870 = vunpack.c.l.b16 %v2723
        %v2871 = vunpack.c.h.b16 %v2723
        %v2872 = vunpack.c.l.b16 %v2724
        %v2873 = vunpack.c.h.b16 %v2724
        %v2874 = vunpack.c.l.b16 %v2725
        %v2875 = vunpack.c.h.b16 %v2725
        %v2876 = vunpack.c.l.b16 %v2726
        %v2877 = vunpack.c.h.b16 %v2726
        %v2878 = vunpack.c.l.b16 %v2727
        %v2879 = vunpack.c.h.b16 %v2727
        %v2880 = vunpack.c.l.b16 %v2728
        %v2881 = vunpack.c.h.b16 %v2728
        %v2882 = vunpack.c.l.b16 %v2729
        %v2883 = vunpack.c.h.b16 %v2729
        %v2884 = vunpack.c.l.b16 %v2730
        %v2885 = vunpack.c.h.b16 %v2730
        %v2886 = vunpack.c.l.b16 %v2731
        %v2887 = vunpack.c.h.b16 %v2731
        %v2888 = vunpack.c.l.b16 %v2732
        %v2889 = vunpack.c.h.b16 %v2732
        %v2890 = vunpack.c.l.b16 %v2733
        %v2891 = vunpack.c.h.b16 %v2733
        %v2892 = vunpack.c.l.b16 %v2734
        %v2893 = vunpack.c.h.b16 %v2734
        %v2894 = vunpack.c.l.b16 %v2735
        %v2895 = vunpack.c.h.b16 %v2735
        %v2896 = vunpack.c.l.b16 %v2736
        %v2897 = vunpack.c.h.b16 %v2736
        %v2898 = vunpack.c.l.b16 %v2737
        %v2899 = vunpack.c.h.b16 %v2737
        %v2900 = vunpack.c.l.b16 %v2738
        %v2901 = vunpack.c.h.b16 %v2738
        %v2902 = vunpack.c.l.b16 %v2739
        %v2903 = vunpack.c.h.b16 %v2739
        %v2904 = vunpack.c.l.b16 %v2740
        %v2905 = vunpack.c.h.b16 %v2740
        %v2906 = vunpack.c.l.b16 %v2741
        %v2907 = vunpack.c.h.b16 %v2741
        %v2908 = vunpack.c.l.b16 %v2742
        %v2909 = vunpack.c.h.b16 %v2742
        %v2910 = vunpack.c.l.b16 %v2743
        %v2911 = vunpack.c.h.b16 %v2743
        %v2912 = vunpack.c.l.b16 %v2744
        %v2913 = vunpack.c.h.b16 %v2744
        %v2914 = vunpack.c.l.b16 %v2745
        %v2915 = vunpack.c.h.b16 %v2745
        %v2916 = vunpack.c.l.b16 %v2746
        %v2917 = vunpack.c.h.b16 %v2746
        %v2918 = vunpack.c.l.b16 %v2747
        %v2919 = vunpack.c.h.b16 %v2747
        %v2920 = vunpack.c.l.b16 %v2748
        %v2921 = vunpack.c.h.b16 %v2748
        %v2922 = vunpack.c.l.b16 %v2749
        %v2923 = vunpack.c.h.b16 %v2749
        %v2924 = vunpack.c.l.b16 %v2750
        %v2925 = vunpack.c.h.b16 %v2750
        %v2926 = vunpack.c.l.b16 %v2751
        %v2927 = vunpack.c.h.b16 %v2751
        %v2928 = vunpack.c.l.b16 %v2752
        %v2929 = vunpack.c.h.b16 %v2752
        %v2930 = vunpack.c.l.b16 %v2753
        %v2931 = vunpack.c.h.b16 %v2753
        %v2932 = vunpack.c.l.b16 %v2754
        %v2933 = vunpack.c.h.b16 %v2754
        %v2934 = vunpack.c.l.b16 %v2755
        %v2935 = vunpack.c.h.b16 %v2755
        %v2936 = vunpack.c.l.b16 %v2756
        %v2937 = vunpack.c.h.b16 %v2756
        %v2938 = vunpack.c.l.b16 %v2757
        %v2939 = vunpack.c.h.b16 %v2757
        %v2940 = vunpack.c.l.b16 %v2758
        %v2941 = vunpack.c.h.b16 %v2758
        %v2942 = vunpack.c.l.b16 %v2759
        %v2943 = vunpack.c.h.b16 %v2759
        %v2944 = vunpack.c.l.b16 %v2760
        %v2945 = vunpack.c.h.b16 %v2760
        %v2946 = vunpack.c.l.b16 %v2761
        %v2947 = vunpack.c.h.b16 %v2761
        %v2948 = vunpack.c.l.b16 %v2762
        %v2949 = vunpack.c.h.b16 %v2762
        %v2950 = vunpack.c.l.b16 %v2763
        %v2951 = vunpack.c.h.b16 %v2763
        %v2952 = vunpack.c.l.b16 %v2764
        %v2953 = vunpack.c.h.b16 %v2764
        %v2954 = vunpack.c.l.b16 %v2765
        %v2955 = vunpack.c.h.b16 %v2765
        %v2956 = vunpack.c.l.b16 %v2766
        %v2957 = vunpack.c.h.b16 %v2766
        %v2958 = vunpack.c.l.b16 %v2767
        %v2959 = vunpack.c.h.b16 %v2767
        %v2960 = vpack.c.b16 %v2834, %v2832
        %v2961 = vpack.c.b16 %v2835, %v2833
        %v2962 = vpack.c.b16 %v2838, %v2836
        %v2963 = vpack.c.b16 %v2839, %v2837
        %v2964 = vpack.c.b16 %v2842, %v2840
        %v2965 = vpack.c.b16 %v2843, %v2841
        %v2966 = vpack.c.b16 %v2846, %v2844
        %v2967 = vpack.c.b16 %v2847, %v2845
        %v2968 = vpack.c.b16 %v2850, %v2848
        %v2969 = vpack.c.b16 %v2851, %v2849
        %v2970 = vpack.c.b16 %v2854, %v2852
        %v2971 = vpack.c.b16 %v2855, %v2853
        %v2972 = vpack.c.b16 %v2858, %v2856
        %v2973 = vpack.c.b16 %v2859, %v2857
        %v2974 = vpack.c.b16 %v2862, %v2860
        %v2975 = vpack.c.b16 %v2863, %v2861
        %v2976 = vpack.c.b16 %v2866, %v2864
        %v2977 = vpack.c.b16 %v2867, %v2865
        %v2978 = vpack.c.b16 %v2870, %v2868
        %v2979 = vpack.c.b16 %v2871, %v2869
        %v2980 = vpack.c.b16 %v2874, %v2872
        %v2981 = vpack.c.b16 %v2875, %v2873
        %v2982 = vpack.c.b16 %v2878, %v2876
        %v2983 = vpack.c.b16 %v2879, %v2877
        %v2984 = vpack.c.b16 %v2882, %v2880
        %v2985 = vpack.c.b16 %v2883, %v2881
        %v2986 = vpack.c.b16 %v2886, %v2884
        %v2987 = vpack.c.b16 %v2887, %v2885
        %v2988 = vpack.c.b16 %v2890, %v2888
        %v2989 = vpack.c.b16 %v2891, %v2889
        %v2990 = vpack.c.b16 %v2894, %v2892
        %v2991 = vpack.c.b16 %v2895, %v2893
        %v2992 = vpack.c.b16 %v2898, %v2896
        %v2993 = vpack.c.b16 %v2899, %v2897
        %v2994 = vpack.c.b16 %v2902, %v2900
        %v2995 = vpack.c.b16 %v2903, %v2901
        %v2996 = vpack.c.b16 %v2906, %v2904
        %v2997 = vpack.c.b16 %v2907, %v2905
        %v2998 = vpack.c.b16 %v2910, %v2908
        %v2999 = vpack.c.b16 %v2911, %v2909
        %v3000 = vpack.c.b16 %v2914, %v2912
        %v3001 = vpack.c.b16 %v2915, %v2913
        %v3002 = vpack.c.b16 %v2918, %v2916
        %v3003 = vpack.c.b16 %v2919, %v2917
        %v3004 = vpack.c.b16 %v2922, %v2920
        %v3005 = vpack.c.b16 %v2923, %v2921
        %v3006 = vpack.c.b16 %v2926, %v2924
        %v3007 = vpack.c.b16 %v2927, %v2925
        %v3008 = vpack.c.b16 %v2930, %v2928
        %v3009 = vpack.c.b16 %v2931, %v2929
        %v3010 = vpack.c.b16 %v2934, %v2932
        %v3011 = vpack.c.b16 %v2935, %v2933
        %v3012 = vpack.c.b16 %v2938, %v2936
        %v3013 = vpack.c.b16 %v2939, %v2937
        %v3014 = vpack.c.b16 %v2942, %v2940
        %v3015 = vpack.c.b16 %v2943, %v2941
        %v3016 = vpack.c.b16 %v2946, %v2944
        %v3017 = vpack.c.b16 %v2947, %v2945
        %v3018 = vpack.c.b16 %v2950, %v2948
        %v3019 = vpack.c.b16 %v2951, %v2949
        %v3020 = vpack.c.b16 %v2954, %v2952
        %v3021 = vpack.c.b16 %v2955, %v2953
        %v3022 = vpack.c.b16 %v2958, %v2956
        %v3023 = vpack.c.b16 %v2959, %v2957
        %3088 = vmatprep.subr.bf16.mxu0 %v2975
        %3089 = vmatpush1.bf16.msra.mxu0 %v2974
        %3090 = vmatprep.subr.bf16.mxu0 %v2973
        %3091 = vmatpush1.bf16.msra.mxu0 %v2972
        %3092 = vmatprep.subr.bf16.mxu0 %v2971
        %3093 = vmatpush1.bf16.msra.mxu0 %v2970
        %3094 = vmatprep.subr.bf16.mxu0 %v2969
        %3095 = vmatpush1.bf16.msra.mxu0 %v2968
        %3096 = vmatprep.subr.bf16.mxu0 %v2967
        %3097 = vmatpush1.bf16.msra.mxu0 %v2966
        %3098 = vmatprep.subr.bf16.mxu0 %v2965
        %3099 = vmatpush1.bf16.msra.mxu0 %v2964
        %3100 = vmatprep.subr.bf16.mxu0 %v2963
        %3101 = vmatpush1.bf16.msra.mxu0 %v2962
        %3102 = vmatprep.subr.bf16.mxu0 %v2961
        %3103 = vmatpush1.bf16.msra.mxu0 %v2960
        %3104 = vmatprep.subr.bf16.mxu0 %v2991
        %3105 = vmatpush2.bf16.msra.mxu0 %v2990
        %3106 = vmatprep.subr.bf16.mxu0 %v2989
        %3107 = vmatpush2.bf16.msra.mxu0 %v2988
        %3108 = vmatprep.subr.bf16.mxu0 %v2987
        %3109 = vmatpush2.bf16.msra.mxu0 %v2986
        %3110 = vmatprep.subr.bf16.mxu0 %v2985
        %3111 = vmatpush2.bf16.msra.mxu0 %v2984
        %3112 = vmatprep.subr.bf16.mxu0 %v2983
        %3113 = vmatpush2.bf16.msra.mxu0 %v2982
        %3114 = vmatprep.subr.bf16.mxu0 %v2981
        %3115 = vmatpush2.bf16.msra.mxu0 %v2980
        %3116 = vmatprep.subr.bf16.mxu0 %v2979
        %3117 = vmatpush2.bf16.msra.mxu0 %v2978
        %3118 = vmatprep.subr.bf16.mxu0 %v2977
        %3119 = vmatpush2.bf16.msra.mxu0 %v2976
        %3120 = vmatprep.mubr.bf16.mxu0 %v2701
        %3121 = vmatmul.mubr.bf16.gmra.mxu0 %v2700
        %v3122 = vpop.f32.mrf.mxu0
        %v3123 = vadd.f32 0.0, %v3122
        %v3124 = vpop.f32.mrf.mxu0
        %v3125 = vadd.f32 0.0, %v3124
        %v3126 = vpop.f32.mrf.mxu0
        %v3127 = vpop.f32.mrf.mxu0
        %3128 = vdwg.mxu0
        %3129 = vmatprep.subr.bf16.mxu0 %v3007
        %3130 = vmatpush1.bf16.msra.mxu0 %v3006
        %3131 = vmatprep.subr.bf16.mxu0 %v3005
        %3132 = vmatpush1.bf16.msra.mxu0 %v3004
        %3133 = vmatprep.subr.bf16.mxu0 %v3003
        %3134 = vmatpush1.bf16.msra.mxu0 %v3002
        %3135 = vmatprep.subr.bf16.mxu0 %v3001
        %3136 = vmatpush1.bf16.msra.mxu0 %v3000
        %3137 = vmatprep.subr.bf16.mxu0 %v2999
        %3138 = vmatpush1.bf16.msra.mxu0 %v2998
        %3139 = vmatprep.subr.bf16.mxu0 %v2997
        %3140 = vmatpush1.bf16.msra.mxu0 %v2996
        %3141 = vmatprep.subr.bf16.mxu0 %v2995
        %3142 = vmatpush1.bf16.msra.mxu0 %v2994
        %3143 = vmatprep.subr.bf16.mxu0 %v2993
        %3144 = vmatpush1.bf16.msra.mxu0 %v2992
        %3145 = vmatprep.subr.bf16.mxu0 %v3023
        %3146 = vmatpush2.bf16.msra.mxu0 %v3022
        %3147 = vmatprep.subr.bf16.mxu0 %v3021
        %3148 = vmatpush2.bf16.msra.mxu0 %v3020
        %3149 = vmatprep.subr.bf16.mxu0 %v3019
        %3150 = vmatpush2.bf16.msra.mxu0 %v3018
        %3151 = vmatprep.subr.bf16.mxu0 %v3017
        %3152 = vmatpush2.bf16.msra.mxu0 %v3016
        %3153 = vmatprep.subr.bf16.mxu0 %v3015
        %3154 = vmatpush2.bf16.msra.mxu0 %v3014
        %3155 = vmatprep.subr.bf16.mxu0 %v3013
        %3156 = vmatpush2.bf16.msra.mxu0 %v3012
        %3157 = vmatprep.subr.bf16.mxu0 %v3011
        %3158 = vmatpush2.bf16.msra.mxu0 %v3010
        %3159 = vmatprep.subr.bf16.mxu0 %v3009
        %3160 = vmatpush2.bf16.msra.mxu0 %v3008
        %3161 = vmatprep.mubr.bf16.mxu0 %v2703
        %3162 = vmatmul.mubr.bf16.gmra.mxu0 %v2702
        %v3163 = vpop.f32.mrf.mxu0
        %v3164 = vadd.f32 %v3123, %v3163
        %v3165 = vpop.f32.mrf.mxu0
        %v3166 = vadd.f32 %v3125, %v3165
        %v3167 = vpop.f32.mrf.mxu0
        %v3168 = vpop.f32.mrf.mxu0
        %3169 = vdwg.mxu0
        %v3170 = vadd.f32 %v1708, %v3164
        %v3171 = vadd.f32 %v1709, %v3166
        %s3172 = scalar_lea.vmem %s1, 2
        %v3173 = vld [vmem:[%s3172] sm:$0x3]
        %v3174 = vmul.f32 %v3170, %v3170
        %v3175 = vmul.f32 %v3171, %v3171
        %v3176 = vadd.f32 %v3174, %v3175
        %3177 = vadd.xlane.f32.xlu0 %v3176
        %v3178 = vpop.xlane.xlu0 %3177
        %v3179 = vmul.f32 %v3178, %v517
        %v3180 = vadd.f32 %v3179, 1e-06
        %v3181 = vrsqrt.pop %v3180
        %v3182 = vmul.f32 %v3170, %v3181
        %v3183 = vmul.f32 %v3171, %v3181
        %v3185 = vlaneseq
        %v3186 = vshrl.u32 %v3185, 7
        %v3187 = vsub.s32 0, %v3186
        %v3188 = vrot.slane %v3173, %v3187
        %v3189 = vlaneseq
        %v3190 = vshrl.u32 %v3189, 7
        %v3191 = vsub.s32 1, %v3190
        %v3192 = vrot.slane %v3173, %v3191
        %v3195 = vmul.f32 %v3182, %v3188
        %v3196 = vmul.f32 %v3183, %v3192
        %v3197 = vpack.c.bf16 %v3195, %v3195
        %v3198 = vpack.c.bf16 %v3196, %v3196
        %s3199 = scalar_lea.vmem [#allocation3], 768
        %v3200 = vld [vmem:[%s3199] sm:$0xff]
        %v3201 = vld [vmem:[%s3199 + $0x8] sm:$0xff]
        %v3202 = vld [vmem:[%s3199 + $0x10] sm:$0xff]
        %v3203 = vld [vmem:[%s3199 + $0x18] sm:$0xff]
        %v3204 = vld [vmem:[%s3199 + $0x20] sm:$0xff]
        %v3205 = vld [vmem:[%s3199 + $0x28] sm:$0xff]
        %v3206 = vld [vmem:[%s3199 + $0x30] sm:$0xff]
        %v3207 = vld [vmem:[%s3199 + $0x38] sm:$0xff]
        %v3208 = vld [vmem:[%s3199 + $0x40] sm:$0xff]
        %v3209 = vld [vmem:[%s3199 + $0x48] sm:$0xff]
        %v3210 = vld [vmem:[%s3199 + $0x50] sm:$0xff]
        %v3211 = vld [vmem:[%s3199 + $0x58] sm:$0xff]
        %v3212 = vld [vmem:[%s3199 + $0x60] sm:$0xff]
        %v3213 = vld [vmem:[%s3199 + $0x68] sm:$0xff]
        %v3214 = vld [vmem:[%s3199 + $0x70] sm:$0xff]
        %v3215 = vld [vmem:[%s3199 + $0x78] sm:$0xff]
        %v3216 = vld [vmem:[%s3199 + $0x80] sm:$0xff]
        %v3217 = vld [vmem:[%s3199 + $0x88] sm:$0xff]
        %v3218 = vld [vmem:[%s3199 + $0x90] sm:$0xff]
        %v3219 = vld [vmem:[%s3199 + $0x98] sm:$0xff]
        %v3220 = vld [vmem:[%s3199 + $0xa0] sm:$0xff]
        %v3221 = vld [vmem:[%s3199 + $0xa8] sm:$0xff]
        %v3222 = vld [vmem:[%s3199 + $0xb0] sm:$0xff]
        %v3223 = vld [vmem:[%s3199 + $0xb8] sm:$0xff]
        %v3224 = vld [vmem:[%s3199 + $0xc0] sm:$0xff]
        %v3225 = vld [vmem:[%s3199 + $0xc8] sm:$0xff]
        %v3226 = vld [vmem:[%s3199 + $0xd0] sm:$0xff]
        %v3227 = vld [vmem:[%s3199 + $0xd8] sm:$0xff]
        %v3228 = vld [vmem:[%s3199 + $0xe0] sm:$0xff]
        %v3229 = vld [vmem:[%s3199 + $0xe8] sm:$0xff]
        %v3230 = vld [vmem:[%s3199 + $0xf0] sm:$0xff]
        %v3231 = vld [vmem:[%s3199 + $0xf8] sm:$0xff]
        %v3232 = vld [vmem:[%s3199 + $0x100] sm:$0xff]
        %v3233 = vld [vmem:[%s3199 + $0x108] sm:$0xff]
        %v3234 = vld [vmem:[%s3199 + $0x110] sm:$0xff]
        %v3235 = vld [vmem:[%s3199 + $0x118] sm:$0xff]
        %v3236 = vld [vmem:[%s3199 + $0x120] sm:$0xff]
        %v3237 = vld [vmem:[%s3199 + $0x128] sm:$0xff]
        %v3238 = vld [vmem:[%s3199 + $0x130] sm:$0xff]
        %v3239 = vld [vmem:[%s3199 + $0x138] sm:$0xff]
        %v3240 = vld [vmem:[%s3199 + $0x140] sm:$0xff]
        %v3241 = vld [vmem:[%s3199 + $0x148] sm:$0xff]
        %v3242 = vld [vmem:[%s3199 + $0x150] sm:$0xff]
        %v3243 = vld [vmem:[%s3199 + $0x158] sm:$0xff]
        %v3244 = vld [vmem:[%s3199 + $0x160] sm:$0xff]
        %v3245 = vld [vmem:[%s3199 + $0x168] sm:$0xff]
        %v3246 = vld [vmem:[%s3199 + $0x170] sm:$0xff]
        %v3247 = vld [vmem:[%s3199 + $0x178] sm:$0xff]
        %v3248 = vld [vmem:[%s3199 + $0x180] sm:$0xff]
        %v3249 = vld [vmem:[%s3199 + $0x188] sm:$0xff]
        %v3250 = vld [vmem:[%s3199 + $0x190] sm:$0xff]
        %v3251 = vld [vmem:[%s3199 + $0x198] sm:$0xff]
        %v3252 = vld [vmem:[%s3199 + $0x1a0] sm:$0xff]
        %v3253 = vld [vmem:[%s3199 + $0x1a8] sm:$0xff]
        %v3254 = vld [vmem:[%s3199 + $0x1b0] sm:$0xff]
        %v3255 = vld [vmem:[%s3199 + $0x1b8] sm:$0xff]
        %v3256 = vld [vmem:[%s3199 + $0x1c0] sm:$0xff]
        %v3257 = vld [vmem:[%s3199 + $0x1c8] sm:$0xff]
        %v3258 = vld [vmem:[%s3199 + $0x1d0] sm:$0xff]
        %v3259 = vld [vmem:[%s3199 + $0x1d8] sm:$0xff]
        %v3260 = vld [vmem:[%s3199 + $0x1e0] sm:$0xff]
        %v3261 = vld [vmem:[%s3199 + $0x1e8] sm:$0xff]
        %v3262 = vld [vmem:[%s3199 + $0x1f0] sm:$0xff]
        %v3263 = vld [vmem:[%s3199 + $0x1f8] sm:$0xff]
        %v3264 = vld [vmem:[%s3199 + $0x200] sm:$0xff]
        %v3265 = vld [vmem:[%s3199 + $0x208] sm:$0xff]
        %v3266 = vld [vmem:[%s3199 + $0x210] sm:$0xff]
        %v3267 = vld [vmem:[%s3199 + $0x218] sm:$0xff]
        %v3268 = vld [vmem:[%s3199 + $0x220] sm:$0xff]
        %v3269 = vld [vmem:[%s3199 + $0x228] sm:$0xff]
        %v3270 = vld [vmem:[%s3199 + $0x230] sm:$0xff]
        %v3271 = vld [vmem:[%s3199 + $0x238] sm:$0xff]
        %v3272 = vld [vmem:[%s3199 + $0x240] sm:$0xff]
        %v3273 = vld [vmem:[%s3199 + $0x248] sm:$0xff]
        %v3274 = vld [vmem:[%s3199 + $0x250] sm:$0xff]
        %v3275 = vld [vmem:[%s3199 + $0x258] sm:$0xff]
        %v3276 = vld [vmem:[%s3199 + $0x260] sm:$0xff]
        %v3277 = vld [vmem:[%s3199 + $0x268] sm:$0xff]
        %v3278 = vld [vmem:[%s3199 + $0x270] sm:$0xff]
        %v3279 = vld [vmem:[%s3199 + $0x278] sm:$0xff]
        %v3280 = vld [vmem:[%s3199 + $0x280] sm:$0xff]
        %v3281 = vld [vmem:[%s3199 + $0x288] sm:$0xff]
        %v3282 = vld [vmem:[%s3199 + $0x290] sm:$0xff]
        %v3283 = vld [vmem:[%s3199 + $0x298] sm:$0xff]
        %v3284 = vld [vmem:[%s3199 + $0x2a0] sm:$0xff]
        %v3285 = vld [vmem:[%s3199 + $0x2a8] sm:$0xff]
        %v3286 = vld [vmem:[%s3199 + $0x2b0] sm:$0xff]
        %v3287 = vld [vmem:[%s3199 + $0x2b8] sm:$0xff]
        %v3288 = vld [vmem:[%s3199 + $0x2c0] sm:$0xff]
        %v3289 = vld [vmem:[%s3199 + $0x2c8] sm:$0xff]
        %v3290 = vld [vmem:[%s3199 + $0x2d0] sm:$0xff]
        %v3291 = vld [vmem:[%s3199 + $0x2d8] sm:$0xff]
        %v3292 = vld [vmem:[%s3199 + $0x2e0] sm:$0xff]
        %v3293 = vld [vmem:[%s3199 + $0x2e8] sm:$0xff]
        %v3294 = vld [vmem:[%s3199 + $0x2f0] sm:$0xff]
        %v3295 = vld [vmem:[%s3199 + $0x2f8] sm:$0xff]
        %v3392 = vunpack.c.l.b16 %v3200
        %v3393 = vunpack.c.h.b16 %v3200
        %v3394 = vunpack.c.l.b16 %v3201
        %v3395 = vunpack.c.h.b16 %v3201
        %v3396 = vunpack.c.l.b16 %v3202
        %v3397 = vunpack.c.h.b16 %v3202
        %v3398 = vunpack.c.l.b16 %v3203
        %v3399 = vunpack.c.h.b16 %v3203
        %v3400 = vunpack.c.l.b16 %v3204
        %v3401 = vunpack.c.h.b16 %v3204
        %v3402 = vunpack.c.l.b16 %v3205
        %v3403 = vunpack.c.h.b16 %v3205
        %v3404 = vunpack.c.l.b16 %v3206
        %v3405 = vunpack.c.h.b16 %v3206
        %v3406 = vunpack.c.l.b16 %v3207
        %v3407 = vunpack.c.h.b16 %v3207
        %v3408 = vunpack.c.l.b16 %v3208
        %v3409 = vunpack.c.h.b16 %v3208
        %v3410 = vunpack.c.l.b16 %v3209
        %v3411 = vunpack.c.h.b16 %v3209
        %v3412 = vunpack.c.l.b16 %v3210
        %v3413 = vunpack.c.h.b16 %v3210
        %v3414 = vunpack.c.l.b16 %v3211
        %v3415 = vunpack.c.h.b16 %v3211
        %v3416 = vunpack.c.l.b16 %v3212
        %v3417 = vunpack.c.h.b16 %v3212
        %v3418 = vunpack.c.l.b16 %v3213
        %v3419 = vunpack.c.h.b16 %v3213
        %v3420 = vunpack.c.l.b16 %v3214
        %v3421 = vunpack.c.h.b16 %v3214
        %v3422 = vunpack.c.l.b16 %v3215
        %v3423 = vunpack.c.h.b16 %v3215
        %v3424 = vunpack.c.l.b16 %v3216
        %v3425 = vunpack.c.h.b16 %v3216
        %v3426 = vunpack.c.l.b16 %v3217
        %v3427 = vunpack.c.h.b16 %v3217
        %v3428 = vunpack.c.l.b16 %v3218
        %v3429 = vunpack.c.h.b16 %v3218
        %v3430 = vunpack.c.l.b16 %v3219
        %v3431 = vunpack.c.h.b16 %v3219
        %v3432 = vunpack.c.l.b16 %v3220
        %v3433 = vunpack.c.h.b16 %v3220
        %v3434 = vunpack.c.l.b16 %v3221
        %v3435 = vunpack.c.h.b16 %v3221
        %v3436 = vunpack.c.l.b16 %v3222
        %v3437 = vunpack.c.h.b16 %v3222
        %v3438 = vunpack.c.l.b16 %v3223
        %v3439 = vunpack.c.h.b16 %v3223
        %v3440 = vunpack.c.l.b16 %v3224
        %v3441 = vunpack.c.h.b16 %v3224
        %v3442 = vunpack.c.l.b16 %v3225
        %v3443 = vunpack.c.h.b16 %v3225
        %v3444 = vunpack.c.l.b16 %v3226
        %v3445 = vunpack.c.h.b16 %v3226
        %v3446 = vunpack.c.l.b16 %v3227
        %v3447 = vunpack.c.h.b16 %v3227
        %v3448 = vunpack.c.l.b16 %v3228
        %v3449 = vunpack.c.h.b16 %v3228
        %v3450 = vunpack.c.l.b16 %v3229
        %v3451 = vunpack.c.h.b16 %v3229
        %v3452 = vunpack.c.l.b16 %v3230
        %v3453 = vunpack.c.h.b16 %v3230
        %v3454 = vunpack.c.l.b16 %v3231
        %v3455 = vunpack.c.h.b16 %v3231
        %v3456 = vunpack.c.l.b16 %v3232
        %v3457 = vunpack.c.h.b16 %v3232
        %v3458 = vunpack.c.l.b16 %v3233
        %v3459 = vunpack.c.h.b16 %v3233
        %v3460 = vunpack.c.l.b16 %v3234
        %v3461 = vunpack.c.h.b16 %v3234
        %v3462 = vunpack.c.l.b16 %v3235
        %v3463 = vunpack.c.h.b16 %v3235
        %v3464 = vunpack.c.l.b16 %v3236
        %v3465 = vunpack.c.h.b16 %v3236
        %v3466 = vunpack.c.l.b16 %v3237
        %v3467 = vunpack.c.h.b16 %v3237
        %v3468 = vunpack.c.l.b16 %v3238
        %v3469 = vunpack.c.h.b16 %v3238
        %v3470 = vunpack.c.l.b16 %v3239
        %v3471 = vunpack.c.h.b16 %v3239
        %v3472 = vunpack.c.l.b16 %v3240
        %v3473 = vunpack.c.h.b16 %v3240
        %v3474 = vunpack.c.l.b16 %v3241
        %v3475 = vunpack.c.h.b16 %v3241
        %v3476 = vunpack.c.l.b16 %v3242
        %v3477 = vunpack.c.h.b16 %v3242
        %v3478 = vunpack.c.l.b16 %v3243
        %v3479 = vunpack.c.h.b16 %v3243
        %v3480 = vunpack.c.l.b16 %v3244
        %v3481 = vunpack.c.h.b16 %v3244
        %v3482 = vunpack.c.l.b16 %v3245
        %v3483 = vunpack.c.h.b16 %v3245
        %v3484 = vunpack.c.l.b16 %v3246
        %v3485 = vunpack.c.h.b16 %v3246
        %v3486 = vunpack.c.l.b16 %v3247
        %v3487 = vunpack.c.h.b16 %v3247
        %v3488 = vunpack.c.l.b16 %v3248
        %v3489 = vunpack.c.h.b16 %v3248
        %v3490 = vunpack.c.l.b16 %v3249
        %v3491 = vunpack.c.h.b16 %v3249
        %v3492 = vunpack.c.l.b16 %v3250
        %v3493 = vunpack.c.h.b16 %v3250
        %v3494 = vunpack.c.l.b16 %v3251
        %v3495 = vunpack.c.h.b16 %v3251
        %v3496 = vunpack.c.l.b16 %v3252
        %v3497 = vunpack.c.h.b16 %v3252
        %v3498 = vunpack.c.l.b16 %v3253
        %v3499 = vunpack.c.h.b16 %v3253
        %v3500 = vunpack.c.l.b16 %v3254
        %v3501 = vunpack.c.h.b16 %v3254
        %v3502 = vunpack.c.l.b16 %v3255
        %v3503 = vunpack.c.h.b16 %v3255
        %v3504 = vunpack.c.l.b16 %v3256
        %v3505 = vunpack.c.h.b16 %v3256
        %v3506 = vunpack.c.l.b16 %v3257
        %v3507 = vunpack.c.h.b16 %v3257
        %v3508 = vunpack.c.l.b16 %v3258
        %v3509 = vunpack.c.h.b16 %v3258
        %v3510 = vunpack.c.l.b16 %v3259
        %v3511 = vunpack.c.h.b16 %v3259
        %v3512 = vunpack.c.l.b16 %v3260
        %v3513 = vunpack.c.h.b16 %v3260
        %v3514 = vunpack.c.l.b16 %v3261
        %v3515 = vunpack.c.h.b16 %v3261
        %v3516 = vunpack.c.l.b16 %v3262
        %v3517 = vunpack.c.h.b16 %v3262
        %v3518 = vunpack.c.l.b16 %v3263
        %v3519 = vunpack.c.h.b16 %v3263
        %v3520 = vunpack.c.l.b16 %v3264
        %v3521 = vunpack.c.h.b16 %v3264
        %v3522 = vunpack.c.l.b16 %v3265
        %v3523 = vunpack.c.h.b16 %v3265
        %v3524 = vunpack.c.l.b16 %v3266
        %v3525 = vunpack.c.h.b16 %v3266
        %v3526 = vunpack.c.l.b16 %v3267
        %v3527 = vunpack.c.h.b16 %v3267
        %v3528 = vunpack.c.l.b16 %v3268
        %v3529 = vunpack.c.h.b16 %v3268
        %v3530 = vunpack.c.l.b16 %v3269
        %v3531 = vunpack.c.h.b16 %v3269
        %v3532 = vunpack.c.l.b16 %v3270
        %v3533 = vunpack.c.h.b16 %v3270
        %v3534 = vunpack.c.l.b16 %v3271
        %v3535 = vunpack.c.h.b16 %v3271
        %v3536 = vunpack.c.l.b16 %v3272
        %v3537 = vunpack.c.h.b16 %v3272
        %v3538 = vunpack.c.l.b16 %v3273
        %v3539 = vunpack.c.h.b16 %v3273
        %v3540 = vunpack.c.l.b16 %v3274
        %v3541 = vunpack.c.h.b16 %v3274
        %v3542 = vunpack.c.l.b16 %v3275
        %v3543 = vunpack.c.h.b16 %v3275
        %v3544 = vunpack.c.l.b16 %v3276
        %v3545 = vunpack.c.h.b16 %v3276
        %v3546 = vunpack.c.l.b16 %v3277
        %v3547 = vunpack.c.h.b16 %v3277
        %v3548 = vunpack.c.l.b16 %v3278
        %v3549 = vunpack.c.h.b16 %v3278
        %v3550 = vunpack.c.l.b16 %v3279
        %v3551 = vunpack.c.h.b16 %v3279
        %v3552 = vunpack.c.l.b16 %v3280
        %v3553 = vunpack.c.h.b16 %v3280
        %v3554 = vunpack.c.l.b16 %v3281
        %v3555 = vunpack.c.h.b16 %v3281
        %v3556 = vunpack.c.l.b16 %v3282
        %v3557 = vunpack.c.h.b16 %v3282
        %v3558 = vunpack.c.l.b16 %v3283
        %v3559 = vunpack.c.h.b16 %v3283
        %v3560 = vunpack.c.l.b16 %v3284
        %v3561 = vunpack.c.h.b16 %v3284
        %v3562 = vunpack.c.l.b16 %v3285
        %v3563 = vunpack.c.h.b16 %v3285
        %v3564 = vunpack.c.l.b16 %v3286
        %v3565 = vunpack.c.h.b16 %v3286
        %v3566 = vunpack.c.l.b16 %v3287
        %v3567 = vunpack.c.h.b16 %v3287
        %v3568 = vunpack.c.l.b16 %v3288
        %v3569 = vunpack.c.h.b16 %v3288
        %v3570 = vunpack.c.l.b16 %v3289
        %v3571 = vunpack.c.h.b16 %v3289
        %v3572 = vunpack.c.l.b16 %v3290
        %v3573 = vunpack.c.h.b16 %v3290
        %v3574 = vunpack.c.l.b16 %v3291
        %v3575 = vunpack.c.h.b16 %v3291
        %v3576 = vunpack.c.l.b16 %v3292
        %v3577 = vunpack.c.h.b16 %v3292
        %v3578 = vunpack.c.l.b16 %v3293
        %v3579 = vunpack.c.h.b16 %v3293
        %v3580 = vunpack.c.l.b16 %v3294
        %v3581 = vunpack.c.h.b16 %v3294
        %v3582 = vunpack.c.l.b16 %v3295
        %v3583 = vunpack.c.h.b16 %v3295
        %v3584 = vpack.c.b16 %v3398, %v3392
        %v3585 = vpack.c.b16 %v3399, %v3393
        %v3586 = vpack.c.b16 %v3400, %v3394
        %v3587 = vpack.c.b16 %v3401, %v3395
        %v3588 = vpack.c.b16 %v3402, %v3396
        %v3589 = vpack.c.b16 %v3403, %v3397
        %v3590 = vpack.c.b16 %v3410, %v3404
        %v3591 = vpack.c.b16 %v3411, %v3405
        %v3592 = vpack.c.b16 %v3412, %v3406
        %v3593 = vpack.c.b16 %v3413, %v3407
        %v3594 = vpack.c.b16 %v3414, %v3408
        %v3595 = vpack.c.b16 %v3415, %v3409
        %v3596 = vpack.c.b16 %v3422, %v3416
        %v3597 = vpack.c.b16 %v3423, %v3417
        %v3598 = vpack.c.b16 %v3424, %v3418
        %v3599 = vpack.c.b16 %v3425, %v3419
        %v3600 = vpack.c.b16 %v3426, %v3420
        %v3601 = vpack.c.b16 %v3427, %v3421
        %v3602 = vpack.c.b16 %v3434, %v3428
        %v3603 = vpack.c.b16 %v3435, %v3429
        %v3604 = vpack.c.b16 %v3436, %v3430
        %v3605 = vpack.c.b16 %v3437, %v3431
        %v3606 = vpack.c.b16 %v3438, %v3432
        %v3607 = vpack.c.b16 %v3439, %v3433
        %v3608 = vpack.c.b16 %v3446, %v3440
        %v3609 = vpack.c.b16 %v3447, %v3441
        %v3610 = vpack.c.b16 %v3448, %v3442
        %v3611 = vpack.c.b16 %v3449, %v3443
        %v3612 = vpack.c.b16 %v3450, %v3444
        %v3613 = vpack.c.b16 %v3451, %v3445
        %v3614 = vpack.c.b16 %v3458, %v3452
        %v3615 = vpack.c.b16 %v3459, %v3453
        %v3616 = vpack.c.b16 %v3460, %v3454
        %v3617 = vpack.c.b16 %v3461, %v3455
        %v3618 = vpack.c.b16 %v3462, %v3456
        %v3619 = vpack.c.b16 %v3463, %v3457
        %v3620 = vpack.c.b16 %v3470, %v3464
        %v3621 = vpack.c.b16 %v3471, %v3465
        %v3622 = vpack.c.b16 %v3472, %v3466
        %v3623 = vpack.c.b16 %v3473, %v3467
        %v3624 = vpack.c.b16 %v3474, %v3468
        %v3625 = vpack.c.b16 %v3475, %v3469
        %v3626 = vpack.c.b16 %v3482, %v3476
        %v3627 = vpack.c.b16 %v3483, %v3477
        %v3628 = vpack.c.b16 %v3484, %v3478
        %v3629 = vpack.c.b16 %v3485, %v3479
        %v3630 = vpack.c.b16 %v3486, %v3480
        %v3631 = vpack.c.b16 %v3487, %v3481
        %v3632 = vpack.c.b16 %v3494, %v3488
        %v3633 = vpack.c.b16 %v3495, %v3489
        %v3634 = vpack.c.b16 %v3496, %v3490
        %v3635 = vpack.c.b16 %v3497, %v3491
        %v3636 = vpack.c.b16 %v3498, %v3492
        %v3637 = vpack.c.b16 %v3499, %v3493
        %v3638 = vpack.c.b16 %v3506, %v3500
        %v3639 = vpack.c.b16 %v3507, %v3501
        %v3640 = vpack.c.b16 %v3508, %v3502
        %v3641 = vpack.c.b16 %v3509, %v3503
        %v3642 = vpack.c.b16 %v3510, %v3504
        %v3643 = vpack.c.b16 %v3511, %v3505
        %v3644 = vpack.c.b16 %v3518, %v3512
        %v3645 = vpack.c.b16 %v3519, %v3513
        %v3646 = vpack.c.b16 %v3520, %v3514
        %v3647 = vpack.c.b16 %v3521, %v3515
        %v3648 = vpack.c.b16 %v3522, %v3516
        %v3649 = vpack.c.b16 %v3523, %v3517
        %v3650 = vpack.c.b16 %v3530, %v3524
        %v3651 = vpack.c.b16 %v3531, %v3525
        %v3652 = vpack.c.b16 %v3532, %v3526
        %v3653 = vpack.c.b16 %v3533, %v3527
        %v3654 = vpack.c.b16 %v3534, %v3528
        %v3655 = vpack.c.b16 %v3535, %v3529
        %v3656 = vpack.c.b16 %v3542, %v3536
        %v3657 = vpack.c.b16 %v3543, %v3537
        %v3658 = vpack.c.b16 %v3544, %v3538
        %v3659 = vpack.c.b16 %v3545, %v3539
        %v3660 = vpack.c.b16 %v3546, %v3540
        %v3661 = vpack.c.b16 %v3547, %v3541
        %v3662 = vpack.c.b16 %v3554, %v3548
        %v3663 = vpack.c.b16 %v3555, %v3549
        %v3664 = vpack.c.b16 %v3556, %v3550
        %v3665 = vpack.c.b16 %v3557, %v3551
        %v3666 = vpack.c.b16 %v3558, %v3552
        %v3667 = vpack.c.b16 %v3559, %v3553
        %v3668 = vpack.c.b16 %v3566, %v3560
        %v3669 = vpack.c.b16 %v3567, %v3561
        %v3670 = vpack.c.b16 %v3568, %v3562
        %v3671 = vpack.c.b16 %v3569, %v3563
        %v3672 = vpack.c.b16 %v3570, %v3564
        %v3673 = vpack.c.b16 %v3571, %v3565
        %v3674 = vpack.c.b16 %v3578, %v3572
        %v3675 = vpack.c.b16 %v3579, %v3573
        %v3676 = vpack.c.b16 %v3580, %v3574
        %v3677 = vpack.c.b16 %v3581, %v3575
        %v3678 = vpack.c.b16 %v3582, %v3576
        %v3679 = vpack.c.b16 %v3583, %v3577
        %3776 = vmatprep.subr.bf16.mxu0 %v3627
        %3777 = vmatpush1.bf16.msra.mxu0 %v3626
        %3778 = vmatprep.subr.bf16.mxu0 %v3621
        %3779 = vmatpush1.bf16.msra.mxu0 %v3620
        %3780 = vmatprep.subr.bf16.mxu0 %v3615
        %3781 = vmatpush1.bf16.msra.mxu0 %v3614
        %3782 = vmatprep.subr.bf16.mxu0 %v3609
        %3783 = vmatpush1.bf16.msra.mxu0 %v3608
        %3784 = vmatprep.subr.bf16.mxu0 %v3603
        %3785 = vmatpush1.bf16.msra.mxu0 %v3602
        %3786 = vmatprep.subr.bf16.mxu0 %v3597
        %3787 = vmatpush1.bf16.msra.mxu0 %v3596
        %3788 = vmatprep.subr.bf16.mxu0 %v3591
        %3789 = vmatpush1.bf16.msra.mxu0 %v3590
        %3790 = vmatprep.subr.bf16.mxu0 %v3585
        %3791 = vmatpush1.bf16.msra.mxu0 %v3584
        %3792 = vmatprep.subr.bf16.mxu0 %v3675
        %3793 = vmatpush2.bf16.msra.mxu0 %v3674
        %3794 = vmatprep.subr.bf16.mxu0 %v3669
        %3795 = vmatpush2.bf16.msra.mxu0 %v3668
        %3796 = vmatprep.subr.bf16.mxu0 %v3663
        %3797 = vmatpush2.bf16.msra.mxu0 %v3662
        %3798 = vmatprep.subr.bf16.mxu0 %v3657
        %3799 = vmatpush2.bf16.msra.mxu0 %v3656
        %3800 = vmatprep.subr.bf16.mxu0 %v3651
        %3801 = vmatpush2.bf16.msra.mxu0 %v3650
        %3802 = vmatprep.subr.bf16.mxu0 %v3645
        %3803 = vmatpush2.bf16.msra.mxu0 %v3644
        %3804 = vmatprep.subr.bf16.mxu0 %v3639
        %3805 = vmatpush2.bf16.msra.mxu0 %v3638
        %3806 = vmatprep.subr.bf16.mxu0 %v3633
        %3807 = vmatpush2.bf16.msra.mxu0 %v3632
        %3808 = vmatprep.mubr.bf16.mxu0 %v3198
        %3809 = vmatmul.mubr.bf16.gmra.mxu0 %v3197
        %v3810 = vpop.f32.mrf.mxu0
        %v3811 = vadd.f32 0.0, %v3810
        %v3812 = vpop.f32.mrf.mxu0
        %v3813 = vadd.f32 0.0, %v3812
        %v3814 = vpop.f32.mrf.mxu0
        %v3815 = vpop.f32.mrf.mxu0
        %3816 = vdwg.mxu0
        %3817 = vmatprep.subr.bf16.mxu0 %v3629
        %3818 = vmatpush1.bf16.msra.mxu0 %v3628
        %3819 = vmatprep.subr.bf16.mxu0 %v3623
        %3820 = vmatpush1.bf16.msra.mxu0 %v3622
        %3821 = vmatprep.subr.bf16.mxu0 %v3617
        %3822 = vmatpush1.bf16.msra.mxu0 %v3616
        %3823 = vmatprep.subr.bf16.mxu0 %v3611
        %3824 = vmatpush1.bf16.msra.mxu0 %v3610
        %3825 = vmatprep.subr.bf16.mxu0 %v3605
        %3826 = vmatpush1.bf16.msra.mxu0 %v3604
        %3827 = vmatprep.subr.bf16.mxu0 %v3599
        %3828 = vmatpush1.bf16.msra.mxu0 %v3598
        %3829 = vmatprep.subr.bf16.mxu0 %v3593
        %3830 = vmatpush1.bf16.msra.mxu0 %v3592
        %3831 = vmatprep.subr.bf16.mxu0 %v3587
        %3832 = vmatpush1.bf16.msra.mxu0 %v3586
        %3833 = vmatprep.subr.bf16.mxu0 %v3677
        %3834 = vmatpush2.bf16.msra.mxu0 %v3676
        %3835 = vmatprep.subr.bf16.mxu0 %v3671
        %3836 = vmatpush2.bf16.msra.mxu0 %v3670
        %3837 = vmatprep.subr.bf16.mxu0 %v3665
        %3838 = vmatpush2.bf16.msra.mxu0 %v3664
        %3839 = vmatprep.subr.bf16.mxu0 %v3659
        %3840 = vmatpush2.bf16.msra.mxu0 %v3658
        %3841 = vmatprep.subr.bf16.mxu0 %v3653
        %3842 = vmatpush2.bf16.msra.mxu0 %v3652
        %3843 = vmatprep.subr.bf16.mxu0 %v3647
        %3844 = vmatpush2.bf16.msra.mxu0 %v3646
        %3845 = vmatprep.subr.bf16.mxu0 %v3641
        %3846 = vmatpush2.bf16.msra.mxu0 %v3640
        %3847 = vmatprep.subr.bf16.mxu0 %v3635
        %3848 = vmatpush2.bf16.msra.mxu0 %v3634
        %3849 = vmatprep.mubr.bf16.mxu0 %v3198
        %3850 = vmatmul.mubr.bf16.gmra.mxu0 %v3197
        %v3851 = vpop.f32.mrf.mxu0
        %v3852 = vadd.f32 0.0, %v3851
        %v3853 = vpop.f32.mrf.mxu0
        %v3854 = vadd.f32 0.0, %v3853
        %v3855 = vpop.f32.mrf.mxu0
        %v3856 = vpop.f32.mrf.mxu0
        %3857 = vdwg.mxu0
        %3858 = vmatprep.subr.bf16.mxu0 %v3631
        %3859 = vmatpush1.bf16.msra.mxu0 %v3630
        %3860 = vmatprep.subr.bf16.mxu0 %v3625
        %3861 = vmatpush1.bf16.msra.mxu0 %v3624
        %3862 = vmatprep.subr.bf16.mxu0 %v3619
        %3863 = vmatpush1.bf16.msra.mxu0 %v3618
        %3864 = vmatprep.subr.bf16.mxu0 %v3613
        %3865 = vmatpush1.bf16.msra.mxu0 %v3612
        %3866 = vmatprep.subr.bf16.mxu0 %v3607
        %3867 = vmatpush1.bf16.msra.mxu0 %v3606
        %3868 = vmatprep.subr.bf16.mxu0 %v3601
        %3869 = vmatpush1.bf16.msra.mxu0 %v3600
        %3870 = vmatprep.subr.bf16.mxu0 %v3595
        %3871 = vmatpush1.bf16.msra.mxu0 %v3594
        %3872 = vmatprep.subr.bf16.mxu0 %v3589
        %3873 = vmatpush1.bf16.msra.mxu0 %v3588
        %3874 = vmatprep.subr.bf16.mxu0 %v3679
        %3875 = vmatpush2.bf16.msra.mxu0 %v3678
        %3876 = vmatprep.subr.bf16.mxu0 %v3673
        %3877 = vmatpush2.bf16.msra.mxu0 %v3672
        %3878 = vmatprep.subr.bf16.mxu0 %v3667
        %3879 = vmatpush2.bf16.msra.mxu0 %v3666
        %3880 = vmatprep.subr.bf16.mxu0 %v3661
        %3881 = vmatpush2.bf16.msra.mxu0 %v3660
        %3882 = vmatprep.subr.bf16.mxu0 %v3655
        %3883 = vmatpush2.bf16.msra.mxu0 %v3654
        %3884 = vmatprep.subr.bf16.mxu0 %v3649
        %3885 = vmatpush2.bf16.msra.mxu0 %v3648
        %3886 = vmatprep.subr.bf16.mxu0 %v3643
        %3887 = vmatpush2.bf16.msra.mxu0 %v3642
        %3888 = vmatprep.subr.bf16.mxu0 %v3637
        %3889 = vmatpush2.bf16.msra.mxu0 %v3636
        %3890 = vmatprep.mubr.bf16.mxu0 %v3198
        %3891 = vmatmul.mubr.bf16.gmra.mxu0 %v3197
        %v3892 = vpop.f32.mrf.mxu0
        %v3893 = vadd.f32 0.0, %v3892
        %v3894 = vpop.f32.mrf.mxu0
        %v3895 = vadd.f32 0.0, %v3894
        %v3896 = vpop.f32.mrf.mxu0
        %v3897 = vpop.f32.mrf.mxu0
        %3898 = vdwg.mxu0
        %v3899 = vmul.f32 %v3811, %v502
        %3900 = vrot.lane.b32.xlu0 %v3811, 64
        %v3901 = vpop.permute.xlu0 %3900
        %v3902 = vmul.f32 %v3901, %v503
        %v3903 = vadd.f32 %v3899, %v3902
        %v3904 = vmul.f32 %v3852, %v504
        %3905 = vrot.lane.b32.xlu0 %v3852, 64
        %v3906 = vpop.permute.xlu0 %3905
        %v3907 = vmul.f32 %v3906, %v505
        %v3908 = vadd.f32 %v3904, %v3907
        %v3909 = vpack.c.bf16 %v3903, %v3903
        %v3910 = vpack.c.bf16 %v3908, %v3908
        %3911 = vmatprep.subr.bf16.mxu0 0
        %3912 = vmatpush1.bf16.xpose.msra.mxu0 0
        %3913 = vmatprep.subr.bf16.mxu0 0
        %3914 = vmatpush1.bf16.xpose.msra.mxu0 0
        %3915 = vmatprep.subr.bf16.mxu0 0
        %3916 = vmatpush1.bf16.xpose.msra.mxu0 0
        %3917 = vmatprep.subr.bf16.mxu0 0
        %3918 = vmatpush1.bf16.xpose.msra.mxu0 0
        %3919 = vmatprep.subr.bf16.mxu0 0
        %3920 = vmatpush1.bf16.xpose.msra.mxu0 0
        %3921 = vmatprep.subr.bf16.mxu0 0
        %3922 = vmatpush1.bf16.xpose.msra.mxu0 0
        %3923 = vmatprep.subr.bf16.mxu0 0
        %3924 = vmatpush1.bf16.xpose.msra.mxu0 0
        %3925 = vmatprep.subr.bf16.mxu0 0
        %3926 = vmatpush1.bf16.xpose.msra.mxu0 %v3910
        %3927 = vmatprep.subr.bf16.mxu0 0
        %3928 = vmatpush2.bf16.xpose.msra.mxu0 0
        %3929 = vmatprep.subr.bf16.mxu0 0
        %3930 = vmatpush2.bf16.xpose.msra.mxu0 0
        %3931 = vmatprep.subr.bf16.mxu0 0
        %3932 = vmatpush2.bf16.xpose.msra.mxu0 0
        %3933 = vmatprep.subr.bf16.mxu0 0
        %3934 = vmatpush2.bf16.xpose.msra.mxu0 0
        %3935 = vmatprep.subr.bf16.mxu0 0
        %3936 = vmatpush2.bf16.xpose.msra.mxu0 0
        %3937 = vmatprep.subr.bf16.mxu0 0
        %3938 = vmatpush2.bf16.xpose.msra.mxu0 0
        %3939 = vmatprep.subr.bf16.mxu0 0
        %3940 = vmatpush2.bf16.xpose.msra.mxu0 0
        %3941 = vmatprep.subr.bf16.mxu0 0
        %3942 = vmatpush2.bf16.xpose.msra.mxu0 0
        %3943 = vmatprep.mubr.bf16.mxu0 0
        %3944 = vmatmul.mubr.bf16.gmra.mxu0 %v3909
        %v3945 = vpop.f32.mrf.mxu0
        %v3946 = vadd.f32 0.0, %v3945
        %v3947 = vpop.f32.mrf.mxu0
        %v3948 = vpop.f32.mrf.mxu0
        %v3949 = vpop.f32.mrf.mxu0
        %3950 = vdwg.mxu0
        %v3951 = vsel %vm510, %v3946, -3.4028235e+38
        %v3952 = vsel %vm1290, %v3951, -inf
        %3953 = vmax.xlane.f32.xlu0 %v3952
        %v3954 = vpop.xlane.xlu0 %3953
        %v3955 = vsub.f32 %v3951, %v3954
        %v3956 = vmul.f32 %v3955, 1.442695
        %v3957 = vpow.pop %v3956
        %v3958 = vsel %vm1290, %v3957, 0.0
        %3959 = vadd.xlane.f32.xlu0 %v3958
        %v3960 = vpop.xlane.xlu0 %3959
        %v3961 = vpack.c.bf16 %v3957, %v3957
        %v3962 = vpack.c.bf16 %v3893, %v3893
        %v3964 = vsel %vm1290, %v3961, 0
        %v3967 = vsel %vm1305, %v3962, 0
        %3969 = vmatprep.subr.bf16.mxu0 0
        %3970 = vmatpush1.bf16.msra.mxu0 0
        %3971 = vmatprep.subr.bf16.mxu0 0
        %3972 = vmatpush1.bf16.msra.mxu0 0
        %3973 = vmatprep.subr.bf16.mxu0 0
        %3974 = vmatpush1.bf16.msra.mxu0 0
        %3975 = vmatprep.subr.bf16.mxu0 0
        %3976 = vmatpush1.bf16.msra.mxu0 0
        %3977 = vmatprep.subr.bf16.mxu0 0
        %3978 = vmatpush1.bf16.msra.mxu0 0
        %3979 = vmatprep.subr.bf16.mxu0 0
        %3980 = vmatpush1.bf16.msra.mxu0 0
        %3981 = vmatprep.subr.bf16.mxu0 0
        %3982 = vmatpush1.bf16.msra.mxu0 0
        %3983 = vmatprep.subr.bf16.mxu0 0
        %3984 = vmatpush1.bf16.msra.mxu0 %v3967
        %3985 = vmatprep.subr.bf16.mxu0 0
        %3986 = vmatpush2.bf16.msra.mxu0 0
        %3987 = vmatprep.subr.bf16.mxu0 0
        %3988 = vmatpush2.bf16.msra.mxu0 0
        %3989 = vmatprep.subr.bf16.mxu0 0
        %3990 = vmatpush2.bf16.msra.mxu0 0
        %3991 = vmatprep.subr.bf16.mxu0 0
        %3992 = vmatpush2.bf16.msra.mxu0 0
        %3993 = vmatprep.subr.bf16.mxu0 0
        %3994 = vmatpush2.bf16.msra.mxu0 0
        %3995 = vmatprep.subr.bf16.mxu0 0
        %3996 = vmatpush2.bf16.msra.mxu0 0
        %3997 = vmatprep.subr.bf16.mxu0 0
        %3998 = vmatpush2.bf16.msra.mxu0 0
        %3999 = vmatprep.subr.bf16.mxu0 0
        %4000 = vmatpush2.bf16.msra.mxu0 0
        %4001 = vmatprep.mubr.bf16.mxu0 0
        %4002 = vmatmul.mubr.bf16.gmra.mxu0 %v3964
        %v4003 = vpop.f32.mrf.mxu0
        %v4004 = vadd.f32 0.0, %v4003
        %v4005 = vpop.f32.mrf.mxu0
        %v4006 = vpop.f32.mrf.mxu0
        %v4007 = vpop.f32.mrf.mxu0
        %4008 = vdwg.mxu0
        %v4009 = vrcp.pop %v3960
        %v4010 = vmul.f32 %v4004, %v4009
        %v4011 = vpack.c.bf16 %v4010, %v4010
        %4012 = vst [vmem:[#allocation2] sm:$0xf] %v4011
        %v4013 = vmul.f32 %v3813, %v502
        %4014 = vrot.lane.b32.xlu0 %v3813, 64
        %v4015 = vpop.permute.xlu0 %4014
        %v4016 = vmul.f32 %v4015, %v503
        %v4017 = vadd.f32 %v4013, %v4016
        %v4018 = vmul.f32 %v3854, %v504
        %4019 = vrot.lane.b32.xlu0 %v3854, 64
        %v4020 = vpop.permute.xlu0 %4019
        %v4021 = vmul.f32 %v4020, %v505
        %v4022 = vadd.f32 %v4018, %v4021
        %v4023 = vpack.c.bf16 %v4017, %v4017
        %v4024 = vpack.c.bf16 %v4022, %v4022
        %4025 = vmatprep.subr.bf16.mxu0 0
        %4026 = vmatpush1.bf16.xpose.msra.mxu0 0
        %4027 = vmatprep.subr.bf16.mxu0 0
        %4028 = vmatpush1.bf16.xpose.msra.mxu0 0
        %4029 = vmatprep.subr.bf16.mxu0 0
        %4030 = vmatpush1.bf16.xpose.msra.mxu0 0
        %4031 = vmatprep.subr.bf16.mxu0 0
        %4032 = vmatpush1.bf16.xpose.msra.mxu0 0
        %4033 = vmatprep.subr.bf16.mxu0 0
        %4034 = vmatpush1.bf16.xpose.msra.mxu0 0
        %4035 = vmatprep.subr.bf16.mxu0 0
        %4036 = vmatpush1.bf16.xpose.msra.mxu0 0
        %4037 = vmatprep.subr.bf16.mxu0 0
        %4038 = vmatpush1.bf16.xpose.msra.mxu0 0
        %4039 = vmatprep.subr.bf16.mxu0 0
        %4040 = vmatpush1.bf16.xpose.msra.mxu0 %v4024
        %4041 = vmatprep.subr.bf16.mxu0 0
        %4042 = vmatpush2.bf16.xpose.msra.mxu0 0
        %4043 = vmatprep.subr.bf16.mxu0 0
        %4044 = vmatpush2.bf16.xpose.msra.mxu0 0
        %4045 = vmatprep.subr.bf16.mxu0 0
        %4046 = vmatpush2.bf16.xpose.msra.mxu0 0
        %4047 = vmatprep.subr.bf16.mxu0 0
        %4048 = vmatpush2.bf16.xpose.msra.mxu0 0
        %4049 = vmatprep.subr.bf16.mxu0 0
        %4050 = vmatpush2.bf16.xpose.msra.mxu0 0
        %4051 = vmatprep.subr.bf16.mxu0 0
        %4052 = vmatpush2.bf16.xpose.msra.mxu0 0
        %4053 = vmatprep.subr.bf16.mxu0 0
        %4054 = vmatpush2.bf16.xpose.msra.mxu0 0
        %4055 = vmatprep.subr.bf16.mxu0 0
        %4056 = vmatpush2.bf16.xpose.msra.mxu0 0
        %4057 = vmatprep.mubr.bf16.mxu0 0
        %4058 = vmatmul.mubr.bf16.gmra.mxu0 %v4023
        %v4059 = vpop.f32.mrf.mxu0
        %v4060 = vadd.f32 0.0, %v4059
        %v4061 = vpop.f32.mrf.mxu0
        %v4062 = vpop.f32.mrf.mxu0
        %v4063 = vpop.f32.mrf.mxu0
        %4064 = vdwg.mxu0
        %v4065 = vsel %vm510, %v4060, -3.4028235e+38
        %v4066 = vsel %vm1290, %v4065, -inf
        %4067 = vmax.xlane.f32.xlu0 %v4066
        %v4068 = vpop.xlane.xlu0 %4067
        %v4069 = vsub.f32 %v4065, %v4068
        %v4070 = vmul.f32 %v4069, 1.442695
        %v4071 = vpow.pop %v4070
        %v4072 = vsel %vm1290, %v4071, 0.0
        %4073 = vadd.xlane.f32.xlu0 %v4072
        %v4074 = vpop.xlane.xlu0 %4073
        %v4075 = vpack.c.bf16 %v4071, %v4071
        %v4076 = vpack.c.bf16 %v3895, %v3895
        %v4078 = vsel %vm1290, %v4075, 0
        %v4081 = vsel %vm1305, %v4076, 0
        %4083 = vmatprep.subr.bf16.mxu0 0
        %4084 = vmatpush1.bf16.msra.mxu0 0
        %4085 = vmatprep.subr.bf16.mxu0 0
        %4086 = vmatpush1.bf16.msra.mxu0 0
        %4087 = vmatprep.subr.bf16.mxu0 0
        %4088 = vmatpush1.bf16.msra.mxu0 0
        %4089 = vmatprep.subr.bf16.mxu0 0
        %4090 = vmatpush1.bf16.msra.mxu0 0
        %4091 = vmatprep.subr.bf16.mxu0 0
        %4092 = vmatpush1.bf16.msra.mxu0 0
        %4093 = vmatprep.subr.bf16.mxu0 0
        %4094 = vmatpush1.bf16.msra.mxu0 0
        %4095 = vmatprep.subr.bf16.mxu0 0
        %4096 = vmatpush1.bf16.msra.mxu0 0
        %4097 = vmatprep.subr.bf16.mxu0 0
        %4098 = vmatpush1.bf16.msra.mxu0 %v4081
        %4099 = vmatprep.subr.bf16.mxu0 0
        %4100 = vmatpush2.bf16.msra.mxu0 0
        %4101 = vmatprep.subr.bf16.mxu0 0
        %4102 = vmatpush2.bf16.msra.mxu0 0
        %4103 = vmatprep.subr.bf16.mxu0 0
        %4104 = vmatpush2.bf16.msra.mxu0 0
        %4105 = vmatprep.subr.bf16.mxu0 0
        %4106 = vmatpush2.bf16.msra.mxu0 0
        %4107 = vmatprep.subr.bf16.mxu0 0
        %4108 = vmatpush2.bf16.msra.mxu0 0
        %4109 = vmatprep.subr.bf16.mxu0 0
        %4110 = vmatpush2.bf16.msra.mxu0 0
        %4111 = vmatprep.subr.bf16.mxu0 0
        %4112 = vmatpush2.bf16.msra.mxu0 0
        %4113 = vmatprep.subr.bf16.mxu0 0
        %4114 = vmatpush2.bf16.msra.mxu0 0
        %4115 = vmatprep.mubr.bf16.mxu0 0
        %4116 = vmatmul.mubr.bf16.gmra.mxu0 %v4078
        %v4117 = vpop.f32.mrf.mxu0
        %v4118 = vadd.f32 0.0, %v4117
        %v4119 = vpop.f32.mrf.mxu0
        %v4120 = vpop.f32.mrf.mxu0
        %v4121 = vpop.f32.mrf.mxu0
        %4122 = vdwg.mxu0
        %v4123 = vrcp.pop %v4074
        %v4124 = vmul.f32 %v4118, %v4123
        %v4125 = vpack.c.bf16 %v4124, %v4124
        %4126 = vst [vmem:[#allocation2 + $0x4] sm:$0xf] %v4125
        %v4127 = vld [vmem:[#allocation2] sm:$0xff]
        %s4128 = scalar_lea.vmem [#allocation6], 256
        %v4129 = vld [vmem:[%s4128] sm:$0xff]
        %v4130 = vld [vmem:[%s4128 + $0x8] sm:$0xff]
        %v4131 = vld [vmem:[%s4128 + $0x10] sm:$0xff]
        %v4132 = vld [vmem:[%s4128 + $0x18] sm:$0xff]
        %v4133 = vld [vmem:[%s4128 + $0x20] sm:$0xff]
        %v4134 = vld [vmem:[%s4128 + $0x28] sm:$0xff]
        %v4135 = vld [vmem:[%s4128 + $0x30] sm:$0xff]
        %v4136 = vld [vmem:[%s4128 + $0x38] sm:$0xff]
        %v4137 = vld [vmem:[%s4128 + $0x40] sm:$0xff]
        %v4138 = vld [vmem:[%s4128 + $0x48] sm:$0xff]
        %v4139 = vld [vmem:[%s4128 + $0x50] sm:$0xff]
        %v4140 = vld [vmem:[%s4128 + $0x58] sm:$0xff]
        %v4141 = vld [vmem:[%s4128 + $0x60] sm:$0xff]
        %v4142 = vld [vmem:[%s4128 + $0x68] sm:$0xff]
        %v4143 = vld [vmem:[%s4128 + $0x70] sm:$0xff]
        %v4144 = vld [vmem:[%s4128 + $0x78] sm:$0xff]
        %v4145 = vld [vmem:[%s4128 + $0x80] sm:$0xff]
        %v4146 = vld [vmem:[%s4128 + $0x88] sm:$0xff]
        %v4147 = vld [vmem:[%s4128 + $0x90] sm:$0xff]
        %v4148 = vld [vmem:[%s4128 + $0x98] sm:$0xff]
        %v4149 = vld [vmem:[%s4128 + $0xa0] sm:$0xff]
        %v4150 = vld [vmem:[%s4128 + $0xa8] sm:$0xff]
        %v4151 = vld [vmem:[%s4128 + $0xb0] sm:$0xff]
        %v4152 = vld [vmem:[%s4128 + $0xb8] sm:$0xff]
        %v4153 = vld [vmem:[%s4128 + $0xc0] sm:$0xff]
        %v4154 = vld [vmem:[%s4128 + $0xc8] sm:$0xff]
        %v4155 = vld [vmem:[%s4128 + $0xd0] sm:$0xff]
        %v4156 = vld [vmem:[%s4128 + $0xd8] sm:$0xff]
        %v4157 = vld [vmem:[%s4128 + $0xe0] sm:$0xff]
        %v4158 = vld [vmem:[%s4128 + $0xe8] sm:$0xff]
        %v4159 = vld [vmem:[%s4128 + $0xf0] sm:$0xff]
        %v4160 = vld [vmem:[%s4128 + $0xf8] sm:$0xff]
        %v4162 = vunpack.c.l.b16 %v4127
        %v4163 = vunpack.c.h.b16 %v4127
        %v4164 = vpack.c.b16 %v4162, %v4162
        %v4165 = vpack.c.b16 %v4163, %v4163
        %v4200 = vunpack.c.l.b16 %v4129
        %v4201 = vunpack.c.h.b16 %v4129
        %v4202 = vunpack.c.l.b16 %v4130
        %v4203 = vunpack.c.h.b16 %v4130
        %v4204 = vunpack.c.l.b16 %v4131
        %v4205 = vunpack.c.h.b16 %v4131
        %v4206 = vunpack.c.l.b16 %v4132
        %v4207 = vunpack.c.h.b16 %v4132
        %v4208 = vunpack.c.l.b16 %v4133
        %v4209 = vunpack.c.h.b16 %v4133
        %v4210 = vunpack.c.l.b16 %v4134
        %v4211 = vunpack.c.h.b16 %v4134
        %v4212 = vunpack.c.l.b16 %v4135
        %v4213 = vunpack.c.h.b16 %v4135
        %v4214 = vunpack.c.l.b16 %v4136
        %v4215 = vunpack.c.h.b16 %v4136
        %v4216 = vunpack.c.l.b16 %v4137
        %v4217 = vunpack.c.h.b16 %v4137
        %v4218 = vunpack.c.l.b16 %v4138
        %v4219 = vunpack.c.h.b16 %v4138
        %v4220 = vunpack.c.l.b16 %v4139
        %v4221 = vunpack.c.h.b16 %v4139
        %v4222 = vunpack.c.l.b16 %v4140
        %v4223 = vunpack.c.h.b16 %v4140
        %v4224 = vunpack.c.l.b16 %v4141
        %v4225 = vunpack.c.h.b16 %v4141
        %v4226 = vunpack.c.l.b16 %v4142
        %v4227 = vunpack.c.h.b16 %v4142
        %v4228 = vunpack.c.l.b16 %v4143
        %v4229 = vunpack.c.h.b16 %v4143
        %v4230 = vunpack.c.l.b16 %v4144
        %v4231 = vunpack.c.h.b16 %v4144
        %v4232 = vunpack.c.l.b16 %v4145
        %v4233 = vunpack.c.h.b16 %v4145
        %v4234 = vunpack.c.l.b16 %v4146
        %v4235 = vunpack.c.h.b16 %v4146
        %v4236 = vunpack.c.l.b16 %v4147
        %v4237 = vunpack.c.h.b16 %v4147
        %v4238 = vunpack.c.l.b16 %v4148
        %v4239 = vunpack.c.h.b16 %v4148
        %v4240 = vunpack.c.l.b16 %v4149
        %v4241 = vunpack.c.h.b16 %v4149
        %v4242 = vunpack.c.l.b16 %v4150
        %v4243 = vunpack.c.h.b16 %v4150
        %v4244 = vunpack.c.l.b16 %v4151
        %v4245 = vunpack.c.h.b16 %v4151
        %v4246 = vunpack.c.l.b16 %v4152
        %v4247 = vunpack.c.h.b16 %v4152
        %v4248 = vunpack.c.l.b16 %v4153
        %v4249 = vunpack.c.h.b16 %v4153
        %v4250 = vunpack.c.l.b16 %v4154
        %v4251 = vunpack.c.h.b16 %v4154
        %v4252 = vunpack.c.l.b16 %v4155
        %v4253 = vunpack.c.h.b16 %v4155
        %v4254 = vunpack.c.l.b16 %v4156
        %v4255 = vunpack.c.h.b16 %v4156
        %v4256 = vunpack.c.l.b16 %v4157
        %v4257 = vunpack.c.h.b16 %v4157
        %v4258 = vunpack.c.l.b16 %v4158
        %v4259 = vunpack.c.h.b16 %v4158
        %v4260 = vunpack.c.l.b16 %v4159
        %v4261 = vunpack.c.h.b16 %v4159
        %v4262 = vunpack.c.l.b16 %v4160
        %v4263 = vunpack.c.h.b16 %v4160
        %v4264 = vpack.c.b16 %v4202, %v4200
        %v4265 = vpack.c.b16 %v4203, %v4201
        %v4266 = vpack.c.b16 %v4206, %v4204
        %v4267 = vpack.c.b16 %v4207, %v4205
        %v4268 = vpack.c.b16 %v4210, %v4208
        %v4269 = vpack.c.b16 %v4211, %v4209
        %v4270 = vpack.c.b16 %v4214, %v4212
        %v4271 = vpack.c.b16 %v4215, %v4213
        %v4272 = vpack.c.b16 %v4218, %v4216
        %v4273 = vpack.c.b16 %v4219, %v4217
        %v4274 = vpack.c.b16 %v4222, %v4220
        %v4275 = vpack.c.b16 %v4223, %v4221
        %v4276 = vpack.c.b16 %v4226, %v4224
        %v4277 = vpack.c.b16 %v4227, %v4225
        %v4278 = vpack.c.b16 %v4230, %v4228
        %v4279 = vpack.c.b16 %v4231, %v4229
        %v4280 = vpack.c.b16 %v4234, %v4232
        %v4281 = vpack.c.b16 %v4235, %v4233
        %v4282 = vpack.c.b16 %v4238, %v4236
        %v4283 = vpack.c.b16 %v4239, %v4237
        %v4284 = vpack.c.b16 %v4242, %v4240
        %v4285 = vpack.c.b16 %v4243, %v4241
        %v4286 = vpack.c.b16 %v4246, %v4244
        %v4287 = vpack.c.b16 %v4247, %v4245
        %v4288 = vpack.c.b16 %v4250, %v4248
        %v4289 = vpack.c.b16 %v4251, %v4249
        %v4290 = vpack.c.b16 %v4254, %v4252
        %v4291 = vpack.c.b16 %v4255, %v4253
        %v4292 = vpack.c.b16 %v4258, %v4256
        %v4293 = vpack.c.b16 %v4259, %v4257
        %v4294 = vpack.c.b16 %v4262, %v4260
        %v4295 = vpack.c.b16 %v4263, %v4261
        %4328 = vmatprep.subr.bf16.mxu0 %v4279
        %4329 = vmatpush1.bf16.msra.mxu0 %v4278
        %4330 = vmatprep.subr.bf16.mxu0 %v4277
        %4331 = vmatpush1.bf16.msra.mxu0 %v4276
        %4332 = vmatprep.subr.bf16.mxu0 %v4275
        %4333 = vmatpush1.bf16.msra.mxu0 %v4274
        %4334 = vmatprep.subr.bf16.mxu0 %v4273
        %4335 = vmatpush1.bf16.msra.mxu0 %v4272
        %4336 = vmatprep.subr.bf16.mxu0 %v4271
        %4337 = vmatpush1.bf16.msra.mxu0 %v4270
        %4338 = vmatprep.subr.bf16.mxu0 %v4269
        %4339 = vmatpush1.bf16.msra.mxu0 %v4268
        %4340 = vmatprep.subr.bf16.mxu0 %v4267
        %4341 = vmatpush1.bf16.msra.mxu0 %v4266
        %4342 = vmatprep.subr.bf16.mxu0 %v4265
        %4343 = vmatpush1.bf16.msra.mxu0 %v4264
        %4344 = vmatprep.subr.bf16.mxu0 %v4295
        %4345 = vmatpush2.bf16.msra.mxu0 %v4294
        %4346 = vmatprep.subr.bf16.mxu0 %v4293
        %4347 = vmatpush2.bf16.msra.mxu0 %v4292
        %4348 = vmatprep.subr.bf16.mxu0 %v4291
        %4349 = vmatpush2.bf16.msra.mxu0 %v4290
        %4350 = vmatprep.subr.bf16.mxu0 %v4289
        %4351 = vmatpush2.bf16.msra.mxu0 %v4288
        %4352 = vmatprep.subr.bf16.mxu0 %v4287
        %4353 = vmatpush2.bf16.msra.mxu0 %v4286
        %4354 = vmatprep.subr.bf16.mxu0 %v4285
        %4355 = vmatpush2.bf16.msra.mxu0 %v4284
        %4356 = vmatprep.subr.bf16.mxu0 %v4283
        %4357 = vmatpush2.bf16.msra.mxu0 %v4282
        %4358 = vmatprep.subr.bf16.mxu0 %v4281
        %4359 = vmatpush2.bf16.msra.mxu0 %v4280
        %4360 = vmatprep.mubr.bf16.mxu0 %v4165
        %4361 = vmatmul.mubr.bf16.gmra.mxu0 %v4164
        %v4362 = vpop.f32.mrf.mxu0
        %v4363 = vadd.f32 0.0, %v4362
        %v4364 = vpop.f32.mrf.mxu0
        %v4365 = vadd.f32 0.0, %v4364
        %v4366 = vpop.f32.mrf.mxu0
        %v4367 = vpop.f32.mrf.mxu0
        %4368 = vdwg.mxu0
        %v4369 = vadd.f32 %v3170, %v4363
        %v4370 = vadd.f32 %v3171, %v4365
        %s4371 = scalar_lea.vmem %s2, 2
        %v4372 = vld [vmem:[%s4371] sm:$0x3]
        %v4373 = vmul.f32 %v4369, %v4369
        %v4374 = vmul.f32 %v4370, %v4370
        %v4375 = vadd.f32 %v4373, %v4374
        %4376 = vadd.xlane.f32.xlu0 %v4375
        %v4377 = vpop.xlane.xlu0 %4376
        %v4378 = vmul.f32 %v4377, %v517
        %v4379 = vadd.f32 %v4378, 1e-06
        %v4380 = vrsqrt.pop %v4379
        %v4381 = vmul.f32 %v4369, %v4380
        %v4382 = vmul.f32 %v4370, %v4380
        %v4384 = vlaneseq
        %v4385 = vshrl.u32 %v4384, 7
        %v4386 = vsub.s32 0, %v4385
        %v4387 = vrot.slane %v4372, %v4386
        %v4388 = vlaneseq
        %v4389 = vshrl.u32 %v4388, 7
        %v4390 = vsub.s32 1, %v4389
        %v4391 = vrot.slane %v4372, %v4390
        %v4394 = vmul.f32 %v4381, %v4387
        %v4395 = vmul.f32 %v4382, %v4391
        %v4396 = vpack.c.bf16 %v4394, %v4394
        %v4397 = vpack.c.bf16 %v4395, %v4395
        %s4398 = scalar_lea.vmem [#allocation8], 1024
        %v4399 = vld [vmem:[%s4398] sm:$0xff]
        %v4400 = vld [vmem:[%s4398 + $0x8] sm:$0xff]
        %v4401 = vld [vmem:[%s4398 + $0x10] sm:$0xff]
        %v4402 = vld [vmem:[%s4398 + $0x18] sm:$0xff]
        %v4403 = vld [vmem:[%s4398 + $0x20] sm:$0xff]
        %v4404 = vld [vmem:[%s4398 + $0x28] sm:$0xff]
        %v4405 = vld [vmem:[%s4398 + $0x30] sm:$0xff]
        %v4406 = vld [vmem:[%s4398 + $0x38] sm:$0xff]
        %v4407 = vld [vmem:[%s4398 + $0x40] sm:$0xff]
        %v4408 = vld [vmem:[%s4398 + $0x48] sm:$0xff]
        %v4409 = vld [vmem:[%s4398 + $0x50] sm:$0xff]
        %v4410 = vld [vmem:[%s4398 + $0x58] sm:$0xff]
        %v4411 = vld [vmem:[%s4398 + $0x60] sm:$0xff]
        %v4412 = vld [vmem:[%s4398 + $0x68] sm:$0xff]
        %v4413 = vld [vmem:[%s4398 + $0x70] sm:$0xff]
        %v4414 = vld [vmem:[%s4398 + $0x78] sm:$0xff]
        %v4415 = vld [vmem:[%s4398 + $0x80] sm:$0xff]
        %v4416 = vld [vmem:[%s4398 + $0x88] sm:$0xff]
        %v4417 = vld [vmem:[%s4398 + $0x90] sm:$0xff]
        %v4418 = vld [vmem:[%s4398 + $0x98] sm:$0xff]
        %v4419 = vld [vmem:[%s4398 + $0xa0] sm:$0xff]
        %v4420 = vld [vmem:[%s4398 + $0xa8] sm:$0xff]
        %v4421 = vld [vmem:[%s4398 + $0xb0] sm:$0xff]
        %v4422 = vld [vmem:[%s4398 + $0xb8] sm:$0xff]
        %v4423 = vld [vmem:[%s4398 + $0xc0] sm:$0xff]
        %v4424 = vld [vmem:[%s4398 + $0xc8] sm:$0xff]
        %v4425 = vld [vmem:[%s4398 + $0xd0] sm:$0xff]
        %v4426 = vld [vmem:[%s4398 + $0xd8] sm:$0xff]
        %v4427 = vld [vmem:[%s4398 + $0xe0] sm:$0xff]
        %v4428 = vld [vmem:[%s4398 + $0xe8] sm:$0xff]
        %v4429 = vld [vmem:[%s4398 + $0xf0] sm:$0xff]
        %v4430 = vld [vmem:[%s4398 + $0xf8] sm:$0xff]
        %v4431 = vld [vmem:[%s4398 + $0x100] sm:$0xff]
        %v4432 = vld [vmem:[%s4398 + $0x108] sm:$0xff]
        %v4433 = vld [vmem:[%s4398 + $0x110] sm:$0xff]
        %v4434 = vld [vmem:[%s4398 + $0x118] sm:$0xff]
        %v4435 = vld [vmem:[%s4398 + $0x120] sm:$0xff]
        %v4436 = vld [vmem:[%s4398 + $0x128] sm:$0xff]
        %v4437 = vld [vmem:[%s4398 + $0x130] sm:$0xff]
        %v4438 = vld [vmem:[%s4398 + $0x138] sm:$0xff]
        %v4439 = vld [vmem:[%s4398 + $0x140] sm:$0xff]
        %v4440 = vld [vmem:[%s4398 + $0x148] sm:$0xff]
        %v4441 = vld [vmem:[%s4398 + $0x150] sm:$0xff]
        %v4442 = vld [vmem:[%s4398 + $0x158] sm:$0xff]
        %v4443 = vld [vmem:[%s4398 + $0x160] sm:$0xff]
        %v4444 = vld [vmem:[%s4398 + $0x168] sm:$0xff]
        %v4445 = vld [vmem:[%s4398 + $0x170] sm:$0xff]
        %v4446 = vld [vmem:[%s4398 + $0x178] sm:$0xff]
        %v4447 = vld [vmem:[%s4398 + $0x180] sm:$0xff]
        %v4448 = vld [vmem:[%s4398 + $0x188] sm:$0xff]
        %v4449 = vld [vmem:[%s4398 + $0x190] sm:$0xff]
        %v4450 = vld [vmem:[%s4398 + $0x198] sm:$0xff]
        %v4451 = vld [vmem:[%s4398 + $0x1a0] sm:$0xff]
        %v4452 = vld [vmem:[%s4398 + $0x1a8] sm:$0xff]
        %v4453 = vld [vmem:[%s4398 + $0x1b0] sm:$0xff]
        %v4454 = vld [vmem:[%s4398 + $0x1b8] sm:$0xff]
        %v4455 = vld [vmem:[%s4398 + $0x1c0] sm:$0xff]
        %v4456 = vld [vmem:[%s4398 + $0x1c8] sm:$0xff]
        %v4457 = vld [vmem:[%s4398 + $0x1d0] sm:$0xff]
        %v4458 = vld [vmem:[%s4398 + $0x1d8] sm:$0xff]
        %v4459 = vld [vmem:[%s4398 + $0x1e0] sm:$0xff]
        %v4460 = vld [vmem:[%s4398 + $0x1e8] sm:$0xff]
        %v4461 = vld [vmem:[%s4398 + $0x1f0] sm:$0xff]
        %v4462 = vld [vmem:[%s4398 + $0x1f8] sm:$0xff]
        %v4463 = vld [vmem:[%s4398 + $0x200] sm:$0xff]
        %v4464 = vld [vmem:[%s4398 + $0x208] sm:$0xff]
        %v4465 = vld [vmem:[%s4398 + $0x210] sm:$0xff]
        %v4466 = vld [vmem:[%s4398 + $0x218] sm:$0xff]
        %v4467 = vld [vmem:[%s4398 + $0x220] sm:$0xff]
        %v4468 = vld [vmem:[%s4398 + $0x228] sm:$0xff]
        %v4469 = vld [vmem:[%s4398 + $0x230] sm:$0xff]
        %v4470 = vld [vmem:[%s4398 + $0x238] sm:$0xff]
        %v4471 = vld [vmem:[%s4398 + $0x240] sm:$0xff]
        %v4472 = vld [vmem:[%s4398 + $0x248] sm:$0xff]
        %v4473 = vld [vmem:[%s4398 + $0x250] sm:$0xff]
        %v4474 = vld [vmem:[%s4398 + $0x258] sm:$0xff]
        %v4475 = vld [vmem:[%s4398 + $0x260] sm:$0xff]
        %v4476 = vld [vmem:[%s4398 + $0x268] sm:$0xff]
        %v4477 = vld [vmem:[%s4398 + $0x270] sm:$0xff]
        %v4478 = vld [vmem:[%s4398 + $0x278] sm:$0xff]
        %v4479 = vld [vmem:[%s4398 + $0x280] sm:$0xff]
        %v4480 = vld [vmem:[%s4398 + $0x288] sm:$0xff]
        %v4481 = vld [vmem:[%s4398 + $0x290] sm:$0xff]
        %v4482 = vld [vmem:[%s4398 + $0x298] sm:$0xff]
        %v4483 = vld [vmem:[%s4398 + $0x2a0] sm:$0xff]
        %v4484 = vld [vmem:[%s4398 + $0x2a8] sm:$0xff]
        %v4485 = vld [vmem:[%s4398 + $0x2b0] sm:$0xff]
        %v4486 = vld [vmem:[%s4398 + $0x2b8] sm:$0xff]
        %v4487 = vld [vmem:[%s4398 + $0x2c0] sm:$0xff]
        %v4488 = vld [vmem:[%s4398 + $0x2c8] sm:$0xff]
        %v4489 = vld [vmem:[%s4398 + $0x2d0] sm:$0xff]
        %v4490 = vld [vmem:[%s4398 + $0x2d8] sm:$0xff]
        %v4491 = vld [vmem:[%s4398 + $0x2e0] sm:$0xff]
        %v4492 = vld [vmem:[%s4398 + $0x2e8] sm:$0xff]
        %v4493 = vld [vmem:[%s4398 + $0x2f0] sm:$0xff]
        %v4494 = vld [vmem:[%s4398 + $0x2f8] sm:$0xff]
        %v4495 = vld [vmem:[%s4398 + $0x300] sm:$0xff]
        %v4496 = vld [vmem:[%s4398 + $0x308] sm:$0xff]
        %v4497 = vld [vmem:[%s4398 + $0x310] sm:$0xff]
        %v4498 = vld [vmem:[%s4398 + $0x318] sm:$0xff]
        %v4499 = vld [vmem:[%s4398 + $0x320] sm:$0xff]
        %v4500 = vld [vmem:[%s4398 + $0x328] sm:$0xff]
        %v4501 = vld [vmem:[%s4398 + $0x330] sm:$0xff]
        %v4502 = vld [vmem:[%s4398 + $0x338] sm:$0xff]
        %v4503 = vld [vmem:[%s4398 + $0x340] sm:$0xff]
        %v4504 = vld [vmem:[%s4398 + $0x348] sm:$0xff]
        %v4505 = vld [vmem:[%s4398 + $0x350] sm:$0xff]
        %v4506 = vld [vmem:[%s4398 + $0x358] sm:$0xff]
        %v4507 = vld [vmem:[%s4398 + $0x360] sm:$0xff]
        %v4508 = vld [vmem:[%s4398 + $0x368] sm:$0xff]
        %v4509 = vld [vmem:[%s4398 + $0x370] sm:$0xff]
        %v4510 = vld [vmem:[%s4398 + $0x378] sm:$0xff]
        %v4511 = vld [vmem:[%s4398 + $0x380] sm:$0xff]
        %v4512 = vld [vmem:[%s4398 + $0x388] sm:$0xff]
        %v4513 = vld [vmem:[%s4398 + $0x390] sm:$0xff]
        %v4514 = vld [vmem:[%s4398 + $0x398] sm:$0xff]
        %v4515 = vld [vmem:[%s4398 + $0x3a0] sm:$0xff]
        %v4516 = vld [vmem:[%s4398 + $0x3a8] sm:$0xff]
        %v4517 = vld [vmem:[%s4398 + $0x3b0] sm:$0xff]
        %v4518 = vld [vmem:[%s4398 + $0x3b8] sm:$0xff]
        %v4519 = vld [vmem:[%s4398 + $0x3c0] sm:$0xff]
        %v4520 = vld [vmem:[%s4398 + $0x3c8] sm:$0xff]
        %v4521 = vld [vmem:[%s4398 + $0x3d0] sm:$0xff]
        %v4522 = vld [vmem:[%s4398 + $0x3d8] sm:$0xff]
        %v4523 = vld [vmem:[%s4398 + $0x3e0] sm:$0xff]
        %v4524 = vld [vmem:[%s4398 + $0x3e8] sm:$0xff]
        %v4525 = vld [vmem:[%s4398 + $0x3f0] sm:$0xff]
        %v4526 = vld [vmem:[%s4398 + $0x3f8] sm:$0xff]
        %v4655 = vunpack.c.l.b16 %v4399
        %v4656 = vunpack.c.h.b16 %v4399
        %v4657 = vunpack.c.l.b16 %v4400
        %v4658 = vunpack.c.h.b16 %v4400
        %v4659 = vunpack.c.l.b16 %v4401
        %v4660 = vunpack.c.h.b16 %v4401
        %v4661 = vunpack.c.l.b16 %v4402
        %v4662 = vunpack.c.h.b16 %v4402
        %v4663 = vunpack.c.l.b16 %v4403
        %v4664 = vunpack.c.h.b16 %v4403
        %v4665 = vunpack.c.l.b16 %v4404
        %v4666 = vunpack.c.h.b16 %v4404
        %v4667 = vunpack.c.l.b16 %v4405
        %v4668 = vunpack.c.h.b16 %v4405
        %v4669 = vunpack.c.l.b16 %v4406
        %v4670 = vunpack.c.h.b16 %v4406
        %v4671 = vunpack.c.l.b16 %v4407
        %v4672 = vunpack.c.h.b16 %v4407
        %v4673 = vunpack.c.l.b16 %v4408
        %v4674 = vunpack.c.h.b16 %v4408
        %v4675 = vunpack.c.l.b16 %v4409
        %v4676 = vunpack.c.h.b16 %v4409
        %v4677 = vunpack.c.l.b16 %v4410
        %v4678 = vunpack.c.h.b16 %v4410
        %v4679 = vunpack.c.l.b16 %v4411
        %v4680 = vunpack.c.h.b16 %v4411
        %v4681 = vunpack.c.l.b16 %v4412
        %v4682 = vunpack.c.h.b16 %v4412
        %v4683 = vunpack.c.l.b16 %v4413
        %v4684 = vunpack.c.h.b16 %v4413
        %v4685 = vunpack.c.l.b16 %v4414
        %v4686 = vunpack.c.h.b16 %v4414
        %v4687 = vunpack.c.l.b16 %v4415
        %v4688 = vunpack.c.h.b16 %v4415
        %v4689 = vunpack.c.l.b16 %v4416
        %v4690 = vunpack.c.h.b16 %v4416
        %v4691 = vunpack.c.l.b16 %v4417
        %v4692 = vunpack.c.h.b16 %v4417
        %v4693 = vunpack.c.l.b16 %v4418
        %v4694 = vunpack.c.h.b16 %v4418
        %v4695 = vunpack.c.l.b16 %v4419
        %v4696 = vunpack.c.h.b16 %v4419
        %v4697 = vunpack.c.l.b16 %v4420
        %v4698 = vunpack.c.h.b16 %v4420
        %v4699 = vunpack.c.l.b16 %v4421
        %v4700 = vunpack.c.h.b16 %v4421
        %v4701 = vunpack.c.l.b16 %v4422
        %v4702 = vunpack.c.h.b16 %v4422
        %v4703 = vunpack.c.l.b16 %v4423
        %v4704 = vunpack.c.h.b16 %v4423
        %v4705 = vunpack.c.l.b16 %v4424
        %v4706 = vunpack.c.h.b16 %v4424
        %v4707 = vunpack.c.l.b16 %v4425
        %v4708 = vunpack.c.h.b16 %v4425
        %v4709 = vunpack.c.l.b16 %v4426
        %v4710 = vunpack.c.h.b16 %v4426
        %v4711 = vunpack.c.l.b16 %v4427
        %v4712 = vunpack.c.h.b16 %v4427
        %v4713 = vunpack.c.l.b16 %v4428
        %v4714 = vunpack.c.h.b16 %v4428
        %v4715 = vunpack.c.l.b16 %v4429
        %v4716 = vunpack.c.h.b16 %v4429
        %v4717 = vunpack.c.l.b16 %v4430
        %v4718 = vunpack.c.h.b16 %v4430
        %v4719 = vunpack.c.l.b16 %v4431
        %v4720 = vunpack.c.h.b16 %v4431
        %v4721 = vunpack.c.l.b16 %v4432
        %v4722 = vunpack.c.h.b16 %v4432
        %v4723 = vunpack.c.l.b16 %v4433
        %v4724 = vunpack.c.h.b16 %v4433
        %v4725 = vunpack.c.l.b16 %v4434
        %v4726 = vunpack.c.h.b16 %v4434
        %v4727 = vunpack.c.l.b16 %v4435
        %v4728 = vunpack.c.h.b16 %v4435
        %v4729 = vunpack.c.l.b16 %v4436
        %v4730 = vunpack.c.h.b16 %v4436
        %v4731 = vunpack.c.l.b16 %v4437
        %v4732 = vunpack.c.h.b16 %v4437
        %v4733 = vunpack.c.l.b16 %v4438
        %v4734 = vunpack.c.h.b16 %v4438
        %v4735 = vunpack.c.l.b16 %v4439
        %v4736 = vunpack.c.h.b16 %v4439
        %v4737 = vunpack.c.l.b16 %v4440
        %v4738 = vunpack.c.h.b16 %v4440
        %v4739 = vunpack.c.l.b16 %v4441
        %v4740 = vunpack.c.h.b16 %v4441
        %v4741 = vunpack.c.l.b16 %v4442
        %v4742 = vunpack.c.h.b16 %v4442
        %v4743 = vunpack.c.l.b16 %v4443
        %v4744 = vunpack.c.h.b16 %v4443
        %v4745 = vunpack.c.l.b16 %v4444
        %v4746 = vunpack.c.h.b16 %v4444
        %v4747 = vunpack.c.l.b16 %v4445
        %v4748 = vunpack.c.h.b16 %v4445
        %v4749 = vunpack.c.l.b16 %v4446
        %v4750 = vunpack.c.h.b16 %v4446
        %v4751 = vunpack.c.l.b16 %v4447
        %v4752 = vunpack.c.h.b16 %v4447
        %v4753 = vunpack.c.l.b16 %v4448
        %v4754 = vunpack.c.h.b16 %v4448
        %v4755 = vunpack.c.l.b16 %v4449
        %v4756 = vunpack.c.h.b16 %v4449
        %v4757 = vunpack.c.l.b16 %v4450
        %v4758 = vunpack.c.h.b16 %v4450
        %v4759 = vunpack.c.l.b16 %v4451
        %v4760 = vunpack.c.h.b16 %v4451
        %v4761 = vunpack.c.l.b16 %v4452
        %v4762 = vunpack.c.h.b16 %v4452
        %v4763 = vunpack.c.l.b16 %v4453
        %v4764 = vunpack.c.h.b16 %v4453
        %v4765 = vunpack.c.l.b16 %v4454
        %v4766 = vunpack.c.h.b16 %v4454
        %v4767 = vunpack.c.l.b16 %v4455
        %v4768 = vunpack.c.h.b16 %v4455
        %v4769 = vunpack.c.l.b16 %v4456
        %v4770 = vunpack.c.h.b16 %v4456
        %v4771 = vunpack.c.l.b16 %v4457
        %v4772 = vunpack.c.h.b16 %v4457
        %v4773 = vunpack.c.l.b16 %v4458
        %v4774 = vunpack.c.h.b16 %v4458
        %v4775 = vunpack.c.l.b16 %v4459
        %v4776 = vunpack.c.h.b16 %v4459
        %v4777 = vunpack.c.l.b16 %v4460
        %v4778 = vunpack.c.h.b16 %v4460
        %v4779 = vunpack.c.l.b16 %v4461
        %v4780 = vunpack.c.h.b16 %v4461
        %v4781 = vunpack.c.l.b16 %v4462
        %v4782 = vunpack.c.h.b16 %v4462
        %v4783 = vunpack.c.l.b16 %v4463
        %v4784 = vunpack.c.h.b16 %v4463
        %v4785 = vunpack.c.l.b16 %v4464
        %v4786 = vunpack.c.h.b16 %v4464
        %v4787 = vunpack.c.l.b16 %v4465
        %v4788 = vunpack.c.h.b16 %v4465
        %v4789 = vunpack.c.l.b16 %v4466
        %v4790 = vunpack.c.h.b16 %v4466
        %v4791 = vunpack.c.l.b16 %v4467
        %v4792 = vunpack.c.h.b16 %v4467
        %v4793 = vunpack.c.l.b16 %v4468
        %v4794 = vunpack.c.h.b16 %v4468
        %v4795 = vunpack.c.l.b16 %v4469
        %v4796 = vunpack.c.h.b16 %v4469
        %v4797 = vunpack.c.l.b16 %v4470
        %v4798 = vunpack.c.h.b16 %v4470
        %v4799 = vunpack.c.l.b16 %v4471
        %v4800 = vunpack.c.h.b16 %v4471
        %v4801 = vunpack.c.l.b16 %v4472
        %v4802 = vunpack.c.h.b16 %v4472
        %v4803 = vunpack.c.l.b16 %v4473
        %v4804 = vunpack.c.h.b16 %v4473
        %v4805 = vunpack.c.l.b16 %v4474
        %v4806 = vunpack.c.h.b16 %v4474
        %v4807 = vunpack.c.l.b16 %v4475
        %v4808 = vunpack.c.h.b16 %v4475
        %v4809 = vunpack.c.l.b16 %v4476
        %v4810 = vunpack.c.h.b16 %v4476
        %v4811 = vunpack.c.l.b16 %v4477
        %v4812 = vunpack.c.h.b16 %v4477
        %v4813 = vunpack.c.l.b16 %v4478
        %v4814 = vunpack.c.h.b16 %v4478
        %v4815 = vunpack.c.l.b16 %v4479
        %v4816 = vunpack.c.h.b16 %v4479
        %v4817 = vunpack.c.l.b16 %v4480
        %v4818 = vunpack.c.h.b16 %v4480
        %v4819 = vunpack.c.l.b16 %v4481
        %v4820 = vunpack.c.h.b16 %v4481
        %v4821 = vunpack.c.l.b16 %v4482
        %v4822 = vunpack.c.h.b16 %v4482
        %v4823 = vunpack.c.l.b16 %v4483
        %v4824 = vunpack.c.h.b16 %v4483
        %v4825 = vunpack.c.l.b16 %v4484
        %v4826 = vunpack.c.h.b16 %v4484
        %v4827 = vunpack.c.l.b16 %v4485
        %v4828 = vunpack.c.h.b16 %v4485
        %v4829 = vunpack.c.l.b16 %v4486
        %v4830 = vunpack.c.h.b16 %v4486
        %v4831 = vunpack.c.l.b16 %v4487
        %v4832 = vunpack.c.h.b16 %v4487
        %v4833 = vunpack.c.l.b16 %v4488
        %v4834 = vunpack.c.h.b16 %v4488
        %v4835 = vunpack.c.l.b16 %v4489
        %v4836 = vunpack.c.h.b16 %v4489
        %v4837 = vunpack.c.l.b16 %v4490
        %v4838 = vunpack.c.h.b16 %v4490
        %v4839 = vunpack.c.l.b16 %v4491
        %v4840 = vunpack.c.h.b16 %v4491
        %v4841 = vunpack.c.l.b16 %v4492
        %v4842 = vunpack.c.h.b16 %v4492
        %v4843 = vunpack.c.l.b16 %v4493
        %v4844 = vunpack.c.h.b16 %v4493
        %v4845 = vunpack.c.l.b16 %v4494
        %v4846 = vunpack.c.h.b16 %v4494
        %v4847 = vunpack.c.l.b16 %v4495
        %v4848 = vunpack.c.h.b16 %v4495
        %v4849 = vunpack.c.l.b16 %v4496
        %v4850 = vunpack.c.h.b16 %v4496
        %v4851 = vunpack.c.l.b16 %v4497
        %v4852 = vunpack.c.h.b16 %v4497
        %v4853 = vunpack.c.l.b16 %v4498
        %v4854 = vunpack.c.h.b16 %v4498
        %v4855 = vunpack.c.l.b16 %v4499
        %v4856 = vunpack.c.h.b16 %v4499
        %v4857 = vunpack.c.l.b16 %v4500
        %v4858 = vunpack.c.h.b16 %v4500
        %v4859 = vunpack.c.l.b16 %v4501
        %v4860 = vunpack.c.h.b16 %v4501
        %v4861 = vunpack.c.l.b16 %v4502
        %v4862 = vunpack.c.h.b16 %v4502
        %v4863 = vunpack.c.l.b16 %v4503
        %v4864 = vunpack.c.h.b16 %v4503
        %v4865 = vunpack.c.l.b16 %v4504
        %v4866 = vunpack.c.h.b16 %v4504
        %v4867 = vunpack.c.l.b16 %v4505
        %v4868 = vunpack.c.h.b16 %v4505
        %v4869 = vunpack.c.l.b16 %v4506
        %v4870 = vunpack.c.h.b16 %v4506
        %v4871 = vunpack.c.l.b16 %v4507
        %v4872 = vunpack.c.h.b16 %v4507
        %v4873 = vunpack.c.l.b16 %v4508
        %v4874 = vunpack.c.h.b16 %v4508
        %v4875 = vunpack.c.l.b16 %v4509
        %v4876 = vunpack.c.h.b16 %v4509
        %v4877 = vunpack.c.l.b16 %v4510
        %v4878 = vunpack.c.h.b16 %v4510
        %v4879 = vunpack.c.l.b16 %v4511
        %v4880 = vunpack.c.h.b16 %v4511
        %v4881 = vunpack.c.l.b16 %v4512
        %v4882 = vunpack.c.h.b16 %v4512
        %v4883 = vunpack.c.l.b16 %v4513
        %v4884 = vunpack.c.h.b16 %v4513
        %v4885 = vunpack.c.l.b16 %v4514
        %v4886 = vunpack.c.h.b16 %v4514
        %v4887 = vunpack.c.l.b16 %v4515
        %v4888 = vunpack.c.h.b16 %v4515
        %v4889 = vunpack.c.l.b16 %v4516
        %v4890 = vunpack.c.h.b16 %v4516
        %v4891 = vunpack.c.l.b16 %v4517
        %v4892 = vunpack.c.h.b16 %v4517
        %v4893 = vunpack.c.l.b16 %v4518
        %v4894 = vunpack.c.h.b16 %v4518
        %v4895 = vunpack.c.l.b16 %v4519
        %v4896 = vunpack.c.h.b16 %v4519
        %v4897 = vunpack.c.l.b16 %v4520
        %v4898 = vunpack.c.h.b16 %v4520
        %v4899 = vunpack.c.l.b16 %v4521
        %v4900 = vunpack.c.h.b16 %v4521
        %v4901 = vunpack.c.l.b16 %v4522
        %v4902 = vunpack.c.h.b16 %v4522
        %v4903 = vunpack.c.l.b16 %v4523
        %v4904 = vunpack.c.h.b16 %v4523
        %v4905 = vunpack.c.l.b16 %v4524
        %v4906 = vunpack.c.h.b16 %v4524
        %v4907 = vunpack.c.l.b16 %v4525
        %v4908 = vunpack.c.h.b16 %v4525
        %v4909 = vunpack.c.l.b16 %v4526
        %v4910 = vunpack.c.h.b16 %v4526
        %v4911 = vpack.c.b16 %v4663, %v4655
        %v4912 = vpack.c.b16 %v4664, %v4656
        %v4913 = vpack.c.b16 %v4665, %v4657
        %v4914 = vpack.c.b16 %v4666, %v4658
        %v4915 = vpack.c.b16 %v4667, %v4659
        %v4916 = vpack.c.b16 %v4668, %v4660
        %v4917 = vpack.c.b16 %v4669, %v4661
        %v4918 = vpack.c.b16 %v4670, %v4662
        %v4919 = vpack.c.b16 %v4679, %v4671
        %v4920 = vpack.c.b16 %v4680, %v4672
        %v4921 = vpack.c.b16 %v4681, %v4673
        %v4922 = vpack.c.b16 %v4682, %v4674
        %v4923 = vpack.c.b16 %v4683, %v4675
        %v4924 = vpack.c.b16 %v4684, %v4676
        %v4925 = vpack.c.b16 %v4685, %v4677
        %v4926 = vpack.c.b16 %v4686, %v4678
        %v4927 = vpack.c.b16 %v4695, %v4687
        %v4928 = vpack.c.b16 %v4696, %v4688
        %v4929 = vpack.c.b16 %v4697, %v4689
        %v4930 = vpack.c.b16 %v4698, %v4690
        %v4931 = vpack.c.b16 %v4699, %v4691
        %v4932 = vpack.c.b16 %v4700, %v4692
        %v4933 = vpack.c.b16 %v4701, %v4693
        %v4934 = vpack.c.b16 %v4702, %v4694
        %v4935 = vpack.c.b16 %v4711, %v4703
        %v4936 = vpack.c.b16 %v4712, %v4704
        %v4937 = vpack.c.b16 %v4713, %v4705
        %v4938 = vpack.c.b16 %v4714, %v4706
        %v4939 = vpack.c.b16 %v4715, %v4707
        %v4940 = vpack.c.b16 %v4716, %v4708
        %v4941 = vpack.c.b16 %v4717, %v4709
        %v4942 = vpack.c.b16 %v4718, %v4710
        %v4943 = vpack.c.b16 %v4727, %v4719
        %v4944 = vpack.c.b16 %v4728, %v4720
        %v4945 = vpack.c.b16 %v4729, %v4721
        %v4946 = vpack.c.b16 %v4730, %v4722
        %v4947 = vpack.c.b16 %v4731, %v4723
        %v4948 = vpack.c.b16 %v4732, %v4724
        %v4949 = vpack.c.b16 %v4733, %v4725
        %v4950 = vpack.c.b16 %v4734, %v4726
        %v4951 = vpack.c.b16 %v4743, %v4735
        %v4952 = vpack.c.b16 %v4744, %v4736
        %v4953 = vpack.c.b16 %v4745, %v4737
        %v4954 = vpack.c.b16 %v4746, %v4738
        %v4955 = vpack.c.b16 %v4747, %v4739
        %v4956 = vpack.c.b16 %v4748, %v4740
        %v4957 = vpack.c.b16 %v4749, %v4741
        %v4958 = vpack.c.b16 %v4750, %v4742
        %v4959 = vpack.c.b16 %v4759, %v4751
        %v4960 = vpack.c.b16 %v4760, %v4752
        %v4961 = vpack.c.b16 %v4761, %v4753
        %v4962 = vpack.c.b16 %v4762, %v4754
        %v4963 = vpack.c.b16 %v4763, %v4755
        %v4964 = vpack.c.b16 %v4764, %v4756
        %v4965 = vpack.c.b16 %v4765, %v4757
        %v4966 = vpack.c.b16 %v4766, %v4758
        %v4967 = vpack.c.b16 %v4775, %v4767
        %v4968 = vpack.c.b16 %v4776, %v4768
        %v4969 = vpack.c.b16 %v4777, %v4769
        %v4970 = vpack.c.b16 %v4778, %v4770
        %v4971 = vpack.c.b16 %v4779, %v4771
        %v4972 = vpack.c.b16 %v4780, %v4772
        %v4973 = vpack.c.b16 %v4781, %v4773
        %v4974 = vpack.c.b16 %v4782, %v4774
        %v4975 = vpack.c.b16 %v4791, %v4783
        %v4976 = vpack.c.b16 %v4792, %v4784
        %v4977 = vpack.c.b16 %v4793, %v4785
        %v4978 = vpack.c.b16 %v4794, %v4786
        %v4979 = vpack.c.b16 %v4795, %v4787
        %v4980 = vpack.c.b16 %v4796, %v4788
        %v4981 = vpack.c.b16 %v4797, %v4789
        %v4982 = vpack.c.b16 %v4798, %v4790
        %v4983 = vpack.c.b16 %v4807, %v4799
        %v4984 = vpack.c.b16 %v4808, %v4800
        %v4985 = vpack.c.b16 %v4809, %v4801
        %v4986 = vpack.c.b16 %v4810, %v4802
        %v4987 = vpack.c.b16 %v4811, %v4803
        %v4988 = vpack.c.b16 %v4812, %v4804
        %v4989 = vpack.c.b16 %v4813, %v4805
        %v4990 = vpack.c.b16 %v4814, %v4806
        %v4991 = vpack.c.b16 %v4823, %v4815
        %v4992 = vpack.c.b16 %v4824, %v4816
        %v4993 = vpack.c.b16 %v4825, %v4817
        %v4994 = vpack.c.b16 %v4826, %v4818
        %v4995 = vpack.c.b16 %v4827, %v4819
        %v4996 = vpack.c.b16 %v4828, %v4820
        %v4997 = vpack.c.b16 %v4829, %v4821
        %v4998 = vpack.c.b16 %v4830, %v4822
        %v4999 = vpack.c.b16 %v4839, %v4831
        %v5000 = vpack.c.b16 %v4840, %v4832
        %v5001 = vpack.c.b16 %v4841, %v4833
        %v5002 = vpack.c.b16 %v4842, %v4834
        %v5003 = vpack.c.b16 %v4843, %v4835
        %v5004 = vpack.c.b16 %v4844, %v4836
        %v5005 = vpack.c.b16 %v4845, %v4837
        %v5006 = vpack.c.b16 %v4846, %v4838
        %v5007 = vpack.c.b16 %v4855, %v4847
        %v5008 = vpack.c.b16 %v4856, %v4848
        %v5009 = vpack.c.b16 %v4857, %v4849
        %v5010 = vpack.c.b16 %v4858, %v4850
        %v5011 = vpack.c.b16 %v4859, %v4851
        %v5012 = vpack.c.b16 %v4860, %v4852
        %v5013 = vpack.c.b16 %v4861, %v4853
        %v5014 = vpack.c.b16 %v4862, %v4854
        %v5015 = vpack.c.b16 %v4871, %v4863
        %v5016 = vpack.c.b16 %v4872, %v4864
        %v5017 = vpack.c.b16 %v4873, %v4865
        %v5018 = vpack.c.b16 %v4874, %v4866
        %v5019 = vpack.c.b16 %v4875, %v4867
        %v5020 = vpack.c.b16 %v4876, %v4868
        %v5021 = vpack.c.b16 %v4877, %v4869
        %v5022 = vpack.c.b16 %v4878, %v4870
        %v5023 = vpack.c.b16 %v4887, %v4879
        %v5024 = vpack.c.b16 %v4888, %v4880
        %v5025 = vpack.c.b16 %v4889, %v4881
        %v5026 = vpack.c.b16 %v4890, %v4882
        %v5027 = vpack.c.b16 %v4891, %v4883
        %v5028 = vpack.c.b16 %v4892, %v4884
        %v5029 = vpack.c.b16 %v4893, %v4885
        %v5030 = vpack.c.b16 %v4894, %v4886
        %v5031 = vpack.c.b16 %v4903, %v4895
        %v5032 = vpack.c.b16 %v4904, %v4896
        %v5033 = vpack.c.b16 %v4905, %v4897
        %v5034 = vpack.c.b16 %v4906, %v4898
        %v5035 = vpack.c.b16 %v4907, %v4899
        %v5036 = vpack.c.b16 %v4908, %v4900
        %v5037 = vpack.c.b16 %v4909, %v4901
        %v5038 = vpack.c.b16 %v4910, %v4902
        %5167 = vmatprep.subr.bf16.mxu0 %v4968
        %5168 = vmatpush1.bf16.msra.mxu0 %v4967
        %5169 = vmatprep.subr.bf16.mxu0 %v4960
        %5170 = vmatpush1.bf16.msra.mxu0 %v4959
        %5171 = vmatprep.subr.bf16.mxu0 %v4952
        %5172 = vmatpush1.bf16.msra.mxu0 %v4951
        %5173 = vmatprep.subr.bf16.mxu0 %v4944
        %5174 = vmatpush1.bf16.msra.mxu0 %v4943
        %5175 = vmatprep.subr.bf16.mxu0 %v4936
        %5176 = vmatpush1.bf16.msra.mxu0 %v4935
        %5177 = vmatprep.subr.bf16.mxu0 %v4928
        %5178 = vmatpush1.bf16.msra.mxu0 %v4927
        %5179 = vmatprep.subr.bf16.mxu0 %v4920
        %5180 = vmatpush1.bf16.msra.mxu0 %v4919
        %5181 = vmatprep.subr.bf16.mxu0 %v4912
        %5182 = vmatpush1.bf16.msra.mxu0 %v4911
        %5183 = vmatprep.subr.bf16.mxu0 %v5032
        %5184 = vmatpush2.bf16.msra.mxu0 %v5031
        %5185 = vmatprep.subr.bf16.mxu0 %v5024
        %5186 = vmatpush2.bf16.msra.mxu0 %v5023
        %5187 = vmatprep.subr.bf16.mxu0 %v5016
        %5188 = vmatpush2.bf16.msra.mxu0 %v5015
        %5189 = vmatprep.subr.bf16.mxu0 %v5008
        %5190 = vmatpush2.bf16.msra.mxu0 %v5007
        %5191 = vmatprep.subr.bf16.mxu0 %v5000
        %5192 = vmatpush2.bf16.msra.mxu0 %v4999
        %5193 = vmatprep.subr.bf16.mxu0 %v4992
        %5194 = vmatpush2.bf16.msra.mxu0 %v4991
        %5195 = vmatprep.subr.bf16.mxu0 %v4984
        %5196 = vmatpush2.bf16.msra.mxu0 %v4983
        %5197 = vmatprep.subr.bf16.mxu0 %v4976
        %5198 = vmatpush2.bf16.msra.mxu0 %v4975
        %5199 = vmatprep.mubr.bf16.mxu0 %v4397
        %5200 = vmatmul.mubr.bf16.gmra.mxu0 %v4396
        %v5201 = vpop.f32.mrf.mxu0
        %v5202 = vadd.f32 0.0, %v5201
        %v5203 = vpop.f32.mrf.mxu0
        %v5204 = vadd.f32 0.0, %v5203
        %v5205 = vpop.f32.mrf.mxu0
        %v5206 = vpop.f32.mrf.mxu0
        %5207 = vdwg.mxu0
        %5208 = vmatprep.subr.bf16.mxu0 %v4970
        %5209 = vmatpush1.bf16.msra.mxu0 %v4969
        %5210 = vmatprep.subr.bf16.mxu0 %v4962
        %5211 = vmatpush1.bf16.msra.mxu0 %v4961
        %5212 = vmatprep.subr.bf16.mxu0 %v4954
        %5213 = vmatpush1.bf16.msra.mxu0 %v4953
        %5214 = vmatprep.subr.bf16.mxu0 %v4946
        %5215 = vmatpush1.bf16.msra.mxu0 %v4945
        %5216 = vmatprep.subr.bf16.mxu0 %v4938
        %5217 = vmatpush1.bf16.msra.mxu0 %v4937
        %5218 = vmatprep.subr.bf16.mxu0 %v4930
        %5219 = vmatpush1.bf16.msra.mxu0 %v4929
        %5220 = vmatprep.subr.bf16.mxu0 %v4922
        %5221 = vmatpush1.bf16.msra.mxu0 %v4921
        %5222 = vmatprep.subr.bf16.mxu0 %v4914
        %5223 = vmatpush1.bf16.msra.mxu0 %v4913
        %5224 = vmatprep.subr.bf16.mxu0 %v5034
        %5225 = vmatpush2.bf16.msra.mxu0 %v5033
        %5226 = vmatprep.subr.bf16.mxu0 %v5026
        %5227 = vmatpush2.bf16.msra.mxu0 %v5025
        %5228 = vmatprep.subr.bf16.mxu0 %v5018
        %5229 = vmatpush2.bf16.msra.mxu0 %v5017
        %5230 = vmatprep.subr.bf16.mxu0 %v5010
        %5231 = vmatpush2.bf16.msra.mxu0 %v5009
        %5232 = vmatprep.subr.bf16.mxu0 %v5002
        %5233 = vmatpush2.bf16.msra.mxu0 %v5001
        %5234 = vmatprep.subr.bf16.mxu0 %v4994
        %5235 = vmatpush2.bf16.msra.mxu0 %v4993
        %5236 = vmatprep.subr.bf16.mxu0 %v4986
        %5237 = vmatpush2.bf16.msra.mxu0 %v4985
        %5238 = vmatprep.subr.bf16.mxu0 %v4978
        %5239 = vmatpush2.bf16.msra.mxu0 %v4977
        %5240 = vmatprep.mubr.bf16.mxu0 %v4397
        %5241 = vmatmul.mubr.bf16.gmra.mxu0 %v4396
        %v5242 = vpop.f32.mrf.mxu0
        %v5243 = vadd.f32 0.0, %v5242
        %v5244 = vpop.f32.mrf.mxu0
        %v5245 = vadd.f32 0.0, %v5244
        %v5246 = vpop.f32.mrf.mxu0
        %v5247 = vpop.f32.mrf.mxu0
        %5248 = vdwg.mxu0
        %5249 = vmatprep.subr.bf16.mxu0 %v4972
        %5250 = vmatpush1.bf16.msra.mxu0 %v4971
        %5251 = vmatprep.subr.bf16.mxu0 %v4964
        %5252 = vmatpush1.bf16.msra.mxu0 %v4963
        %5253 = vmatprep.subr.bf16.mxu0 %v4956
        %5254 = vmatpush1.bf16.msra.mxu0 %v4955
        %5255 = vmatprep.subr.bf16.mxu0 %v4948
        %5256 = vmatpush1.bf16.msra.mxu0 %v4947
        %5257 = vmatprep.subr.bf16.mxu0 %v4940
        %5258 = vmatpush1.bf16.msra.mxu0 %v4939
        %5259 = vmatprep.subr.bf16.mxu0 %v4932
        %5260 = vmatpush1.bf16.msra.mxu0 %v4931
        %5261 = vmatprep.subr.bf16.mxu0 %v4924
        %5262 = vmatpush1.bf16.msra.mxu0 %v4923
        %5263 = vmatprep.subr.bf16.mxu0 %v4916
        %5264 = vmatpush1.bf16.msra.mxu0 %v4915
        %5265 = vmatprep.subr.bf16.mxu0 %v5036
        %5266 = vmatpush2.bf16.msra.mxu0 %v5035
        %5267 = vmatprep.subr.bf16.mxu0 %v5028
        %5268 = vmatpush2.bf16.msra.mxu0 %v5027
        %5269 = vmatprep.subr.bf16.mxu0 %v5020
        %5270 = vmatpush2.bf16.msra.mxu0 %v5019
        %5271 = vmatprep.subr.bf16.mxu0 %v5012
        %5272 = vmatpush2.bf16.msra.mxu0 %v5011
        %5273 = vmatprep.subr.bf16.mxu0 %v5004
        %5274 = vmatpush2.bf16.msra.mxu0 %v5003
        %5275 = vmatprep.subr.bf16.mxu0 %v4996
        %5276 = vmatpush2.bf16.msra.mxu0 %v4995
        %5277 = vmatprep.subr.bf16.mxu0 %v4988
        %5278 = vmatpush2.bf16.msra.mxu0 %v4987
        %5279 = vmatprep.subr.bf16.mxu0 %v4980
        %5280 = vmatpush2.bf16.msra.mxu0 %v4979
        %5281 = vmatprep.mubr.bf16.mxu0 %v4397
        %5282 = vmatmul.mubr.bf16.gmra.mxu0 %v4396
        %v5283 = vpop.f32.mrf.mxu0
        %v5284 = vadd.f32 0.0, %v5283
        %v5285 = vpop.f32.mrf.mxu0
        %v5286 = vadd.f32 0.0, %v5285
        %v5287 = vpop.f32.mrf.mxu0
        %v5288 = vpop.f32.mrf.mxu0
        %5289 = vdwg.mxu0
        %5290 = vmatprep.subr.bf16.mxu0 %v4974
        %5291 = vmatpush1.bf16.msra.mxu0 %v4973
        %5292 = vmatprep.subr.bf16.mxu0 %v4966
        %5293 = vmatpush1.bf16.msra.mxu0 %v4965
        %5294 = vmatprep.subr.bf16.mxu0 %v4958
        %5295 = vmatpush1.bf16.msra.mxu0 %v4957
        %5296 = vmatprep.subr.bf16.mxu0 %v4950
        %5297 = vmatpush1.bf16.msra.mxu0 %v4949
        %5298 = vmatprep.subr.bf16.mxu0 %v4942
        %5299 = vmatpush1.bf16.msra.mxu0 %v4941
        %5300 = vmatprep.subr.bf16.mxu0 %v4934
        %5301 = vmatpush1.bf16.msra.mxu0 %v4933
        %5302 = vmatprep.subr.bf16.mxu0 %v4926
        %5303 = vmatpush1.bf16.msra.mxu0 %v4925
        %5304 = vmatprep.subr.bf16.mxu0 %v4918
        %5305 = vmatpush1.bf16.msra.mxu0 %v4917
        %5306 = vmatprep.subr.bf16.mxu0 %v5038
        %5307 = vmatpush2.bf16.msra.mxu0 %v5037
        %5308 = vmatprep.subr.bf16.mxu0 %v5030
        %5309 = vmatpush2.bf16.msra.mxu0 %v5029
        %5310 = vmatprep.subr.bf16.mxu0 %v5022
        %5311 = vmatpush2.bf16.msra.mxu0 %v5021
        %5312 = vmatprep.subr.bf16.mxu0 %v5014
        %5313 = vmatpush2.bf16.msra.mxu0 %v5013
        %5314 = vmatprep.subr.bf16.mxu0 %v5006
        %5315 = vmatpush2.bf16.msra.mxu0 %v5005
        %5316 = vmatprep.subr.bf16.mxu0 %v4998
        %5317 = vmatpush2.bf16.msra.mxu0 %v4997
        %5318 = vmatprep.subr.bf16.mxu0 %v4990
        %5319 = vmatpush2.bf16.msra.mxu0 %v4989
        %5320 = vmatprep.subr.bf16.mxu0 %v4982
        %5321 = vmatpush2.bf16.msra.mxu0 %v4981
        %5322 = vmatprep.mubr.bf16.mxu0 %v4397
        %5323 = vmatmul.mubr.bf16.gmra.mxu0 %v4396
        %v5324 = vpop.f32.mrf.mxu0
        %v5325 = vadd.f32 0.0, %v5324
        %v5326 = vpop.f32.mrf.mxu0
        %v5327 = vadd.f32 0.0, %v5326
        %v5328 = vpop.f32.mrf.mxu0
        %v5329 = vpop.f32.mrf.mxu0
        %5330 = vdwg.mxu0
        %v5331 = vxor.u32 %v5202, 2147483648
        %v5332 = vxor.u32 %v5204, 2147483648
        %v5333 = vxor.u32 %v5243, 2147483648
        %v5334 = vxor.u32 %v5245, 2147483648
        %v5335 = vmul.f32 %v5331, 1.442695
        %v5336 = vpow.pop %v5335
        %v5337 = vmul.f32 %v5332, 1.442695
        %v5338 = vpow.pop %v5337
        %v5339 = vmul.f32 %v5333, 1.442695
        %v5340 = vpow.pop %v5339
        %v5341 = vmul.f32 %v5334, 1.442695
        %v5342 = vpow.pop %v5341
        %v5343 = vadd.f32 %v5336, 1.0
        %v5344 = vadd.f32 %v5338, 1.0
        %v5345 = vadd.f32 %v5340, 1.0
        %v5346 = vadd.f32 %v5342, 1.0
        %v5347 = vrcp.pop %v5343
        %v5348 = vmul.f32 1.0, %v5347
        %v5349 = vrcp.pop %v5344
        %v5350 = vmul.f32 1.0, %v5349
        %v5351 = vrcp.pop %v5345
        %v5352 = vmul.f32 1.0, %v5351
        %v5353 = vrcp.pop %v5346
        %v5354 = vmul.f32 1.0, %v5353
        %v5355 = vmul.f32 %v5202, %v5348
        %v5356 = vmul.f32 %v5204, %v5350
        %v5357 = vmul.f32 %v5243, %v5352
        %v5358 = vmul.f32 %v5245, %v5354
        %v5359 = vmul.f32 %v5355, %v5284
        %v5360 = vmul.f32 %v5356, %v5286
        %v5361 = vmul.f32 %v5357, %v5325
        %v5362 = vmul.f32 %v5358, %v5327
        %v5363 = vpack.c.bf16 %v5359, %v5359
        %v5364 = vpack.c.bf16 %v5360, %v5360
        %v5365 = vpack.c.bf16 %v5361, %v5361
        %v5366 = vpack.c.bf16 %v5362, %v5362
        %s5367 = scalar_lea.vmem [#allocation9], 512
        %v5368 = vld [vmem:[%s5367] sm:$0xff]
        %v5369 = vld [vmem:[%s5367 + $0x8] sm:$0xff]
        %v5370 = vld [vmem:[%s5367 + $0x10] sm:$0xff]
        %v5371 = vld [vmem:[%s5367 + $0x18] sm:$0xff]
        %v5372 = vld [vmem:[%s5367 + $0x20] sm:$0xff]
        %v5373 = vld [vmem:[%s5367 + $0x28] sm:$0xff]
        %v5374 = vld [vmem:[%s5367 + $0x30] sm:$0xff]
        %v5375 = vld [vmem:[%s5367 + $0x38] sm:$0xff]
        %v5376 = vld [vmem:[%s5367 + $0x40] sm:$0xff]
        %v5377 = vld [vmem:[%s5367 + $0x48] sm:$0xff]
        %v5378 = vld [vmem:[%s5367 + $0x50] sm:$0xff]
        %v5379 = vld [vmem:[%s5367 + $0x58] sm:$0xff]
        %v5380 = vld [vmem:[%s5367 + $0x60] sm:$0xff]
        %v5381 = vld [vmem:[%s5367 + $0x68] sm:$0xff]
        %v5382 = vld [vmem:[%s5367 + $0x70] sm:$0xff]
        %v5383 = vld [vmem:[%s5367 + $0x78] sm:$0xff]
        %v5384 = vld [vmem:[%s5367 + $0x80] sm:$0xff]
        %v5385 = vld [vmem:[%s5367 + $0x88] sm:$0xff]
        %v5386 = vld [vmem:[%s5367 + $0x90] sm:$0xff]
        %v5387 = vld [vmem:[%s5367 + $0x98] sm:$0xff]
        %v5388 = vld [vmem:[%s5367 + $0xa0] sm:$0xff]
        %v5389 = vld [vmem:[%s5367 + $0xa8] sm:$0xff]
        %v5390 = vld [vmem:[%s5367 + $0xb0] sm:$0xff]
        %v5391 = vld [vmem:[%s5367 + $0xb8] sm:$0xff]
        %v5392 = vld [vmem:[%s5367 + $0xc0] sm:$0xff]
        %v5393 = vld [vmem:[%s5367 + $0xc8] sm:$0xff]
        %v5394 = vld [vmem:[%s5367 + $0xd0] sm:$0xff]
        %v5395 = vld [vmem:[%s5367 + $0xd8] sm:$0xff]
        %v5396 = vld [vmem:[%s5367 + $0xe0] sm:$0xff]
        %v5397 = vld [vmem:[%s5367 + $0xe8] sm:$0xff]
        %v5398 = vld [vmem:[%s5367 + $0xf0] sm:$0xff]
        %v5399 = vld [vmem:[%s5367 + $0xf8] sm:$0xff]
        %v5400 = vld [vmem:[%s5367 + $0x100] sm:$0xff]
        %v5401 = vld [vmem:[%s5367 + $0x108] sm:$0xff]
        %v5402 = vld [vmem:[%s5367 + $0x110] sm:$0xff]
        %v5403 = vld [vmem:[%s5367 + $0x118] sm:$0xff]
        %v5404 = vld [vmem:[%s5367 + $0x120] sm:$0xff]
        %v5405 = vld [vmem:[%s5367 + $0x128] sm:$0xff]
        %v5406 = vld [vmem:[%s5367 + $0x130] sm:$0xff]
        %v5407 = vld [vmem:[%s5367 + $0x138] sm:$0xff]
        %v5408 = vld [vmem:[%s5367 + $0x140] sm:$0xff]
        %v5409 = vld [vmem:[%s5367 + $0x148] sm:$0xff]
        %v5410 = vld [vmem:[%s5367 + $0x150] sm:$0xff]
        %v5411 = vld [vmem:[%s5367 + $0x158] sm:$0xff]
        %v5412 = vld [vmem:[%s5367 + $0x160] sm:$0xff]
        %v5413 = vld [vmem:[%s5367 + $0x168] sm:$0xff]
        %v5414 = vld [vmem:[%s5367 + $0x170] sm:$0xff]
        %v5415 = vld [vmem:[%s5367 + $0x178] sm:$0xff]
        %v5416 = vld [vmem:[%s5367 + $0x180] sm:$0xff]
        %v5417 = vld [vmem:[%s5367 + $0x188] sm:$0xff]
        %v5418 = vld [vmem:[%s5367 + $0x190] sm:$0xff]
        %v5419 = vld [vmem:[%s5367 + $0x198] sm:$0xff]
        %v5420 = vld [vmem:[%s5367 + $0x1a0] sm:$0xff]
        %v5421 = vld [vmem:[%s5367 + $0x1a8] sm:$0xff]
        %v5422 = vld [vmem:[%s5367 + $0x1b0] sm:$0xff]
        %v5423 = vld [vmem:[%s5367 + $0x1b8] sm:$0xff]
        %v5424 = vld [vmem:[%s5367 + $0x1c0] sm:$0xff]
        %v5425 = vld [vmem:[%s5367 + $0x1c8] sm:$0xff]
        %v5426 = vld [vmem:[%s5367 + $0x1d0] sm:$0xff]
        %v5427 = vld [vmem:[%s5367 + $0x1d8] sm:$0xff]
        %v5428 = vld [vmem:[%s5367 + $0x1e0] sm:$0xff]
        %v5429 = vld [vmem:[%s5367 + $0x1e8] sm:$0xff]
        %v5430 = vld [vmem:[%s5367 + $0x1f0] sm:$0xff]
        %v5431 = vld [vmem:[%s5367 + $0x1f8] sm:$0xff]
        %v5496 = vunpack.c.l.b16 %v5368
        %v5497 = vunpack.c.h.b16 %v5368
        %v5498 = vunpack.c.l.b16 %v5369
        %v5499 = vunpack.c.h.b16 %v5369
        %v5500 = vunpack.c.l.b16 %v5370
        %v5501 = vunpack.c.h.b16 %v5370
        %v5502 = vunpack.c.l.b16 %v5371
        %v5503 = vunpack.c.h.b16 %v5371
        %v5504 = vunpack.c.l.b16 %v5372
        %v5505 = vunpack.c.h.b16 %v5372
        %v5506 = vunpack.c.l.b16 %v5373
        %v5507 = vunpack.c.h.b16 %v5373
        %v5508 = vunpack.c.l.b16 %v5374
        %v5509 = vunpack.c.h.b16 %v5374
        %v5510 = vunpack.c.l.b16 %v5375
        %v5511 = vunpack.c.h.b16 %v5375
        %v5512 = vunpack.c.l.b16 %v5376
        %v5513 = vunpack.c.h.b16 %v5376
        %v5514 = vunpack.c.l.b16 %v5377
        %v5515 = vunpack.c.h.b16 %v5377
        %v5516 = vunpack.c.l.b16 %v5378
        %v5517 = vunpack.c.h.b16 %v5378
        %v5518 = vunpack.c.l.b16 %v5379
        %v5519 = vunpack.c.h.b16 %v5379
        %v5520 = vunpack.c.l.b16 %v5380
        %v5521 = vunpack.c.h.b16 %v5380
        %v5522 = vunpack.c.l.b16 %v5381
        %v5523 = vunpack.c.h.b16 %v5381
        %v5524 = vunpack.c.l.b16 %v5382
        %v5525 = vunpack.c.h.b16 %v5382
        %v5526 = vunpack.c.l.b16 %v5383
        %v5527 = vunpack.c.h.b16 %v5383
        %v5528 = vunpack.c.l.b16 %v5384
        %v5529 = vunpack.c.h.b16 %v5384
        %v5530 = vunpack.c.l.b16 %v5385
        %v5531 = vunpack.c.h.b16 %v5385
        %v5532 = vunpack.c.l.b16 %v5386
        %v5533 = vunpack.c.h.b16 %v5386
        %v5534 = vunpack.c.l.b16 %v5387
        %v5535 = vunpack.c.h.b16 %v5387
        %v5536 = vunpack.c.l.b16 %v5388
        %v5537 = vunpack.c.h.b16 %v5388
        %v5538 = vunpack.c.l.b16 %v5389
        %v5539 = vunpack.c.h.b16 %v5389
        %v5540 = vunpack.c.l.b16 %v5390
        %v5541 = vunpack.c.h.b16 %v5390
        %v5542 = vunpack.c.l.b16 %v5391
        %v5543 = vunpack.c.h.b16 %v5391
        %v5544 = vunpack.c.l.b16 %v5392
        %v5545 = vunpack.c.h.b16 %v5392
        %v5546 = vunpack.c.l.b16 %v5393
        %v5547 = vunpack.c.h.b16 %v5393
        %v5548 = vunpack.c.l.b16 %v5394
        %v5549 = vunpack.c.h.b16 %v5394
        %v5550 = vunpack.c.l.b16 %v5395
        %v5551 = vunpack.c.h.b16 %v5395
        %v5552 = vunpack.c.l.b16 %v5396
        %v5553 = vunpack.c.h.b16 %v5396
        %v5554 = vunpack.c.l.b16 %v5397
        %v5555 = vunpack.c.h.b16 %v5397
        %v5556 = vunpack.c.l.b16 %v5398
        %v5557 = vunpack.c.h.b16 %v5398
        %v5558 = vunpack.c.l.b16 %v5399
        %v5559 = vunpack.c.h.b16 %v5399
        %v5560 = vunpack.c.l.b16 %v5400
        %v5561 = vunpack.c.h.b16 %v5400
        %v5562 = vunpack.c.l.b16 %v5401
        %v5563 = vunpack.c.h.b16 %v5401
        %v5564 = vunpack.c.l.b16 %v5402
        %v5565 = vunpack.c.h.b16 %v5402
        %v5566 = vunpack.c.l.b16 %v5403
        %v5567 = vunpack.c.h.b16 %v5403
        %v5568 = vunpack.c.l.b16 %v5404
        %v5569 = vunpack.c.h.b16 %v5404
        %v5570 = vunpack.c.l.b16 %v5405
        %v5571 = vunpack.c.h.b16 %v5405
        %v5572 = vunpack.c.l.b16 %v5406
        %v5573 = vunpack.c.h.b16 %v5406
        %v5574 = vunpack.c.l.b16 %v5407
        %v5575 = vunpack.c.h.b16 %v5407
        %v5576 = vunpack.c.l.b16 %v5408
        %v5577 = vunpack.c.h.b16 %v5408
        %v5578 = vunpack.c.l.b16 %v5409
        %v5579 = vunpack.c.h.b16 %v5409
        %v5580 = vunpack.c.l.b16 %v5410
        %v5581 = vunpack.c.h.b16 %v5410
        %v5582 = vunpack.c.l.b16 %v5411
        %v5583 = vunpack.c.h.b16 %v5411
        %v5584 = vunpack.c.l.b16 %v5412
        %v5585 = vunpack.c.h.b16 %v5412
        %v5586 = vunpack.c.l.b16 %v5413
        %v5587 = vunpack.c.h.b16 %v5413
        %v5588 = vunpack.c.l.b16 %v5414
        %v5589 = vunpack.c.h.b16 %v5414
        %v5590 = vunpack.c.l.b16 %v5415
        %v5591 = vunpack.c.h.b16 %v5415
        %v5592 = vunpack.c.l.b16 %v5416
        %v5593 = vunpack.c.h.b16 %v5416
        %v5594 = vunpack.c.l.b16 %v5417
        %v5595 = vunpack.c.h.b16 %v5417
        %v5596 = vunpack.c.l.b16 %v5418
        %v5597 = vunpack.c.h.b16 %v5418
        %v5598 = vunpack.c.l.b16 %v5419
        %v5599 = vunpack.c.h.b16 %v5419
        %v5600 = vunpack.c.l.b16 %v5420
        %v5601 = vunpack.c.h.b16 %v5420
        %v5602 = vunpack.c.l.b16 %v5421
        %v5603 = vunpack.c.h.b16 %v5421
        %v5604 = vunpack.c.l.b16 %v5422
        %v5605 = vunpack.c.h.b16 %v5422
        %v5606 = vunpack.c.l.b16 %v5423
        %v5607 = vunpack.c.h.b16 %v5423
        %v5608 = vunpack.c.l.b16 %v5424
        %v5609 = vunpack.c.h.b16 %v5424
        %v5610 = vunpack.c.l.b16 %v5425
        %v5611 = vunpack.c.h.b16 %v5425
        %v5612 = vunpack.c.l.b16 %v5426
        %v5613 = vunpack.c.h.b16 %v5426
        %v5614 = vunpack.c.l.b16 %v5427
        %v5615 = vunpack.c.h.b16 %v5427
        %v5616 = vunpack.c.l.b16 %v5428
        %v5617 = vunpack.c.h.b16 %v5428
        %v5618 = vunpack.c.l.b16 %v5429
        %v5619 = vunpack.c.h.b16 %v5429
        %v5620 = vunpack.c.l.b16 %v5430
        %v5621 = vunpack.c.h.b16 %v5430
        %v5622 = vunpack.c.l.b16 %v5431
        %v5623 = vunpack.c.h.b16 %v5431
        %v5624 = vpack.c.b16 %v5498, %v5496
        %v5625 = vpack.c.b16 %v5499, %v5497
        %v5626 = vpack.c.b16 %v5502, %v5500
        %v5627 = vpack.c.b16 %v5503, %v5501
        %v5628 = vpack.c.b16 %v5506, %v5504
        %v5629 = vpack.c.b16 %v5507, %v5505
        %v5630 = vpack.c.b16 %v5510, %v5508
        %v5631 = vpack.c.b16 %v5511, %v5509
        %v5632 = vpack.c.b16 %v5514, %v5512
        %v5633 = vpack.c.b16 %v5515, %v5513
        %v5634 = vpack.c.b16 %v5518, %v5516
        %v5635 = vpack.c.b16 %v5519, %v5517
        %v5636 = vpack.c.b16 %v5522, %v5520
        %v5637 = vpack.c.b16 %v5523, %v5521
        %v5638 = vpack.c.b16 %v5526, %v5524
        %v5639 = vpack.c.b16 %v5527, %v5525
        %v5640 = vpack.c.b16 %v5530, %v5528
        %v5641 = vpack.c.b16 %v5531, %v5529
        %v5642 = vpack.c.b16 %v5534, %v5532
        %v5643 = vpack.c.b16 %v5535, %v5533
        %v5644 = vpack.c.b16 %v5538, %v5536
        %v5645 = vpack.c.b16 %v5539, %v5537
        %v5646 = vpack.c.b16 %v5542, %v5540
        %v5647 = vpack.c.b16 %v5543, %v5541
        %v5648 = vpack.c.b16 %v5546, %v5544
        %v5649 = vpack.c.b16 %v5547, %v5545
        %v5650 = vpack.c.b16 %v5550, %v5548
        %v5651 = vpack.c.b16 %v5551, %v5549
        %v5652 = vpack.c.b16 %v5554, %v5552
        %v5653 = vpack.c.b16 %v5555, %v5553
        %v5654 = vpack.c.b16 %v5558, %v5556
        %v5655 = vpack.c.b16 %v5559, %v5557
        %v5656 = vpack.c.b16 %v5562, %v5560
        %v5657 = vpack.c.b16 %v5563, %v5561
        %v5658 = vpack.c.b16 %v5566, %v5564
        %v5659 = vpack.c.b16 %v5567, %v5565
        %v5660 = vpack.c.b16 %v5570, %v5568
        %v5661 = vpack.c.b16 %v5571, %v5569
        %v5662 = vpack.c.b16 %v5574, %v5572
        %v5663 = vpack.c.b16 %v5575, %v5573
        %v5664 = vpack.c.b16 %v5578, %v5576
        %v5665 = vpack.c.b16 %v5579, %v5577
        %v5666 = vpack.c.b16 %v5582, %v5580
        %v5667 = vpack.c.b16 %v5583, %v5581
        %v5668 = vpack.c.b16 %v5586, %v5584
        %v5669 = vpack.c.b16 %v5587, %v5585
        %v5670 = vpack.c.b16 %v5590, %v5588
        %v5671 = vpack.c.b16 %v5591, %v5589
        %v5672 = vpack.c.b16 %v5594, %v5592
        %v5673 = vpack.c.b16 %v5595, %v5593
        %v5674 = vpack.c.b16 %v5598, %v5596
        %v5675 = vpack.c.b16 %v5599, %v5597
        %v5676 = vpack.c.b16 %v5602, %v5600
        %v5677 = vpack.c.b16 %v5603, %v5601
        %v5678 = vpack.c.b16 %v5606, %v5604
        %v5679 = vpack.c.b16 %v5607, %v5605
        %v5680 = vpack.c.b16 %v5610, %v5608
        %v5681 = vpack.c.b16 %v5611, %v5609
        %v5682 = vpack.c.b16 %v5614, %v5612
        %v5683 = vpack.c.b16 %v5615, %v5613
        %v5684 = vpack.c.b16 %v5618, %v5616
        %v5685 = vpack.c.b16 %v5619, %v5617
        %v5686 = vpack.c.b16 %v5622, %v5620
        %v5687 = vpack.c.b16 %v5623, %v5621
        %5752 = vmatprep.subr.bf16.mxu0 %v5639
        %5753 = vmatpush1.bf16.msra.mxu0 %v5638
        %5754 = vmatprep.subr.bf16.mxu0 %v5637
        %5755 = vmatpush1.bf16.msra.mxu0 %v5636
        %5756 = vmatprep.subr.bf16.mxu0 %v5635
        %5757 = vmatpush1.bf16.msra.mxu0 %v5634
        %5758 = vmatprep.subr.bf16.mxu0 %v5633
        %5759 = vmatpush1.bf16.msra.mxu0 %v5632
        %5760 = vmatprep.subr.bf16.mxu0 %v5631
        %5761 = vmatpush1.bf16.msra.mxu0 %v5630
        %5762 = vmatprep.subr.bf16.mxu0 %v5629
        %5763 = vmatpush1.bf16.msra.mxu0 %v5628
        %5764 = vmatprep.subr.bf16.mxu0 %v5627
        %5765 = vmatpush1.bf16.msra.mxu0 %v5626
        %5766 = vmatprep.subr.bf16.mxu0 %v5625
        %5767 = vmatpush1.bf16.msra.mxu0 %v5624
        %5768 = vmatprep.subr.bf16.mxu0 %v5655
        %5769 = vmatpush2.bf16.msra.mxu0 %v5654
        %5770 = vmatprep.subr.bf16.mxu0 %v5653
        %5771 = vmatpush2.bf16.msra.mxu0 %v5652
        %5772 = vmatprep.subr.bf16.mxu0 %v5651
        %5773 = vmatpush2.bf16.msra.mxu0 %v5650
        %5774 = vmatprep.subr.bf16.mxu0 %v5649
        %5775 = vmatpush2.bf16.msra.mxu0 %v5648
        %5776 = vmatprep.subr.bf16.mxu0 %v5647
        %5777 = vmatpush2.bf16.msra.mxu0 %v5646
        %5778 = vmatprep.subr.bf16.mxu0 %v5645
        %5779 = vmatpush2.bf16.msra.mxu0 %v5644
        %5780 = vmatprep.subr.bf16.mxu0 %v5643
        %5781 = vmatpush2.bf16.msra.mxu0 %v5642
        %5782 = vmatprep.subr.bf16.mxu0 %v5641
        %5783 = vmatpush2.bf16.msra.mxu0 %v5640
        %5784 = vmatprep.mubr.bf16.mxu0 %v5364
        %5785 = vmatmul.mubr.bf16.gmra.mxu0 %v5363
        %v5786 = vpop.f32.mrf.mxu0
        %v5787 = vadd.f32 0.0, %v5786
        %v5788 = vpop.f32.mrf.mxu0
        %v5789 = vadd.f32 0.0, %v5788
        %v5790 = vpop.f32.mrf.mxu0
        %v5791 = vpop.f32.mrf.mxu0
        %5792 = vdwg.mxu0
        %5793 = vmatprep.subr.bf16.mxu0 %v5671
        %5794 = vmatpush1.bf16.msra.mxu0 %v5670
        %5795 = vmatprep.subr.bf16.mxu0 %v5669
        %5796 = vmatpush1.bf16.msra.mxu0 %v5668
        %5797 = vmatprep.subr.bf16.mxu0 %v5667
        %5798 = vmatpush1.bf16.msra.mxu0 %v5666
        %5799 = vmatprep.subr.bf16.mxu0 %v5665
        %5800 = vmatpush1.bf16.msra.mxu0 %v5664
        %5801 = vmatprep.subr.bf16.mxu0 %v5663
        %5802 = vmatpush1.bf16.msra.mxu0 %v5662
        %5803 = vmatprep.subr.bf16.mxu0 %v5661
        %5804 = vmatpush1.bf16.msra.mxu0 %v5660
        %5805 = vmatprep.subr.bf16.mxu0 %v5659
        %5806 = vmatpush1.bf16.msra.mxu0 %v5658
        %5807 = vmatprep.subr.bf16.mxu0 %v5657
        %5808 = vmatpush1.bf16.msra.mxu0 %v5656
        %5809 = vmatprep.subr.bf16.mxu0 %v5687
        %5810 = vmatpush2.bf16.msra.mxu0 %v5686
        %5811 = vmatprep.subr.bf16.mxu0 %v5685
        %5812 = vmatpush2.bf16.msra.mxu0 %v5684
        %5813 = vmatprep.subr.bf16.mxu0 %v5683
        %5814 = vmatpush2.bf16.msra.mxu0 %v5682
        %5815 = vmatprep.subr.bf16.mxu0 %v5681
        %5816 = vmatpush2.bf16.msra.mxu0 %v5680
        %5817 = vmatprep.subr.bf16.mxu0 %v5679
        %5818 = vmatpush2.bf16.msra.mxu0 %v5678
        %5819 = vmatprep.subr.bf16.mxu0 %v5677
        %5820 = vmatpush2.bf16.msra.mxu0 %v5676
        %5821 = vmatprep.subr.bf16.mxu0 %v5675
        %5822 = vmatpush2.bf16.msra.mxu0 %v5674
        %5823 = vmatprep.subr.bf16.mxu0 %v5673
        %5824 = vmatpush2.bf16.msra.mxu0 %v5672
        %5825 = vmatprep.mubr.bf16.mxu0 %v5366
        %5826 = vmatmul.mubr.bf16.gmra.mxu0 %v5365
        %v5827 = vpop.f32.mrf.mxu0
        %v5828 = vadd.f32 %v5787, %v5827
        %v5829 = vpop.f32.mrf.mxu0
        %v5830 = vadd.f32 %v5789, %v5829
        %v5831 = vpop.f32.mrf.mxu0
        %v5832 = vpop.f32.mrf.mxu0
        %5833 = vdwg.mxu0
        %v5834 = vadd.f32 %v4369, %v5828
        %v5835 = vadd.f32 %v4370, %v5830
        %v5836 = vld [vmem:[%s7] sm:$0x3]
        %v5837 = vmul.f32 %v5834, %v5834
        %v5838 = vmul.f32 %v5835, %v5835
        %v5839 = vadd.f32 %v5837, %v5838
        %5840 = vadd.xlane.f32.xlu0 %v5839
        %v5841 = vpop.xlane.xlu0 %5840
        %v5842 = vmul.f32 %v5841, %v517
        %v5843 = vadd.f32 %v5842, 1e-06
        %v5844 = vrsqrt.pop %v5843
        %v5845 = vmul.f32 %v5834, %v5844
        %v5846 = vmul.f32 %v5835, %v5844
        %v5848 = vlaneseq
        %v5849 = vshrl.u32 %v5848, 7
        %v5850 = vsub.s32 0, %v5849
        %v5851 = vrot.slane %v5836, %v5850
        %v5852 = vlaneseq
        %v5853 = vshrl.u32 %v5852, 7
        %v5854 = vsub.s32 1, %v5853
        %v5855 = vrot.slane %v5836, %v5854
        %v5858 = vmul.f32 %v5845, %v5851
        %v5859 = vmul.f32 %v5846, %v5855
        %v5860 = vpack.c.bf16 %v5858, %v5858
        %v5861 = vpack.c.bf16 %v5859, %v5859
        %v5862 = vld [vmem:[%s8] sm:$0xff]
        %v5863 = vld [vmem:[%s8 + $0x8] sm:$0xff]
        %v5864 = vld [vmem:[%s8 + $0x10] sm:$0xff]
        %v5865 = vld [vmem:[%s8 + $0x18] sm:$0xff]
        %v5866 = vld [vmem:[%s8 + $0x20] sm:$0xff]
        %v5867 = vld [vmem:[%s8 + $0x28] sm:$0xff]
        %v5868 = vld [vmem:[%s8 + $0x30] sm:$0xff]
        %v5869 = vld [vmem:[%s8 + $0x38] sm:$0xff]
        %v5870 = vld [vmem:[%s8 + $0x40] sm:$0xff]
        %v5871 = vld [vmem:[%s8 + $0x48] sm:$0xff]
        %v5872 = vld [vmem:[%s8 + $0x50] sm:$0xff]
        %v5873 = vld [vmem:[%s8 + $0x58] sm:$0xff]
        %v5874 = vld [vmem:[%s8 + $0x60] sm:$0xff]
        %v5875 = vld [vmem:[%s8 + $0x68] sm:$0xff]
        %v5876 = vld [vmem:[%s8 + $0x70] sm:$0xff]
        %v5877 = vld [vmem:[%s8 + $0x78] sm:$0xff]
        %v5878 = vld [vmem:[%s8 + $0x80] sm:$0xff]
        %v5879 = vld [vmem:[%s8 + $0x88] sm:$0xff]
        %v5880 = vld [vmem:[%s8 + $0x90] sm:$0xff]
        %v5881 = vld [vmem:[%s8 + $0x98] sm:$0xff]
        %v5882 = vld [vmem:[%s8 + $0xa0] sm:$0xff]
        %v5883 = vld [vmem:[%s8 + $0xa8] sm:$0xff]
        %v5884 = vld [vmem:[%s8 + $0xb0] sm:$0xff]
        %v5885 = vld [vmem:[%s8 + $0xb8] sm:$0xff]
        %v5886 = vld [vmem:[%s8 + $0xc0] sm:$0xff]
        %v5887 = vld [vmem:[%s8 + $0xc8] sm:$0xff]
        %v5888 = vld [vmem:[%s8 + $0xd0] sm:$0xff]
        %v5889 = vld [vmem:[%s8 + $0xd8] sm:$0xff]
        %v5890 = vld [vmem:[%s8 + $0xe0] sm:$0xff]
        %v5891 = vld [vmem:[%s8 + $0xe8] sm:$0xff]
        %v5892 = vld [vmem:[%s8 + $0xf0] sm:$0xff]
        %v5893 = vld [vmem:[%s8 + $0xf8] sm:$0xff]
        %v5926 = vunpack.c.l.b16 %v5862
        %v5927 = vunpack.c.h.b16 %v5862
        %v5928 = vunpack.c.l.b16 %v5863
        %v5929 = vunpack.c.h.b16 %v5863
        %v5930 = vunpack.c.l.b16 %v5864
        %v5931 = vunpack.c.h.b16 %v5864
        %v5932 = vunpack.c.l.b16 %v5865
        %v5933 = vunpack.c.h.b16 %v5865
        %v5934 = vunpack.c.l.b16 %v5866
        %v5935 = vunpack.c.h.b16 %v5866
        %v5936 = vunpack.c.l.b16 %v5867
        %v5937 = vunpack.c.h.b16 %v5867
        %v5938 = vunpack.c.l.b16 %v5868
        %v5939 = vunpack.c.h.b16 %v5868
        %v5940 = vunpack.c.l.b16 %v5869
        %v5941 = vunpack.c.h.b16 %v5869
        %v5942 = vunpack.c.l.b16 %v5870
        %v5943 = vunpack.c.h.b16 %v5870
        %v5944 = vunpack.c.l.b16 %v5871
        %v5945 = vunpack.c.h.b16 %v5871
        %v5946 = vunpack.c.l.b16 %v5872
        %v5947 = vunpack.c.h.b16 %v5872
        %v5948 = vunpack.c.l.b16 %v5873
        %v5949 = vunpack.c.h.b16 %v5873
        %v5950 = vunpack.c.l.b16 %v5874
        %v5951 = vunpack.c.h.b16 %v5874
        %v5952 = vunpack.c.l.b16 %v5875
        %v5953 = vunpack.c.h.b16 %v5875
        %v5954 = vunpack.c.l.b16 %v5876
        %v5955 = vunpack.c.h.b16 %v5876
        %v5956 = vunpack.c.l.b16 %v5877
        %v5957 = vunpack.c.h.b16 %v5877
        %v5958 = vunpack.c.l.b16 %v5878
        %v5959 = vunpack.c.h.b16 %v5878
        %v5960 = vunpack.c.l.b16 %v5879
        %v5961 = vunpack.c.h.b16 %v5879
        %v5962 = vunpack.c.l.b16 %v5880
        %v5963 = vunpack.c.h.b16 %v5880
        %v5964 = vunpack.c.l.b16 %v5881
        %v5965 = vunpack.c.h.b16 %v5881
        %v5966 = vunpack.c.l.b16 %v5882
        %v5967 = vunpack.c.h.b16 %v5882
        %v5968 = vunpack.c.l.b16 %v5883
        %v5969 = vunpack.c.h.b16 %v5883
        %v5970 = vunpack.c.l.b16 %v5884
        %v5971 = vunpack.c.h.b16 %v5884
        %v5972 = vunpack.c.l.b16 %v5885
        %v5973 = vunpack.c.h.b16 %v5885
        %v5974 = vunpack.c.l.b16 %v5886
        %v5975 = vunpack.c.h.b16 %v5886
        %v5976 = vunpack.c.l.b16 %v5887
        %v5977 = vunpack.c.h.b16 %v5887
        %v5978 = vunpack.c.l.b16 %v5888
        %v5979 = vunpack.c.h.b16 %v5888
        %v5980 = vunpack.c.l.b16 %v5889
        %v5981 = vunpack.c.h.b16 %v5889
        %v5982 = vunpack.c.l.b16 %v5890
        %v5983 = vunpack.c.h.b16 %v5890
        %v5984 = vunpack.c.l.b16 %v5891
        %v5985 = vunpack.c.h.b16 %v5891
        %v5986 = vunpack.c.l.b16 %v5892
        %v5987 = vunpack.c.h.b16 %v5892
        %v5988 = vunpack.c.l.b16 %v5893
        %v5989 = vunpack.c.h.b16 %v5893
        %v5990 = vpack.c.b16 %v5928, %v5926
        %v5991 = vpack.c.b16 %v5929, %v5927
        %v5992 = vpack.c.b16 %v5932, %v5930
        %v5993 = vpack.c.b16 %v5933, %v5931
        %v5994 = vpack.c.b16 %v5936, %v5934
        %v5995 = vpack.c.b16 %v5937, %v5935
        %v5996 = vpack.c.b16 %v5940, %v5938
        %v5997 = vpack.c.b16 %v5941, %v5939
        %v5998 = vpack.c.b16 %v5944, %v5942
        %v5999 = vpack.c.b16 %v5945, %v5943
        %v6000 = vpack.c.b16 %v5948, %v5946
        %v6001 = vpack.c.b16 %v5949, %v5947
        %v6002 = vpack.c.b16 %v5952, %v5950
        %v6003 = vpack.c.b16 %v5953, %v5951
        %v6004 = vpack.c.b16 %v5956, %v5954
        %v6005 = vpack.c.b16 %v5957, %v5955
        %v6006 = vpack.c.b16 %v5960, %v5958
        %v6007 = vpack.c.b16 %v5961, %v5959
        %v6008 = vpack.c.b16 %v5964, %v5962
        %v6009 = vpack.c.b16 %v5965, %v5963
        %v6010 = vpack.c.b16 %v5968, %v5966
        %v6011 = vpack.c.b16 %v5969, %v5967
        %v6012 = vpack.c.b16 %v5972, %v5970
        %v6013 = vpack.c.b16 %v5973, %v5971
        %v6014 = vpack.c.b16 %v5976, %v5974
        %v6015 = vpack.c.b16 %v5977, %v5975
        %v6016 = vpack.c.b16 %v5980, %v5978
        %v6017 = vpack.c.b16 %v5981, %v5979
        %v6018 = vpack.c.b16 %v5984, %v5982
        %v6019 = vpack.c.b16 %v5985, %v5983
        %v6020 = vpack.c.b16 %v5988, %v5986
        %v6021 = vpack.c.b16 %v5989, %v5987
        %6054 = vmatprep.subr.bf16.mxu0 %v6005
        %6055 = vmatpush1.bf16.msra.mxu0 %v6004
        %6056 = vmatprep.subr.bf16.mxu0 %v6003
        %6057 = vmatpush1.bf16.msra.mxu0 %v6002
        %6058 = vmatprep.subr.bf16.mxu0 %v6001
        %6059 = vmatpush1.bf16.msra.mxu0 %v6000
        %6060 = vmatprep.subr.bf16.mxu0 %v5999
        %6061 = vmatpush1.bf16.msra.mxu0 %v5998
        %6062 = vmatprep.subr.bf16.mxu0 %v5997
        %6063 = vmatpush1.bf16.msra.mxu0 %v5996
        %6064 = vmatprep.subr.bf16.mxu0 %v5995
        %6065 = vmatpush1.bf16.msra.mxu0 %v5994
        %6066 = vmatprep.subr.bf16.mxu0 %v5993
        %6067 = vmatpush1.bf16.msra.mxu0 %v5992
        %6068 = vmatprep.subr.bf16.mxu0 %v5991
        %6069 = vmatpush1.bf16.msra.mxu0 %v5990
        %6070 = vmatprep.subr.bf16.mxu0 %v6021
        %6071 = vmatpush2.bf16.msra.mxu0 %v6020
        %6072 = vmatprep.subr.bf16.mxu0 %v6019
        %6073 = vmatpush2.bf16.msra.mxu0 %v6018
        %6074 = vmatprep.subr.bf16.mxu0 %v6017
        %6075 = vmatpush2.bf16.msra.mxu0 %v6016
        %6076 = vmatprep.subr.bf16.mxu0 %v6015
        %6077 = vmatpush2.bf16.msra.mxu0 %v6014
        %6078 = vmatprep.subr.bf16.mxu0 %v6013
        %6079 = vmatpush2.bf16.msra.mxu0 %v6012
        %6080 = vmatprep.subr.bf16.mxu0 %v6011
        %6081 = vmatpush2.bf16.msra.mxu0 %v6010
        %6082 = vmatprep.subr.bf16.mxu0 %v6009
        %6083 = vmatpush2.bf16.msra.mxu0 %v6008
        %6084 = vmatprep.subr.bf16.mxu0 %v6007
        %6085 = vmatpush2.bf16.msra.mxu0 %v6006
        %6086 = vmatprep.mubr.bf16.mxu0 %v5861
        %6087 = vmatmul.mubr.bf16.gmra.mxu0 %v5860
        %v6088 = vpop.f32.mrf.mxu0
        %v6089 = vadd.f32 0.0, %v6088
        %v6090 = vpop.f32.mrf.mxu0
        %v6091 = vadd.f32 0.0, %v6090
        %v6092 = vpop.f32.mrf.mxu0
        %v6093 = vpop.f32.mrf.mxu0
        %6094 = vdwg.mxu0
        %6095 = vst [vmem:[%s492] sm:$0xff] %v6089
        %6096 = vst [vmem:[%s492 + $0x8] sm:$0xff] %v6091
        %s6097 = sand.u32 %s316, 1
        %s6098 = scalar_lea.sflag [#allocation5], %s6097
        %s6099 = sand.u32 %s316, 1
        %s6100 = smul.addr %s6099, 16
        %s6101 = scalar_lea.vmem [#allocation11], %s6100
        // Predicated region
        $region89: #{decoder_forward.1} parent=71 // pred_check
          %p6102 = pneg %p326
        $region90: #{decoder_forward.1} parent=71 // pred_check_branch
          %6104 = sbr.rel (%p6102) target = $region92
        $region91: #{decoder_forward.1} parent=71 // pred_region
          %s6106 = ssub.s32 256, 256
          %6107 = vsyncadd %s6098, %s6106
          %s6108 = smul.addr %s30, 2
          %s6109 = smul.addr %s6108, 128
          %s6110 = scalar_lea.hbm %s13, %s6109
          %s6112 = sshll.u32 %s6101, 4
          %s6113 = int_to_ptr.vmem [resolvable:$true] %s6112
          %6115 = dma.vmem_to_hbm [thread:$0]  %s6113, 256, %s6110, %s6098
        $region92: #{decoder_forward.1} parent=71 // pred_fallthru
          _
      $region72: #{decoder_forward.1} parent=5 // pred_fallthru
        _
      %p6116 = scmp.le.s32.totalorder 2, %s25
      // Predicated region
      $region93: #{decoder_forward.1} parent=5 // pred_check
        %p6117 = pneg %p6116
      $region94: #{decoder_forward.1} parent=5 // pred_check_branch
        %6119 = sbr.rel (%p6117) target = $region96
      $region95: #{decoder_forward.1} parent=5 // pred_region
        %s6120 = ssub.s32 %s25, 2
        // Predicated region
        $region97: #{decoder_forward.1} parent=95 // pred_check
          %p6121 = pneg %p332
        $region98: #{decoder_forward.1} parent=95 // pred_check_branch
          %6123 = sbr.rel (%p6121) target = $region100
        $region99: #{decoder_forward.1} parent=95 // pred_region
          %s6124 = sand.u32 %s317, 1
          %s6125 = scalar_lea.sflag [#allocation5], %s6124
          %s6126 = sand.u32 %s317, 1
          %s6127 = smul.addr %s6126, 16
          %s6128 = scalar_lea.vmem [#allocation11], %s6127
          %6129 = dma.done %s6125, 256
        $region100: #{decoder_forward.1} parent=95 // pred_fallthru
          _
      $region96: #{decoder_forward.1} parent=5 // pred_fallthru
        _
    $region6: #{decoder_forward.1} parent=1 // loop_footer
      %s29 = sadd.s32 1, %s25
    $region7: #{decoder_forward.1} parent=1 // loop_footer_branch
      %24 = sbr.rel target = $region3
    $region8: #{decoder_forward.1} parent=1 // loop_exit
      _
    %6130 = vsyncpa [#allocation4], 1
    %s6131 = scalar_lea.sflag [#allocation4], 1
    %6132 = vsyncpa %s6131, 1
    %6133 = vsyncpa [#allocation7], 1
    %6134 = vsyncpa [#allocation10], 1
    %6135 = vsyncpa [#allocation5], 1
    %s6136 = scalar_lea.sflag [#allocation5], 1
    %6137 = vsyncpa %s6136, 1

</llo_original>
